<compile_context>
chip_gen: v7x
topology: tpu7x:2x2x1
jax: 0.10.0
libtpu: 0.0.40
codegen_flags: <defaults>
</compile_context>

<pallas_src>
import functools

import jax
import jax.numpy as jnp
from jax import lax
from jax.experimental import pallas as pl
from jax.experimental.pallas import tpu as pltpu


# ----------------------------------------------------------------------------
# Fused Pallas kernel: all layers, both directions, whole sequence, skip add.
# ----------------------------------------------------------------------------
def _bilstm_kernel(x_ref, w_in0_ref, w_in_ref, w_rec_ref, b_ref,
                   out_ref, hn_ref, cn_ref,
                   act_ref, gx_ref,
                   *, seq, batch, hidden, layers):
    Bp, H = batch, hidden        # batch here is the sublane-padded batch
    G = 4 * H                    # per-direction gate width, cols [i f o g]

    for l in range(layers):
        # ---- Hoisted input projection for BOTH directions of this layer ----
        # One (seq*Bp, K) x (K, 8H) matmul, bias folded in.  K = H for layer 0
        # (dedicated weight, no zero-padded half), 2H afterwards.
        if l == 0:
            x_gates = jnp.dot(x_ref[...], w_in0_ref[...],
                              preferred_element_type=jnp.float32)
        else:
            x_gates = jnp.dot(act_ref[...], w_in_ref[l - 1],
                              preferred_element_type=jnp.float32)
        gx_ref[...] = x_gates + b_ref[l]

        # Recurrent weights: load once per layer, reuse across the time loop.
        w_f = w_rec_ref[2 * l]          # (H, 4H), gate cols [i f o g]
        w_b = w_rec_ref[2 * l + 1]      # (H, 4H)

        # Loop-carried per-direction state (lives in vregs, no VMEM traffic).
        zeros = jnp.zeros((Bp, H), jnp.float32)
        h_f, c_f, h_b, c_b = zeros, zeros, zeros, zeros

        # Fully unrolled time loop (static trip count): fwd walks t forward,
        # bwd walks backward; the two chains are independent and interleave.
        for t in range(seq):
            rf = t * Bp                 # rows of sequence position t
            rb = (seq - 1 - t) * Bp     # rows of sequence position seq-1-t

            gf = (jnp.dot(h_f, w_f, preferred_element_type=jnp.float32)
                  + gx_ref[rf:rf + Bp, :G])          # (Bp, 4H) fwd gates
            gb = (jnp.dot(h_b, w_b, preferred_element_type=jnp.float32)
                  + gx_ref[rb:rb + Bp, G:])          # (Bp, 4H) bwd gates

            # Gate order [i f o g]: sigmoid over the 3H slab, tanh over H.
            sf = jax.nn.sigmoid(gf[:, :3 * H])
            gcf = jnp.tanh(gf[:, 3 * H:])
            sb = jax.nn.sigmoid(gb[:, :3 * H])
            gcb = jnp.tanh(gb[:, 3 * H:])

            c_f = sf[:, H:2 * H] * c_f + sf[:, :H] * gcf
            h_f = sf[:, 2 * H:3 * H] * jnp.tanh(c_f)
            c_b = sb[:, H:2 * H] * c_b + sb[:, :H] * gcb
            h_b = sb[:, 2 * H:3 * H] * jnp.tanh(c_b)

            # This layer's output, laid out [y_fwd | y_bwd] along lanes.
            act_ref[rf:rf + Bp, :H] = h_f
            act_ref[rb:rb + Bp, H:] = h_b

        # PyTorch (h_n, c_n) layout: [layer0 fwd, layer0 bwd, layer1 fwd, ...].
        hn_ref[2 * l] = h_f
        hn_ref[2 * l + 1] = h_b
        cn_ref[2 * l] = c_f
        cn_ref[2 * l + 1] = c_b

    # Fused skip connection: out = y_fwd + y_bwd + inputs.
    out_ref[...] = act_ref[:, :H] + act_ref[:, H:] + x_ref[...]


# ----------------------------------------------------------------------------
# Parameter setup: PyTorch-layout raw params + one-time packing into the
# fused / transposed / gate-reordered layout the kernel wants.
# ----------------------------------------------------------------------------
def init_bidirectional_lstm_params(key, size, layers):
    """Deterministic parameter init (PyTorch layout: (4H, In), (4H, H), (4H,))."""
    params = []
    k = 1.0 / jnp.sqrt(jnp.asarray(size, jnp.float32))
    for layer in range(layers):
        in_features = size if layer == 0 else 2 * size
        layer_p = {}
        for direction in ("fwd", "bwd"):
            key, k1, k2, k3, k4 = jax.random.split(key, 5)
            layer_p[direction] = dict(
                w_ih=jax.random.uniform(k1, (4 * size, in_features),
                                        jnp.float32, -k, k),
                w_hh=jax.random.uniform(k2, (4 * size, size),
                                        jnp.float32, -k, k),
                b_ih=jax.random.uniform(k3, (4 * size,), jnp.float32, -k, k),
                b_hh=jax.random.uniform(k4, (4 * size,), jnp.float32, -k, k),
            )
        params.append(layer_p)
    return params


def _reorder_gates(w):
    """PyTorch gate-row order [i f g o] -> kernel order [i f o g] (axis 0)."""
    H = w.shape[0] // 4
    return jnp.concatenate([w[:2 * H], w[3 * H:], w[2 * H:3 * H]], axis=0)


def pack_bidirectional_lstm_params(params, size, layers):
    """Pack weights once into the kernel layout.

      w_in0        : (H,   8H)  = [W_ih_fwd^T | W_ih_bwd^T]   (layer 0)
      w_in[l-1]    : (2H,  8H)  same, for layers >= 1
      w_rec[2l+d]  : (H,   4H)  = W_hh_d^T                    (d: 0=fwd, 1=bwd)
      bias[l]      : (1,   8H)  = [b_ih+b_hh fwd | b_ih+b_hh bwd]
    Gate columns in every block are reordered to [i f o g].
    """
    H = size
    w_in0 = None
    w_in_l, w_rec_l, b_l = [], [], []
    for layer in range(layers):
        p = params[layer]
        wf = _reorder_gates(jnp.asarray(p["fwd"]["w_ih"], jnp.float32)).T
        wb = _reorder_gates(jnp.asarray(p["bwd"]["w_ih"], jnp.float32)).T
        w_in_lr = jnp.concatenate([wf, wb], axis=1)          # (in, 8H)
        if layer == 0:
            w_in0 = w_in_lr                                   # (H, 8H)
        else:
            w_in_l.append(w_in_lr)                            # (2H, 8H)

        rf = _reorder_gates(jnp.asarray(p["fwd"]["w_hh"], jnp.float32)).T
        rb = _reorder_gates(jnp.asarray(p["bwd"]["w_hh"], jnp.float32)).T
        w_rec_l.append(rf)                                    # (H, 4H)
        w_rec_l.append(rb)

        bf = _reorder_gates(jnp.asarray(p["fwd"]["b_ih"] + p["fwd"]["b_hh"],
                                        jnp.float32))
        bb = _reorder_gates(jnp.asarray(p["bwd"]["b_ih"] + p["bwd"]["b_hh"],
                                        jnp.float32))
        b_l.append(jnp.concatenate([bf, bb]).reshape(1, 8 * H))

    if layers > 1:
        w_in = jnp.stack(w_in_l, axis=0)
    else:  # dummy (never read by the kernel when layers == 1)
        w_in = jnp.zeros((1, 2 * H, 8 * H), jnp.float32)

    return (w_in0, w_in,
            jnp.stack(w_rec_l, axis=0),   # (2*layers, H, 4H)
            jnp.stack(b_l, axis=0))       # (layers, 1, 8H)


# ----------------------------------------------------------------------------
# BidrectionalLSTM forward (matches the PyTorch module semantics)
# ----------------------------------------------------------------------------
def bidirectional_lstm_forward(packed_params, inputs, size, layers):
    """inputs: (seq, batch, size) -> (output, hn, cn)."""
    w_in0, w_in, w_rec, bias = packed_params
    x = jnp.asarray(inputs, jnp.float32)
    seq, B, _ = x.shape
    H = size

    # Pad the batch to a multiple of 8 sublanes so every per-step slice/store
    # inside the kernel is a full, aligned sublane tile (padded rows are
    # independent, computed on zero inputs and sliced off afterwards).
    Bp = ((B + 7) // 8) * 8
    xp = jnp.zeros((seq, Bp, H), jnp.float32).at[:, :B, :].set(x)
    x_flat = xp.reshape(seq * Bp, H)

    kernel = functools.partial(_bilstm_kernel, seq=seq, batch=Bp,
                               hidden=H, layers=layers)
    n_in = max(layers - 1, 1)

    grid_spec = pltpu.PrefetchScalarGridSpec(
        num_scalar_prefetch=0,
        grid=(1,),
        in_specs=[
            pl.BlockSpec((seq * Bp, H), lambda i: (0, 0)),
            pl.BlockSpec((H, 8 * H), lambda i: (0, 0)),
            pl.BlockSpec((n_in, 2 * H, 8 * H), lambda i: (0, 0, 0)),
            pl.BlockSpec((2 * layers, H, 4 * H), lambda i: (0, 0, 0)),
            pl.BlockSpec((layers, 1, 8 * H), lambda i: (0, 0, 0)),
        ],
        out_specs=[
            pl.BlockSpec((seq * Bp, H), lambda i: (0, 0)),
            pl.BlockSpec((2 * layers, Bp, H), lambda i: (0, 0, 0)),
            pl.BlockSpec((2 * layers, Bp, H), lambda i: (0, 0, 0)),
        ],
        scratch_shapes=[
            pltpu.VMEM((seq * Bp, 2 * H), jnp.float32),   # layer activations
            pltpu.VMEM((seq * Bp, 8 * H), jnp.float32),   # hoisted x-gate proj
        ],
    )

    out_flat, hn_p, cn_p = pl.pallas_call(
        kernel,
        out_shape=(
            jax.ShapeDtypeStruct((seq * Bp, H), jnp.float32),
            jax.ShapeDtypeStruct((2 * layers, Bp, H), jnp.float32),
            jax.ShapeDtypeStruct((2 * layers, Bp, H), jnp.float32),
        ),
        grid_spec=grid_spec,
        compiler_params=pltpu.CompilerParams(
            dimension_semantics=("arbitrary",),
            vmem_limit_bytes=32 * 1024 * 1024),
    )(x_flat, w_in0, w_in, w_rec, bias)

    out = out_flat.reshape(seq, Bp, H)[:, :B, :]
    return out, hn_p[:, :B, :], cn_p[:, :B, :]


# ----------------------------------------------------------------------------
# Pure-JAX reference (lax.scan) for a correctness sanity check.
# ----------------------------------------------------------------------------
def _ref_direction(x, w_ih, w_hh, b_ih, b_hh, hidden):
    B = x.shape[1]

    def step(carry, x_t):
        h, c = carry
        gates = x_t @ w_ih.T + h @ w_hh.T + b_ih + b_hh
        i = jax.nn.sigmoid(gates[:, :hidden])
        f = jax.nn.sigmoid(gates[:, hidden:2 * hidden])
        g = jnp.tanh(gates[:, 2 * hidden:3 * hidden])
        o = jax.nn.sigmoid(gates[:, 3 * hidden:])
        c = f * c + i * g
        h = o * jnp.tanh(c)
        return (h, c), h

    init = (jnp.zeros((B, hidden), jnp.float32),
            jnp.zeros((B, hidden), jnp.float32))
    (h_n, c_n), ys = lax.scan(step, init, x)
    return ys, h_n, c_n


def _reference_forward(params, inputs, size, layers):
    x = jnp.asarray(inputs, jnp.float32)
    hn_list, cn_list = [], []
    layer_in = x
    for layer in range(layers):
        p = params[layer]
        y_f, h_f, c_f = _ref_direction(layer_in, **p["fwd"], hidden=size)
        y_b_rev, h_b, c_b = _ref_direction(layer_in[::-1], **p["bwd"],
                                           hidden=size)
        y_b = y_b_rev[::-1]
        layer_in = jnp.concatenate([y_f, y_b], axis=-1)
        hn_list += [h_f, h_b]
        cn_list += [c_f, c_b]
    out = layer_in[..., :size] + layer_in[..., size:] + x
    return out, jnp.stack(hn_list, 0), jnp.stack(cn_list, 0)


if __name__ == "__main__":
    SIZE = 32      # input/hidden size (constrained equal in the module)
    LAYERS = 2
    SEQ = 8
    BATCH = 2

    key = jax.random.PRNGKey(0)
    key, pkey, xkey = jax.random.split(key, 3)
    raw_params = init_bidirectional_lstm_params(pkey, SIZE, LAYERS)
    packed_params = pack_bidirectional_lstm_params(raw_params, SIZE, LAYERS)
    inputs = jax.random.normal(xkey, (SEQ, BATCH, SIZE), jnp.float32)

    fwd = jax.jit(functools.partial(bidirectional_lstm_forward,
                                    size=SIZE, layers=LAYERS))
    output, hn, cn = fwd(packed_params, inputs)
    jax.block_until_ready((output, hn, cn))

    assert output.shape == (SEQ, BATCH, SIZE)
    assert hn.shape == (LAYERS * 2, BATCH, SIZE)
    assert cn.shape == (LAYERS * 2, BATCH, SIZE)

    # sanity check against pure-JAX reference LSTM (raw PyTorch-layout params)
    ref_out, ref_hn, ref_cn = _reference_forward(raw_params, inputs, SIZE, LAYERS)
    assert jnp.allclose(output, ref_out, atol=1e-5, rtol=1e-5)
    assert jnp.allclose(hn, ref_hn, atol=1e-5, rtol=1e-5)
    assert jnp.allclose(cn, ref_cn, atol=1e-5, rtol=1e-5)

    print("KERNEL_OK")
</pallas_src>

<mosaic_0001>
module attributes {stable_mosaic.version = 11 : i64} {
  func.func @_bilstm_kernel(%arg0: i32, %arg1: memref<64x32xf32, #tpu.memory_space<vmem>>, %arg2: memref<32x256xf32, #tpu.memory_space<vmem>>, %arg3: memref<1x64x256xf32, #tpu.memory_space<vmem>>, %arg4: memref<4x32x128xf32, #tpu.memory_space<vmem>>, %arg5: memref<2x1x256xf32, #tpu.memory_space<vmem>>, %arg6: memref<64x32xf32, #tpu.memory_space<vmem>>, %arg7: memref<4x8x32xf32, #tpu.memory_space<vmem>>, %arg8: memref<4x8x32xf32, #tpu.memory_space<vmem>>, %arg9: memref<64x64xf32, #tpu.memory_space<vmem>>, %arg10: memref<64x256xf32, #tpu.memory_space<vmem>>) attributes {dimension_semantics = [#tpu.dimension_semantics<arbitrary>], iteration_bounds = array<i64: 1>, scalar_prefetch = 0 : i64, scratch_operands = 2 : i64, tpu.core_type = #tpu.core_type<tc>, window_params = [{pipeline_mode = #tpu.pipeline_mode<synchronous>, transform_indices = @transform_0, window_bounds = array<i64: 64, 32>}, {pipeline_mode = #tpu.pipeline_mode<synchronous>, transform_indices = @transform_1, window_bounds = array<i64: 32, 256>}, {pipeline_mode = #tpu.pipeline_mode<synchronous>, transform_indices = @transform_2, window_bounds = array<i64: 1, 64, 256>}, {pipeline_mode = #tpu.pipeline_mode<synchronous>, transform_indices = @transform_3, window_bounds = array<i64: 4, 32, 128>}, {pipeline_mode = #tpu.pipeline_mode<synchronous>, transform_indices = @transform_4, window_bounds = array<i64: 2, 1, 256>}, {pipeline_mode = #tpu.pipeline_mode<synchronous>, transform_indices = @transform_5, window_bounds = array<i64: 64, 32>}, {pipeline_mode = #tpu.pipeline_mode<synchronous>, transform_indices = @transform_6, window_bounds = array<i64: 4, 8, 32>}, {pipeline_mode = #tpu.pipeline_mode<synchronous>, transform_indices = @transform_7, window_bounds = array<i64: 4, 8, 32>}]} {
    %c0 = arith.constant 0 : index
    %c0_0 = arith.constant 0 : index
    %0 = vector.load %arg1[%c0, %c0_0] : memref<64x32xf32, #tpu.memory_space<vmem>>, vector<64x32xf32>
    %c0_1 = arith.constant 0 : index
    %c0_2 = arith.constant 0 : index
    %1 = vector.load %arg2[%c0_1, %c0_2] : memref<32x256xf32, #tpu.memory_space<vmem>>, vector<32x256xf32>
    %cst = arith.constant dense<0.000000e+00> : vector<64x256xf32>
    %2 = tpu.matmul %0, %1, %cst {dimension_numbers = #tpu.dot_dimension_numbers<[1], [0], [0], [1], [0, 0, 1, 1], [], []>} : vector<64x32xf32>, vector<32x256xf32>, vector<64x256xf32> -> vector<64x256xf32>
    %c0_3 = arith.constant 0 : index
    %c0_4 = arith.constant 0 : index
    %c0_5 = arith.constant 0 : index
    %3 = vector.load %arg5[%c0_3, %c0_4, %c0_5] : memref<2x1x256xf32, #tpu.memory_space<vmem>>, vector<1x1x256xf32>
    %4 = vector.shape_cast %3 : vector<1x1x256xf32> to vector<1x256xf32>
    %5 = vector.broadcast %4 : vector<1x256xf32> to vector<64x256xf32>
    %6 = arith.addf %2, %5 : vector<64x256xf32>
    %c0_6 = arith.constant 0 : index
    %c0_7 = arith.constant 0 : index
    %7 = vector.load %arg10[%c0_6, %c0_7] : memref<64x256xf32, #tpu.memory_space<vmem>>, vector<64x256xf32>
    tpu.vector_store %arg10[%c0_6, %c0_7], %6 {strides = array<i32>} : memref<64x256xf32, #tpu.memory_space<vmem>>, vector<64x256xf32>,
    %c0_8 = arith.constant 0 : index
    %c0_9 = arith.constant 0 : index
    %c0_10 = arith.constant 0 : index
    %8 = vector.load %arg4[%c0_8, %c0_9, %c0_10] : memref<4x32x128xf32, #tpu.memory_space<vmem>>, vector<1x32x128xf32>
    %9 = vector.shape_cast %8 : vector<1x32x128xf32> to vector<32x128xf32>
    %c1 = arith.constant 1 : index
    %c0_11 = arith.constant 0 : index
    %c0_12 = arith.constant 0 : index
    %10 = vector.load %arg4[%c1, %c0_11, %c0_12] : memref<4x32x128xf32, #tpu.memory_space<vmem>>, vector<1x32x128xf32>
    %11 = vector.shape_cast %10 : vector<1x32x128xf32> to vector<32x128xf32>
    %cst_13 = arith.constant 0.000000e+00 : f32
    %12 = vector.broadcast %cst_13 : f32 to vector<8x32xf32>
    %cst_14 = arith.constant dense<0.000000e+00> : vector<8x128xf32>
    %13 = tpu.matmul %12, %9, %cst_14 {dimension_numbers = #tpu.dot_dimension_numbers<[1], [0], [0], [1], [0, 0, 1, 1], [], []>} : vector<8x32xf32>, vector<32x128xf32>, vector<8x128xf32> -> vector<8x128xf32>
    %c0_15 = arith.constant 0 : index
    %c0_16 = arith.constant 0 : index
    %14 = vector.load %arg10[%c0_15, %c0_16] : memref<64x256xf32, #tpu.memory_space<vmem>>, vector<8x128xf32>
    %15 = arith.addf %13, %14 : vector<8x128xf32>
    %cst_17 = arith.constant dense<0.000000e+00> : vector<8x128xf32>
    %16 = tpu.matmul %12, %11, %cst_17 {dimension_numbers = #tpu.dot_dimension_numbers<[1], [0], [0], [1], [0, 0, 1, 1], [], []>} : vector<8x32xf32>, vector<32x128xf32>, vector<8x128xf32> -> vector<8x128xf32>
    %c56 = arith.constant 56 : index
    %c128 = arith.constant 128 : index
    %17 = vector.load %arg10[%c56, %c128] : memref<64x256xf32, #tpu.memory_space<vmem>>, vector<8x128xf32>
    %18 = arith.addf %16, %17 : vector<8x128xf32>
    %19 = vector.extract_strided_slice %15 {offsets = [0, 0], sizes = [8, 96], strides = [1, 1]} : vector<8x128xf32> to vector<8x96xf32>
    %20 = arith.negf %19 : vector<8x96xf32>
    %21 = math.exp %20 : vector<8x96xf32>
    %cst_18 = arith.constant 1.000000e+00 : f32
    %22 = vector.broadcast %cst_18 : f32 to vector<8x96xf32>
    %23 = arith.addf %22, %21 : vector<8x96xf32>
    %24 = arith.divf %22, %23 : vector<8x96xf32>
    %25 = vector.extract_strided_slice %15 {offsets = [0, 96], sizes = [8, 32], strides = [1, 1]} : vector<8x128xf32> to vector<8x32xf32>
    %26 = math.tanh %25 : vector<8x32xf32>
    %27 = vector.extract_strided_slice %18 {offsets = [0, 0], sizes = [8, 96], strides = [1, 1]} : vector<8x128xf32> to vector<8x96xf32>
    %28 = arith.negf %27 : vector<8x96xf32>
    %29 = math.exp %28 : vector<8x96xf32>
    %cst_19 = arith.constant 1.000000e+00 : f32
    %30 = vector.broadcast %cst_19 : f32 to vector<8x96xf32>
    %31 = arith.addf %30, %29 : vector<8x96xf32>
    %32 = arith.divf %30, %31 : vector<8x96xf32>
    %33 = vector.extract_strided_slice %18 {offsets = [0, 96], sizes = [8, 32], strides = [1, 1]} : vector<8x128xf32> to vector<8x32xf32>
    %34 = math.tanh %33 : vector<8x32xf32>
    %35 = vector.extract_strided_slice %24 {offsets = [0, 32], sizes = [8, 32], strides = [1, 1]} : vector<8x96xf32> to vector<8x32xf32>
    %36 = arith.mulf %35, %12 : vector<8x32xf32>
    %37 = vector.extract_strided_slice %24 {offsets = [0, 0], sizes = [8, 32], strides = [1, 1]} : vector<8x96xf32> to vector<8x32xf32>
    %38 = arith.mulf %37, %26 : vector<8x32xf32>
    %39 = arith.addf %36, %38 : vector<8x32xf32>
    %40 = vector.extract_strided_slice %24 {offsets = [0, 64], sizes = [8, 32], strides = [1, 1]} : vector<8x96xf32> to vector<8x32xf32>
    %41 = math.tanh %39 : vector<8x32xf32>
    %42 = arith.mulf %40, %41 : vector<8x32xf32>
    %43 = vector.extract_strided_slice %32 {offsets = [0, 32], sizes = [8, 32], strides = [1, 1]} : vector<8x96xf32> to vector<8x32xf32>
    %44 = arith.mulf %43, %12 : vector<8x32xf32>
    %45 = vector.extract_strided_slice %32 {offsets = [0, 0], sizes = [8, 32], strides = [1, 1]} : vector<8x96xf32> to vector<8x32xf32>
    %46 = arith.mulf %45, %34 : vector<8x32xf32>
    %47 = arith.addf %44, %46 : vector<8x32xf32>
    %48 = vector.extract_strided_slice %32 {offsets = [0, 64], sizes = [8, 32], strides = [1, 1]} : vector<8x96xf32> to vector<8x32xf32>
    %49 = math.tanh %47 : vector<8x32xf32>
    %50 = arith.mulf %48, %49 : vector<8x32xf32>
    %c0_20 = arith.constant 0 : index
    %c0_21 = arith.constant 0 : index
    %51 = vector.load %arg9[%c0_20, %c0_21] : memref<64x64xf32, #tpu.memory_space<vmem>>, vector<8x32xf32>
    tpu.vector_store %arg9[%c0_20, %c0_21], %42 {strides = array<i32>} : memref<64x64xf32, #tpu.memory_space<vmem>>, vector<8x32xf32>,
    %c56_22 = arith.constant 56 : index
    %c32 = arith.constant 32 : index
    %52 = vector.load %arg9[%c56_22, %c32] : memref<64x64xf32, #tpu.memory_space<vmem>>, vector<8x32xf32>
    tpu.vector_store %arg9[%c56_22, %c32], %50 {strides = array<i32>} : memref<64x64xf32, #tpu.memory_space<vmem>>, vector<8x32xf32>,
    %cst_23 = arith.constant dense<0.000000e+00> : vector<8x128xf32>
    %53 = tpu.matmul %42, %9, %cst_23 {dimension_numbers = #tpu.dot_dimension_numbers<[1], [0], [0], [1], [0, 0, 1, 1], [], []>} : vector<8x32xf32>, vector<32x128xf32>, vector<8x128xf32> -> vector<8x128xf32>
    %c8 = arith.constant 8 : index
    %c0_24 = arith.constant 0 : index
    %54 = vector.load %arg10[%c8, %c0_24] : memref<64x256xf32, #tpu.memory_space<vmem>>, vector<8x128xf32>
    %55 = arith.addf %53, %54 : vector<8x128xf32>
    %cst_25 = arith.constant dense<0.000000e+00> : vector<8x128xf32>
    %56 = tpu.matmul %50, %11, %cst_25 {dimension_numbers = #tpu.dot_dimension_numbers<[1], [0], [0], [1], [0, 0, 1, 1], [], []>} : vector<8x32xf32>, vector<32x128xf32>, vector<8x128xf32> -> vector<8x128xf32>
    %c48 = arith.constant 48 : index
    %c128_26 = arith.constant 128 : index
    %57 = vector.load %arg10[%c48, %c128_26] : memref<64x256xf32, #tpu.memory_space<vmem>>, vector<8x128xf32>
    %58 = arith.addf %56, %57 : vector<8x128xf32>
    %59 = vector.extract_strided_slice %55 {offsets = [0, 0], sizes = [8, 96], strides = [1, 1]} : vector<8x128xf32> to vector<8x96xf32>
    %60 = arith.negf %59 : vector<8x96xf32>
    %61 = math.exp %60 : vector<8x96xf32>
    %cst_27 = arith.constant 1.000000e+00 : f32
    %62 = vector.broadcast %cst_27 : f32 to vector<8x96xf32>
    %63 = arith.addf %62, %61 : vector<8x96xf32>
    %64 = arith.divf %62, %63 : vector<8x96xf32>
    %65 = vector.extract_strided_slice %55 {offsets = [0, 96], sizes = [8, 32], strides = [1, 1]} : vector<8x128xf32> to vector<8x32xf32>
    %66 = math.tanh %65 : vector<8x32xf32>
    %67 = vector.extract_strided_slice %58 {offsets = [0, 0], sizes = [8, 96], strides = [1, 1]} : vector<8x128xf32> to vector<8x96xf32>
    %68 = arith.negf %67 : vector<8x96xf32>
    %69 = math.exp %68 : vector<8x96xf32>
    %cst_28 = arith.constant 1.000000e+00 : f32
    %70 = vector.broadcast %cst_28 : f32 to vector<8x96xf32>
    %71 = arith.addf %70, %69 : vector<8x96xf32>
    %72 = arith.divf %70, %71 : vector<8x96xf32>
    %73 = vector.extract_strided_slice %58 {offsets = [0, 96], sizes = [8, 32], strides = [1, 1]} : vector<8x128xf32> to vector<8x32xf32>
    %74 = math.tanh %73 : vector<8x32xf32>
    %75 = vector.extract_strided_slice %64 {offsets = [0, 32], sizes = [8, 32], strides = [1, 1]} : vector<8x96xf32> to vector<8x32xf32>
    %76 = arith.mulf %75, %39 : vector<8x32xf32>
    %77 = vector.extract_strided_slice %64 {offsets = [0, 0], sizes = [8, 32], strides = [1, 1]} : vector<8x96xf32> to vector<8x32xf32>
    %78 = arith.mulf %77, %66 : vector<8x32xf32>
    %79 = arith.addf %76, %78 : vector<8x32xf32>
    %80 = vector.extract_strided_slice %64 {offsets = [0, 64], sizes = [8, 32], strides = [1, 1]} : vector<8x96xf32> to vector<8x32xf32>
    %81 = math.tanh %79 : vector<8x32xf32>
    %82 = arith.mulf %80, %81 : vector<8x32xf32>
    %83 = vector.extract_strided_slice %72 {offsets = [0, 32], sizes = [8, 32], strides = [1, 1]} : vector<8x96xf32> to vector<8x32xf32>
    %84 = arith.mulf %83, %47 : vector<8x32xf32>
    %85 = vector.extract_strided_slice %72 {offsets = [0, 0], sizes = [8, 32], strides = [1, 1]} : vector<8x96xf32> to vector<8x32xf32>
    %86 = arith.mulf %85, %74 : vector<8x32xf32>
    %87 = arith.addf %84, %86 : vector<8x32xf32>
    %88 = vector.extract_strided_slice %72 {offsets = [0, 64], sizes = [8, 32], strides = [1, 1]} : vector<8x96xf32> to vector<8x32xf32>
    %89 = math.tanh %87 : vector<8x32xf32>
    %90 = arith.mulf %88, %89 : vector<8x32xf32>
    %c8_29 = arith.constant 8 : index
    %c0_30 = arith.constant 0 : index
    %91 = vector.load %arg9[%c8_29, %c0_30] : memref<64x64xf32, #tpu.memory_space<vmem>>, vector<8x32xf32>
    tpu.vector_store %arg9[%c8_29, %c0_30], %82 {strides = array<i32>} : memref<64x64xf32, #tpu.memory_space<vmem>>, vector<8x32xf32>,
    %c48_31 = arith.constant 48 : index
    %c32_32 = arith.constant 32 : index
    %92 = vector.load %arg9[%c48_31, %c32_32] : memref<64x64xf32, #tpu.memory_space<vmem>>, vector<8x32xf32>
    tpu.vector_store %arg9[%c48_31, %c32_32], %90 {strides = array<i32>} : memref<64x64xf32, #tpu.memory_space<vmem>>, vector<8x32xf32>,
    %cst_33 = arith.constant dense<0.000000e+00> : vector<8x128xf32>
    %93 = tpu.matmul %82, %9, %cst_33 {dimension_numbers = #tpu.dot_dimension_numbers<[1], [0], [0], [1], [0, 0, 1, 1], [], []>} : vector<8x32xf32>, vector<32x128xf32>, vector<8x128xf32> -> vector<8x128xf32>
    %c16 = arith.constant 16 : index
    %c0_34 = arith.constant 0 : index
    %94 = vector.load %arg10[%c16, %c0_34] : memref<64x256xf32, #tpu.memory_space<vmem>>, vector<8x128xf32>
    %95 = arith.addf %93, %94 : vector<8x128xf32>
    %cst_35 = arith.constant dense<0.000000e+00> : vector<8x128xf32>
    %96 = tpu.matmul %90, %11, %cst_35 {dimension_numbers = #tpu.dot_dimension_numbers<[1], [0], [0], [1], [0, 0, 1, 1], [], []>} : vector<8x32xf32>, vector<32x128xf32>, vector<8x128xf32> -> vector<8x128xf32>
    %c40 = arith.constant 40 : index
    %c128_36 = arith.constant 128 : index
    %97 = vector.load %arg10[%c40, %c128_36] : memref<64x256xf32, #tpu.memory_space<vmem>>, vector<8x128xf32>
    %98 = arith.addf %96, %97 : vector<8x128xf32>
    %99 = vector.extract_strided_slice %95 {offsets = [0, 0], sizes = [8, 96], strides = [1, 1]} : vector<8x128xf32> to vector<8x96xf32>
    %100 = arith.negf %99 : vector<8x96xf32>
    %101 = math.exp %100 : vector<8x96xf32>
    %cst_37 = arith.constant 1.000000e+00 : f32
    %102 = vector.broadcast %cst_37 : f32 to vector<8x96xf32>
    %103 = arith.addf %102, %101 : vector<8x96xf32>
    %104 = arith.divf %102, %103 : vector<8x96xf32>
    %105 = vector.extract_strided_slice %95 {offsets = [0, 96], sizes = [8, 32], strides = [1, 1]} : vector<8x128xf32> to vector<8x32xf32>
    %106 = math.tanh %105 : vector<8x32xf32>
    %107 = vector.extract_strided_slice %98 {offsets = [0, 0], sizes = [8, 96], strides = [1, 1]} : vector<8x128xf32> to vector<8x96xf32>
    %108 = arith.negf %107 : vector<8x96xf32>
    %109 = math.exp %108 : vector<8x96xf32>
    %cst_38 = arith.constant 1.000000e+00 : f32
    %110 = vector.broadcast %cst_38 : f32 to vector<8x96xf32>
    %111 = arith.addf %110, %109 : vector<8x96xf32>
    %112 = arith.divf %110, %111 : vector<8x96xf32>
    %113 = vector.extract_strided_slice %98 {offsets = [0, 96], sizes = [8, 32], strides = [1, 1]} : vector<8x128xf32> to vector<8x32xf32>
    %114 = math.tanh %113 : vector<8x32xf32>
    %115 = vector.extract_strided_slice %104 {offsets = [0, 32], sizes = [8, 32], strides = [1, 1]} : vector<8x96xf32> to vector<8x32xf32>
    %116 = arith.mulf %115, %79 : vector<8x32xf32>
    %117 = vector.extract_strided_slice %104 {offsets = [0, 0], sizes = [8, 32], strides = [1, 1]} : vector<8x96xf32> to vector<8x32xf32>
    %118 = arith.mulf %117, %106 : vector<8x32xf32>
    %119 = arith.addf %116, %118 : vector<8x32xf32>
    %120 = vector.extract_strided_slice %104 {offsets = [0, 64], sizes = [8, 32], strides = [1, 1]} : vector<8x96xf32> to vector<8x32xf32>
    %121 = math.tanh %119 : vector<8x32xf32>
    %122 = arith.mulf %120, %121 : vector<8x32xf32>
    %123 = vector.extract_strided_slice %112 {offsets = [0, 32], sizes = [8, 32], strides = [1, 1]} : vector<8x96xf32> to vector<8x32xf32>
    %124 = arith.mulf %123, %87 : vector<8x32xf32>
    %125 = vector.extract_strided_slice %112 {offsets = [0, 0], sizes = [8, 32], strides = [1, 1]} : vector<8x96xf32> to vector<8x32xf32>
    %126 = arith.mulf %125, %114 : vector<8x32xf32>
    %127 = arith.addf %124, %126 : vector<8x32xf32>
    %128 = vector.extract_strided_slice %112 {offsets = [0, 64], sizes = [8, 32], strides = [1, 1]} : vector<8x96xf32> to vector<8x32xf32>
    %129 = math.tanh %127 : vector<8x32xf32>
    %130 = arith.mulf %128, %129 : vector<8x32xf32>
    %c16_39 = arith.constant 16 : index
    %c0_40 = arith.constant 0 : index
    %131 = vector.load %arg9[%c16_39, %c0_40] : memref<64x64xf32, #tpu.memory_space<vmem>>, vector<8x32xf32>
    tpu.vector_store %arg9[%c16_39, %c0_40], %122 {strides = array<i32>} : memref<64x64xf32, #tpu.memory_space<vmem>>, vector<8x32xf32>,
    %c40_41 = arith.constant 40 : index
    %c32_42 = arith.constant 32 : index
    %132 = vector.load %arg9[%c40_41, %c32_42] : memref<64x64xf32, #tpu.memory_space<vmem>>, vector<8x32xf32>
    tpu.vector_store %arg9[%c40_41, %c32_42], %130 {strides = array<i32>} : memref<64x64xf32, #tpu.memory_space<vmem>>, vector<8x32xf32>,
    %cst_43 = arith.constant dense<0.000000e+00> : vector<8x128xf32>
    %133 = tpu.matmul %122, %9, %cst_43 {dimension_numbers = #tpu.dot_dimension_numbers<[1], [0], [0], [1], [0, 0, 1, 1], [], []>} : vector<8x32xf32>, vector<32x128xf32>, vector<8x128xf32> -> vector<8x128xf32>
    %c24 = arith.constant 24 : index
    %c0_44 = arith.constant 0 : index
    %134 = vector.load %arg10[%c24, %c0_44] : memref<64x256xf32, #tpu.memory_space<vmem>>, vector<8x128xf32>
    %135 = arith.addf %133, %134 : vector<8x128xf32>
    %cst_45 = arith.constant dense<0.000000e+00> : vector<8x128xf32>
    %136 = tpu.matmul %130, %11, %cst_45 {dimension_numbers = #tpu.dot_dimension_numbers<[1], [0], [0], [1], [0, 0, 1, 1], [], []>} : vector<8x32xf32>, vector<32x128xf32>, vector<8x128xf32> -> vector<8x128xf32>
    %c32_46 = arith.constant 32 : index
    %c128_47 = arith.constant 128 : index
    %137 = vector.load %arg10[%c32_46, %c128_47] : memref<64x256xf32, #tpu.memory_space<vmem>>, vector<8x128xf32>
    %138 = arith.addf %136, %137 : vector<8x128xf32>
    %139 = vector.extract_strided_slice %135 {offsets = [0, 0], sizes = [8, 96], strides = [1, 1]} : vector<8x128xf32> to vector<8x96xf32>
    %140 = arith.negf %139 : vector<8x96xf32>
    %141 = math.exp %140 : vector<8x96xf32>
    %cst_48 = arith.constant 1.000000e+00 : f32
    %142 = vector.broadcast %cst_48 : f32 to vector<8x96xf32>
    %143 = arith.addf %142, %141 : vector<8x96xf32>
    %144 = arith.divf %142, %143 : vector<8x96xf32>
    %145 = vector.extract_strided_slice %135 {offsets = [0, 96], sizes = [8, 32], strides = [1, 1]} : vector<8x128xf32> to vector<8x32xf32>
    %146 = math.tanh %145 : vector<8x32xf32>
    %147 = vector.extract_strided_slice %138 {offsets = [0, 0], sizes = [8, 96], strides = [1, 1]} : vector<8x128xf32> to vector<8x96xf32>
    %148 = arith.negf %147 : vector<8x96xf32>
    %149 = math.exp %148 : vector<8x96xf32>
    %cst_49 = arith.constant 1.000000e+00 : f32
    %150 = vector.broadcast %cst_49 : f32 to vector<8x96xf32>
    %151 = arith.addf %150, %149 : vector<8x96xf32>
    %152 = arith.divf %150, %151 : vector<8x96xf32>
    %153 = vector.extract_strided_slice %138 {offsets = [0, 96], sizes = [8, 32], strides = [1, 1]} : vector<8x128xf32> to vector<8x32xf32>
    %154 = math.tanh %153 : vector<8x32xf32>
    %155 = vector.extract_strided_slice %144 {offsets = [0, 32], sizes = [8, 32], strides = [1, 1]} : vector<8x96xf32> to vector<8x32xf32>
    %156 = arith.mulf %155, %119 : vector<8x32xf32>
    %157 = vector.extract_strided_slice %144 {offsets = [0, 0], sizes = [8, 32], strides = [1, 1]} : vector<8x96xf32> to vector<8x32xf32>
    %158 = arith.mulf %157, %146 : vector<8x32xf32>
    %159 = arith.addf %156, %158 : vector<8x32xf32>
    %160 = vector.extract_strided_slice %144 {offsets = [0, 64], sizes = [8, 32], strides = [1, 1]} : vector<8x96xf32> to vector<8x32xf32>
    %161 = math.tanh %159 : vector<8x32xf32>
    %162 = arith.mulf %160, %161 : vector<8x32xf32>
    %163 = vector.extract_strided_slice %152 {offsets = [0, 32], sizes = [8, 32], strides = [1, 1]} : vector<8x96xf32> to vector<8x32xf32>
    %164 = arith.mulf %163, %127 : vector<8x32xf32>
    %165 = vector.extract_strided_slice %152 {offsets = [0, 0], sizes = [8, 32], strides = [1, 1]} : vector<8x96xf32> to vector<8x32xf32>
    %166 = arith.mulf %165, %154 : vector<8x32xf32>
    %167 = arith.addf %164, %166 : vector<8x32xf32>
    %168 = vector.extract_strided_slice %152 {offsets = [0, 64], sizes = [8, 32], strides = [1, 1]} : vector<8x96xf32> to vector<8x32xf32>
    %169 = math.tanh %167 : vector<8x32xf32>
    %170 = arith.mulf %168, %169 : vector<8x32xf32>
    %c24_50 = arith.constant 24 : index
    %c0_51 = arith.constant 0 : index
    %171 = vector.load %arg9[%c24_50, %c0_51] : memref<64x64xf32, #tpu.memory_space<vmem>>, vector<8x32xf32>
    tpu.vector_store %arg9[%c24_50, %c0_51], %162 {strides = array<i32>} : memref<64x64xf32, #tpu.memory_space<vmem>>, vector<8x32xf32>,
    %c32_52 = arith.constant 32 : index
    %c32_53 = arith.constant 32 : index
    %172 = vector.load %arg9[%c32_52, %c32_53] : memref<64x64xf32, #tpu.memory_space<vmem>>, vector<8x32xf32>
    tpu.vector_store %arg9[%c32_52, %c32_53], %170 {strides = array<i32>} : memref<64x64xf32, #tpu.memory_space<vmem>>, vector<8x32xf32>,
    %cst_54 = arith.constant dense<0.000000e+00> : vector<8x128xf32>
    %173 = tpu.matmul %162, %9, %cst_54 {dimension_numbers = #tpu.dot_dimension_numbers<[1], [0], [0], [1], [0, 0, 1, 1], [], []>} : vector<8x32xf32>, vector<32x128xf32>, vector<8x128xf32> -> vector<8x128xf32>
    %c32_55 = arith.constant 32 : index
    %c0_56 = arith.constant 0 : index
    %174 = vector.load %arg10[%c32_55, %c0_56] : memref<64x256xf32, #tpu.memory_space<vmem>>, vector<8x128xf32>
    %175 = arith.addf %173, %174 : vector<8x128xf32>
    %cst_57 = arith.constant dense<0.000000e+00> : vector<8x128xf32>
    %176 = tpu.matmul %170, %11, %cst_57 {dimension_numbers = #tpu.dot_dimension_numbers<[1], [0], [0], [1], [0, 0, 1, 1], [], []>} : vector<8x32xf32>, vector<32x128xf32>, vector<8x128xf32> -> vector<8x128xf32>
    %c24_58 = arith.constant 24 : index
    %c128_59 = arith.constant 128 : index
    %177 = vector.load %arg10[%c24_58, %c128_59] : memref<64x256xf32, #tpu.memory_space<vmem>>, vector<8x128xf32>
    %178 = arith.addf %176, %177 : vector<8x128xf32>
    %179 = vector.extract_strided_slice %175 {offsets = [0, 0], sizes = [8, 96], strides = [1, 1]} : vector<8x128xf32> to vector<8x96xf32>
    %180 = arith.negf %179 : vector<8x96xf32>
    %181 = math.exp %180 : vector<8x96xf32>
    %cst_60 = arith.constant 1.000000e+00 : f32
    %182 = vector.broadcast %cst_60 : f32 to vector<8x96xf32>
    %183 = arith.addf %182, %181 : vector<8x96xf32>
    %184 = arith.divf %182, %183 : vector<8x96xf32>
    %185 = vector.extract_strided_slice %175 {offsets = [0, 96], sizes = [8, 32], strides = [1, 1]} : vector<8x128xf32> to vector<8x32xf32>
    %186 = math.tanh %185 : vector<8x32xf32>
    %187 = vector.extract_strided_slice %178 {offsets = [0, 0], sizes = [8, 96], strides = [1, 1]} : vector<8x128xf32> to vector<8x96xf32>
    %188 = arith.negf %187 : vector<8x96xf32>
    %189 = math.exp %188 : vector<8x96xf32>
    %cst_61 = arith.constant 1.000000e+00 : f32
    %190 = vector.broadcast %cst_61 : f32 to vector<8x96xf32>
    %191 = arith.addf %190, %189 : vector<8x96xf32>
    %192 = arith.divf %190, %191 : vector<8x96xf32>
    %193 = vector.extract_strided_slice %178 {offsets = [0, 96], sizes = [8, 32], strides = [1, 1]} : vector<8x128xf32> to vector<8x32xf32>
    %194 = math.tanh %193 : vector<8x32xf32>
    %195 = vector.extract_strided_slice %184 {offsets = [0, 32], sizes = [8, 32], strides = [1, 1]} : vector<8x96xf32> to vector<8x32xf32>
    %196 = arith.mulf %195, %159 : vector<8x32xf32>
    %197 = vector.extract_strided_slice %184 {offsets = [0, 0], sizes = [8, 32], strides = [1, 1]} : vector<8x96xf32> to vector<8x32xf32>
    %198 = arith.mulf %197, %186 : vector<8x32xf32>
    %199 = arith.addf %196, %198 : vector<8x32xf32>
    %200 = vector.extract_strided_slice %184 {offsets = [0, 64], sizes = [8, 32], strides = [1, 1]} : vector<8x96xf32> to vector<8x32xf32>
    %201 = math.tanh %199 : vector<8x32xf32>
    %202 = arith.mulf %200, %201 : vector<8x32xf32>
    %203 = vector.extract_strided_slice %192 {offsets = [0, 32], sizes = [8, 32], strides = [1, 1]} : vector<8x96xf32> to vector<8x32xf32>
    %204 = arith.mulf %203, %167 : vector<8x32xf32>
    %205 = vector.extract_strided_slice %192 {offsets = [0, 0], sizes = [8, 32], strides = [1, 1]} : vector<8x96xf32> to vector<8x32xf32>
    %206 = arith.mulf %205, %194 : vector<8x32xf32>
    %207 = arith.addf %204, %206 : vector<8x32xf32>
    %208 = vector.extract_strided_slice %192 {offsets = [0, 64], sizes = [8, 32], strides = [1, 1]} : vector<8x96xf32> to vector<8x32xf32>
    %209 = math.tanh %207 : vector<8x32xf32>
    %210 = arith.mulf %208, %209 : vector<8x32xf32>
    %c32_62 = arith.constant 32 : index
    %c0_63 = arith.constant 0 : index
    %211 = vector.load %arg9[%c32_62, %c0_63] : memref<64x64xf32, #tpu.memory_space<vmem>>, vector<8x32xf32>
    tpu.vector_store %arg9[%c32_62, %c0_63], %202 {strides = array<i32>} : memref<64x64xf32, #tpu.memory_space<vmem>>, vector<8x32xf32>,
    %c24_64 = arith.constant 24 : index
    %c32_65 = arith.constant 32 : index
    %212 = vector.load %arg9[%c24_64, %c32_65] : memref<64x64xf32, #tpu.memory_space<vmem>>, vector<8x32xf32>
    tpu.vector_store %arg9[%c24_64, %c32_65], %210 {strides = array<i32>} : memref<64x64xf32, #tpu.memory_space<vmem>>, vector<8x32xf32>,
    %cst_66 = arith.constant dense<0.000000e+00> : vector<8x128xf32>
    %213 = tpu.matmul %202, %9, %cst_66 {dimension_numbers = #tpu.dot_dimension_numbers<[1], [0], [0], [1], [0, 0, 1, 1], [], []>} : vector<8x32xf32>, vector<32x128xf32>, vector<8x128xf32> -> vector<8x128xf32>
    %c40_67 = arith.constant 40 : index
    %c0_68 = arith.constant 0 : index
    %214 = vector.load %arg10[%c40_67, %c0_68] : memref<64x256xf32, #tpu.memory_space<vmem>>, vector<8x128xf32>
    %215 = arith.addf %213, %214 : vector<8x128xf32>
    %cst_69 = arith.constant dense<0.000000e+00> : vector<8x128xf32>
    %216 = tpu.matmul %210, %11, %cst_69 {dimension_numbers = #tpu.dot_dimension_numbers<[1], [0], [0], [1], [0, 0, 1, 1], [], []>} : vector<8x32xf32>, vector<32x128xf32>, vector<8x128xf32> -> vector<8x128xf32>
    %c16_70 = arith.constant 16 : index
    %c128_71 = arith.constant 128 : index
    %217 = vector.load %arg10[%c16_70, %c128_71] : memref<64x256xf32, #tpu.memory_space<vmem>>, vector<8x128xf32>
    %218 = arith.addf %216, %217 : vector<8x128xf32>
    %219 = vector.extract_strided_slice %215 {offsets = [0, 0], sizes = [8, 96], strides = [1, 1]} : vector<8x128xf32> to vector<8x96xf32>
    %220 = arith.negf %219 : vector<8x96xf32>
    %221 = math.exp %220 : vector<8x96xf32>
    %cst_72 = arith.constant 1.000000e+00 : f32
    %222 = vector.broadcast %cst_72 : f32 to vector<8x96xf32>
    %223 = arith.addf %222, %221 : vector<8x96xf32>
    %224 = arith.divf %222, %223 : vector<8x96xf32>
    %225 = vector.extract_strided_slice %215 {offsets = [0, 96], sizes = [8, 32], strides = [1, 1]} : vector<8x128xf32> to vector<8x32xf32>
    %226 = math.tanh %225 : vector<8x32xf32>
    %227 = vector.extract_strided_slice %218 {offsets = [0, 0], sizes = [8, 96], strides = [1, 1]} : vector<8x128xf32> to vector<8x96xf32>
    %228 = arith.negf %227 : vector<8x96xf32>
    %229 = math.exp %228 : vector<8x96xf32>
    %cst_73 = arith.constant 1.000000e+00 : f32
    %230 = vector.broadcast %cst_73 : f32 to vector<8x96xf32>
    %231 = arith.addf %230, %229 : vector<8x96xf32>
    %232 = arith.divf %230, %231 : vector<8x96xf32>
    %233 = vector.extract_strided_slice %218 {offsets = [0, 96], sizes = [8, 32], strides = [1, 1]} : vector<8x128xf32> to vector<8x32xf32>
    %234 = math.tanh %233 : vector<8x32xf32>
    %235 = vector.extract_strided_slice %224 {offsets = [0, 32], sizes = [8, 32], strides = [1, 1]} : vector<8x96xf32> to vector<8x32xf32>
    %236 = arith.mulf %235, %199 : vector<8x32xf32>
    %237 = vector.extract_strided_slice %224 {offsets = [0, 0], sizes = [8, 32], strides = [1, 1]} : vector<8x96xf32> to vector<8x32xf32>
    %238 = arith.mulf %237, %226 : vector<8x32xf32>
    %239 = arith.addf %236, %238 : vector<8x32xf32>
    %240 = vector.extract_strided_slice %224 {offsets = [0, 64], sizes = [8, 32], strides = [1, 1]} : vector<8x96xf32> to vector<8x32xf32>
    %241 = math.tanh %239 : vector<8x32xf32>
    %242 = arith.mulf %240, %241 : vector<8x32xf32>
    %243 = vector.extract_strided_slice %232 {offsets = [0, 32], sizes = [8, 32], strides = [1, 1]} : vector<8x96xf32> to vector<8x32xf32>
    %244 = arith.mulf %243, %207 : vector<8x32xf32>
    %245 = vector.extract_strided_slice %232 {offsets = [0, 0], sizes = [8, 32], strides = [1, 1]} : vector<8x96xf32> to vector<8x32xf32>
    %246 = arith.mulf %245, %234 : vector<8x32xf32>
    %247 = arith.addf %244, %246 : vector<8x32xf32>
    %248 = vector.extract_strided_slice %232 {offsets = [0, 64], sizes = [8, 32], strides = [1, 1]} : vector<8x96xf32> to vector<8x32xf32>
    %249 = math.tanh %247 : vector<8x32xf32>
    %250 = arith.mulf %248, %249 : vector<8x32xf32>
    %c40_74 = arith.constant 40 : index
    %c0_75 = arith.constant 0 : index
    %251 = vector.load %arg9[%c40_74, %c0_75] : memref<64x64xf32, #tpu.memory_space<vmem>>, vector<8x32xf32>
    tpu.vector_store %arg9[%c40_74, %c0_75], %242 {strides = array<i32>} : memref<64x64xf32, #tpu.memory_space<vmem>>, vector<8x32xf32>,
    %c16_76 = arith.constant 16 : index
    %c32_77 = arith.constant 32 : index
    %252 = vector.load %arg9[%c16_76, %c32_77] : memref<64x64xf32, #tpu.memory_space<vmem>>, vector<8x32xf32>
    tpu.vector_store %arg9[%c16_76, %c32_77], %250 {strides = array<i32>} : memref<64x64xf32, #tpu.memory_space<vmem>>, vector<8x32xf32>,
    %cst_78 = arith.constant dense<0.000000e+00> : vector<8x128xf32>
    %253 = tpu.matmul %242, %9, %cst_78 {dimension_numbers = #tpu.dot_dimension_numbers<[1], [0], [0], [1], [0, 0, 1, 1], [], []>} : vector<8x32xf32>, vector<32x128xf32>, vector<8x128xf32> -> vector<8x128xf32>
    %c48_79 = arith.constant 48 : index
    %c0_80 = arith.constant 0 : index
    %254 = vector.load %arg10[%c48_79, %c0_80] : memref<64x256xf32, #tpu.memory_space<vmem>>, vector<8x128xf32>
    %255 = arith.addf %253, %254 : vector<8x128xf32>
    %cst_81 = arith.constant dense<0.000000e+00> : vector<8x128xf32>
    %256 = tpu.matmul %250, %11, %cst_81 {dimension_numbers = #tpu.dot_dimension_numbers<[1], [0], [0], [1], [0, 0, 1, 1], [], []>} : vector<8x32xf32>, vector<32x128xf32>, vector<8x128xf32> -> vector<8x128xf32>
    %c8_82 = arith.constant 8 : index
    %c128_83 = arith.constant 128 : index
    %257 = vector.load %arg10[%c8_82, %c128_83] : memref<64x256xf32, #tpu.memory_space<vmem>>, vector<8x128xf32>
    %258 = arith.addf %256, %257 : vector<8x128xf32>
    %259 = vector.extract_strided_slice %255 {offsets = [0, 0], sizes = [8, 96], strides = [1, 1]} : vector<8x128xf32> to vector<8x96xf32>
    %260 = arith.negf %259 : vector<8x96xf32>
    %261 = math.exp %260 : vector<8x96xf32>
    %cst_84 = arith.constant 1.000000e+00 : f32
    %262 = vector.broadcast %cst_84 : f32 to vector<8x96xf32>
    %263 = arith.addf %262, %261 : vector<8x96xf32>
    %264 = arith.divf %262, %263 : vector<8x96xf32>
    %265 = vector.extract_strided_slice %255 {offsets = [0, 96], sizes = [8, 32], strides = [1, 1]} : vector<8x128xf32> to vector<8x32xf32>
    %266 = math.tanh %265 : vector<8x32xf32>
    %267 = vector.extract_strided_slice %258 {offsets = [0, 0], sizes = [8, 96], strides = [1, 1]} : vector<8x128xf32> to vector<8x96xf32>
    %268 = arith.negf %267 : vector<8x96xf32>
    %269 = math.exp %268 : vector<8x96xf32>
    %cst_85 = arith.constant 1.000000e+00 : f32
    %270 = vector.broadcast %cst_85 : f32 to vector<8x96xf32>
    %271 = arith.addf %270, %269 : vector<8x96xf32>
    %272 = arith.divf %270, %271 : vector<8x96xf32>
    %273 = vector.extract_strided_slice %258 {offsets = [0, 96], sizes = [8, 32], strides = [1, 1]} : vector<8x128xf32> to vector<8x32xf32>
    %274 = math.tanh %273 : vector<8x32xf32>
    %275 = vector.extract_strided_slice %264 {offsets = [0, 32], sizes = [8, 32], strides = [1, 1]} : vector<8x96xf32> to vector<8x32xf32>
    %276 = arith.mulf %275, %239 : vector<8x32xf32>
    %277 = vector.extract_strided_slice %264 {offsets = [0, 0], sizes = [8, 32], strides = [1, 1]} : vector<8x96xf32> to vector<8x32xf32>
    %278 = arith.mulf %277, %266 : vector<8x32xf32>
    %279 = arith.addf %276, %278 : vector<8x32xf32>
    %280 = vector.extract_strided_slice %264 {offsets = [0, 64], sizes = [8, 32], strides = [1, 1]} : vector<8x96xf32> to vector<8x32xf32>
    %281 = math.tanh %279 : vector<8x32xf32>
    %282 = arith.mulf %280, %281 : vector<8x32xf32>
    %283 = vector.extract_strided_slice %272 {offsets = [0, 32], sizes = [8, 32], strides = [1, 1]} : vector<8x96xf32> to vector<8x32xf32>
    %284 = arith.mulf %283, %247 : vector<8x32xf32>
    %285 = vector.extract_strided_slice %272 {offsets = [0, 0], sizes = [8, 32], strides = [1, 1]} : vector<8x96xf32> to vector<8x32xf32>
    %286 = arith.mulf %285, %274 : vector<8x32xf32>
    %287 = arith.addf %284, %286 : vector<8x32xf32>
    %288 = vector.extract_strided_slice %272 {offsets = [0, 64], sizes = [8, 32], strides = [1, 1]} : vector<8x96xf32> to vector<8x32xf32>
    %289 = math.tanh %287 : vector<8x32xf32>
    %290 = arith.mulf %288, %289 : vector<8x32xf32>
    %c48_86 = arith.constant 48 : index
    %c0_87 = arith.constant 0 : index
    %291 = vector.load %arg9[%c48_86, %c0_87] : memref<64x64xf32, #tpu.memory_space<vmem>>, vector<8x32xf32>
    tpu.vector_store %arg9[%c48_86, %c0_87], %282 {strides = array<i32>} : memref<64x64xf32, #tpu.memory_space<vmem>>, vector<8x32xf32>,
    %c8_88 = arith.constant 8 : index
    %c32_89 = arith.constant 32 : index
    %292 = vector.load %arg9[%c8_88, %c32_89] : memref<64x64xf32, #tpu.memory_space<vmem>>, vector<8x32xf32>
    tpu.vector_store %arg9[%c8_88, %c32_89], %290 {strides = array<i32>} : memref<64x64xf32, #tpu.memory_space<vmem>>, vector<8x32xf32>,
    %cst_90 = arith.constant dense<0.000000e+00> : vector<8x128xf32>
    %293 = tpu.matmul %282, %9, %cst_90 {dimension_numbers = #tpu.dot_dimension_numbers<[1], [0], [0], [1], [0, 0, 1, 1], [], []>} : vector<8x32xf32>, vector<32x128xf32>, vector<8x128xf32> -> vector<8x128xf32>
    %c56_91 = arith.constant 56 : index
    %c0_92 = arith.constant 0 : index
    %294 = vector.load %arg10[%c56_91, %c0_92] : memref<64x256xf32, #tpu.memory_space<vmem>>, vector<8x128xf32>
    %295 = arith.addf %293, %294 : vector<8x128xf32>
    %cst_93 = arith.constant dense<0.000000e+00> : vector<8x128xf32>
    %296 = tpu.matmul %290, %11, %cst_93 {dimension_numbers = #tpu.dot_dimension_numbers<[1], [0], [0], [1], [0, 0, 1, 1], [], []>} : vector<8x32xf32>, vector<32x128xf32>, vector<8x128xf32> -> vector<8x128xf32>
    %c0_94 = arith.constant 0 : index
    %c128_95 = arith.constant 128 : index
    %297 = vector.load %arg10[%c0_94, %c128_95] : memref<64x256xf32, #tpu.memory_space<vmem>>, vector<8x128xf32>
    %298 = arith.addf %296, %297 : vector<8x128xf32>
    %299 = vector.extract_strided_slice %295 {offsets = [0, 0], sizes = [8, 96], strides = [1, 1]} : vector<8x128xf32> to vector<8x96xf32>
    %300 = arith.negf %299 : vector<8x96xf32>
    %301 = math.exp %300 : vector<8x96xf32>
    %cst_96 = arith.constant 1.000000e+00 : f32
    %302 = vector.broadcast %cst_96 : f32 to vector<8x96xf32>
    %303 = arith.addf %302, %301 : vector<8x96xf32>
    %304 = arith.divf %302, %303 : vector<8x96xf32>
    %305 = vector.extract_strided_slice %295 {offsets = [0, 96], sizes = [8, 32], strides = [1, 1]} : vector<8x128xf32> to vector<8x32xf32>
    %306 = math.tanh %305 : vector<8x32xf32>
    %307 = vector.extract_strided_slice %298 {offsets = [0, 0], sizes = [8, 96], strides = [1, 1]} : vector<8x128xf32> to vector<8x96xf32>
    %308 = arith.negf %307 : vector<8x96xf32>
    %309 = math.exp %308 : vector<8x96xf32>
    %cst_97 = arith.constant 1.000000e+00 : f32
    %310 = vector.broadcast %cst_97 : f32 to vector<8x96xf32>
    %311 = arith.addf %310, %309 : vector<8x96xf32>
    %312 = arith.divf %310, %311 : vector<8x96xf32>
    %313 = vector.extract_strided_slice %298 {offsets = [0, 96], sizes = [8, 32], strides = [1, 1]} : vector<8x128xf32> to vector<8x32xf32>
    %314 = math.tanh %313 : vector<8x32xf32>
    %315 = vector.extract_strided_slice %304 {offsets = [0, 32], sizes = [8, 32], strides = [1, 1]} : vector<8x96xf32> to vector<8x32xf32>
    %316 = arith.mulf %315, %279 : vector<8x32xf32>
    %317 = vector.extract_strided_slice %304 {offsets = [0, 0], sizes = [8, 32], strides = [1, 1]} : vector<8x96xf32> to vector<8x32xf32>
    %318 = arith.mulf %317, %306 : vector<8x32xf32>
    %319 = arith.addf %316, %318 : vector<8x32xf32>
    %320 = vector.extract_strided_slice %304 {offsets = [0, 64], sizes = [8, 32], strides = [1, 1]} : vector<8x96xf32> to vector<8x32xf32>
    %321 = math.tanh %319 : vector<8x32xf32>
    %322 = arith.mulf %320, %321 : vector<8x32xf32>
    %323 = vector.extract_strided_slice %312 {offsets = [0, 32], sizes = [8, 32], strides = [1, 1]} : vector<8x96xf32> to vector<8x32xf32>
    %324 = arith.mulf %323, %287 : vector<8x32xf32>
    %325 = vector.extract_strided_slice %312 {offsets = [0, 0], sizes = [8, 32], strides = [1, 1]} : vector<8x96xf32> to vector<8x32xf32>
    %326 = arith.mulf %325, %314 : vector<8x32xf32>
    %327 = arith.addf %324, %326 : vector<8x32xf32>
    %328 = vector.extract_strided_slice %312 {offsets = [0, 64], sizes = [8, 32], strides = [1, 1]} : vector<8x96xf32> to vector<8x32xf32>
    %329 = math.tanh %327 : vector<8x32xf32>
    %330 = arith.mulf %328, %329 : vector<8x32xf32>
    %c56_98 = arith.constant 56 : index
    %c0_99 = arith.constant 0 : index
    %331 = vector.load %arg9[%c56_98, %c0_99] : memref<64x64xf32, #tpu.memory_space<vmem>>, vector<8x32xf32>
    tpu.vector_store %arg9[%c56_98, %c0_99], %322 {strides = array<i32>} : memref<64x64xf32, #tpu.memory_space<vmem>>, vector<8x32xf32>,
    %c0_100 = arith.constant 0 : index
    %c32_101 = arith.constant 32 : index
    %332 = vector.load %arg9[%c0_100, %c32_101] : memref<64x64xf32, #tpu.memory_space<vmem>>, vector<8x32xf32>
    tpu.vector_store %arg9[%c0_100, %c32_101], %330 {strides = array<i32>} : memref<64x64xf32, #tpu.memory_space<vmem>>, vector<8x32xf32>,
    %c0_102 = arith.constant 0 : index
    %c0_103 = arith.constant 0 : index
    %c0_104 = arith.constant 0 : index
    %333 = vector.load %arg7[%c0_102, %c0_103, %c0_104] : memref<4x8x32xf32, #tpu.memory_space<vmem>>, vector<1x8x32xf32>
    %334 = vector.shape_cast %333 : vector<1x8x32xf32> to vector<8x32xf32>
    %335 = vector.shape_cast %322 : vector<8x32xf32> to vector<1x8x32xf32>
    tpu.vector_store %arg7[%c0_102, %c0_103, %c0_104], %335 {strides = array<i32>} : memref<4x8x32xf32, #tpu.memory_space<vmem>>, vector<1x8x32xf32>,
    %c1_105 = arith.constant 1 : index
    %c0_106 = arith.constant 0 : index
    %c0_107 = arith.constant 0 : index
    %336 = vector.load %arg7[%c1_105, %c0_106, %c0_107] : memref<4x8x32xf32, #tpu.memory_space<vmem>>, vector<1x8x32xf32>
    %337 = vector.shape_cast %336 : vector<1x8x32xf32> to vector<8x32xf32>
    %338 = vector.shape_cast %330 : vector<8x32xf32> to vector<1x8x32xf32>
    tpu.vector_store %arg7[%c1_105, %c0_106, %c0_107], %338 {strides = array<i32>} : memref<4x8x32xf32, #tpu.memory_space<vmem>>, vector<1x8x32xf32>,
    %c0_108 = arith.constant 0 : index
    %c0_109 = arith.constant 0 : index
    %c0_110 = arith.constant 0 : index
    %339 = vector.load %arg8[%c0_108, %c0_109, %c0_110] : memref<4x8x32xf32, #tpu.memory_space<vmem>>, vector<1x8x32xf32>
    %340 = vector.shape_cast %339 : vector<1x8x32xf32> to vector<8x32xf32>
    %341 = vector.shape_cast %319 : vector<8x32xf32> to vector<1x8x32xf32>
    tpu.vector_store %arg8[%c0_108, %c0_109, %c0_110], %341 {strides = array<i32>} : memref<4x8x32xf32, #tpu.memory_space<vmem>>, vector<1x8x32xf32>,
    %c1_111 = arith.constant 1 : index
    %c0_112 = arith.constant 0 : index
    %c0_113 = arith.constant 0 : index
    %342 = vector.load %arg8[%c1_111, %c0_112, %c0_113] : memref<4x8x32xf32, #tpu.memory_space<vmem>>, vector<1x8x32xf32>
    %343 = vector.shape_cast %342 : vector<1x8x32xf32> to vector<8x32xf32>
    %344 = vector.shape_cast %327 : vector<8x32xf32> to vector<1x8x32xf32>
    tpu.vector_store %arg8[%c1_111, %c0_112, %c0_113], %344 {strides = array<i32>} : memref<4x8x32xf32, #tpu.memory_space<vmem>>, vector<1x8x32xf32>,
    %c0_114 = arith.constant 0 : index
    %c0_115 = arith.constant 0 : index
    %345 = vector.load %arg9[%c0_114, %c0_115] : memref<64x64xf32, #tpu.memory_space<vmem>>, vector<64x64xf32>
    %c0_116 = arith.constant 0 : index
    %c0_117 = arith.constant 0 : index
    %c0_118 = arith.constant 0 : index
    %346 = vector.load %arg3[%c0_116, %c0_117, %c0_118] : memref<1x64x256xf32, #tpu.memory_space<vmem>>, vector<1x64x256xf32>
    %347 = vector.shape_cast %346 : vector<1x64x256xf32> to vector<64x256xf32>
    %cst_119 = arith.constant dense<0.000000e+00> : vector<64x256xf32>
    %348 = tpu.matmul %345, %347, %cst_119 {dimension_numbers = #tpu.dot_dimension_numbers<[1], [0], [0], [1], [0, 0, 1, 1], [], []>} : vector<64x64xf32>, vector<64x256xf32>, vector<64x256xf32> -> vector<64x256xf32>
    %c1_120 = arith.constant 1 : index
    %c0_121 = arith.constant 0 : index
    %c0_122 = arith.constant 0 : index
    %349 = vector.load %arg5[%c1_120, %c0_121, %c0_122] : memref<2x1x256xf32, #tpu.memory_space<vmem>>, vector<1x1x256xf32>
    %350 = vector.shape_cast %349 : vector<1x1x256xf32> to vector<1x256xf32>
    %351 = vector.broadcast %350 : vector<1x256xf32> to vector<64x256xf32>
    %352 = arith.addf %348, %351 : vector<64x256xf32>
    %c0_123 = arith.constant 0 : index
    %c0_124 = arith.constant 0 : index
    %353 = vector.load %arg10[%c0_123, %c0_124] : memref<64x256xf32, #tpu.memory_space<vmem>>, vector<64x256xf32>
    tpu.vector_store %arg10[%c0_123, %c0_124], %352 {strides = array<i32>} : memref<64x256xf32, #tpu.memory_space<vmem>>, vector<64x256xf32>,
    %c2 = arith.constant 2 : index
    %c0_125 = arith.constant 0 : index
    %c0_126 = arith.constant 0 : index
    %354 = vector.load %arg4[%c2, %c0_125, %c0_126] : memref<4x32x128xf32, #tpu.memory_space<vmem>>, vector<1x32x128xf32>
    %355 = vector.shape_cast %354 : vector<1x32x128xf32> to vector<32x128xf32>
    %c3 = arith.constant 3 : index
    %c0_127 = arith.constant 0 : index
    %c0_128 = arith.constant 0 : index
    %356 = vector.load %arg4[%c3, %c0_127, %c0_128] : memref<4x32x128xf32, #tpu.memory_space<vmem>>, vector<1x32x128xf32>
    %357 = vector.shape_cast %356 : vector<1x32x128xf32> to vector<32x128xf32>
    %cst_129 = arith.constant 0.000000e+00 : f32
    %358 = vector.broadcast %cst_129 : f32 to vector<8x32xf32>
    %cst_130 = arith.constant dense<0.000000e+00> : vector<8x128xf32>
    %359 = tpu.matmul %358, %355, %cst_130 {dimension_numbers = #tpu.dot_dimension_numbers<[1], [0], [0], [1], [0, 0, 1, 1], [], []>} : vector<8x32xf32>, vector<32x128xf32>, vector<8x128xf32> -> vector<8x128xf32>
    %c0_131 = arith.constant 0 : index
    %c0_132 = arith.constant 0 : index
    %360 = vector.load %arg10[%c0_131, %c0_132] : memref<64x256xf32, #tpu.memory_space<vmem>>, vector<8x128xf32>
    %361 = arith.addf %359, %360 : vector<8x128xf32>
    %cst_133 = arith.constant dense<0.000000e+00> : vector<8x128xf32>
    %362 = tpu.matmul %358, %357, %cst_133 {dimension_numbers = #tpu.dot_dimension_numbers<[1], [0], [0], [1], [0, 0, 1, 1], [], []>} : vector<8x32xf32>, vector<32x128xf32>, vector<8x128xf32> -> vector<8x128xf32>
    %c56_134 = arith.constant 56 : index
    %c128_135 = arith.constant 128 : index
    %363 = vector.load %arg10[%c56_134, %c128_135] : memref<64x256xf32, #tpu.memory_space<vmem>>, vector<8x128xf32>
    %364 = arith.addf %362, %363 : vector<8x128xf32>
    %365 = vector.extract_strided_slice %361 {offsets = [0, 0], sizes = [8, 96], strides = [1, 1]} : vector<8x128xf32> to vector<8x96xf32>
    %366 = arith.negf %365 : vector<8x96xf32>
    %367 = math.exp %366 : vector<8x96xf32>
    %cst_136 = arith.constant 1.000000e+00 : f32
    %368 = vector.broadcast %cst_136 : f32 to vector<8x96xf32>
    %369 = arith.addf %368, %367 : vector<8x96xf32>
    %370 = arith.divf %368, %369 : vector<8x96xf32>
    %371 = vector.extract_strided_slice %361 {offsets = [0, 96], sizes = [8, 32], strides = [1, 1]} : vector<8x128xf32> to vector<8x32xf32>
    %372 = math.tanh %371 : vector<8x32xf32>
    %373 = vector.extract_strided_slice %364 {offsets = [0, 0], sizes = [8, 96], strides = [1, 1]} : vector<8x128xf32> to vector<8x96xf32>
    %374 = arith.negf %373 : vector<8x96xf32>
    %375 = math.exp %374 : vector<8x96xf32>
    %cst_137 = arith.constant 1.000000e+00 : f32
    %376 = vector.broadcast %cst_137 : f32 to vector<8x96xf32>
    %377 = arith.addf %376, %375 : vector<8x96xf32>
    %378 = arith.divf %376, %377 : vector<8x96xf32>
    %379 = vector.extract_strided_slice %364 {offsets = [0, 96], sizes = [8, 32], strides = [1, 1]} : vector<8x128xf32> to vector<8x32xf32>
    %380 = math.tanh %379 : vector<8x32xf32>
    %381 = vector.extract_strided_slice %370 {offsets = [0, 32], sizes = [8, 32], strides = [1, 1]} : vector<8x96xf32> to vector<8x32xf32>
    %382 = arith.mulf %381, %358 : vector<8x32xf32>
    %383 = vector.extract_strided_slice %370 {offsets = [0, 0], sizes = [8, 32], strides = [1, 1]} : vector<8x96xf32> to vector<8x32xf32>
    %384 = arith.mulf %383, %372 : vector<8x32xf32>
    %385 = arith.addf %382, %384 : vector<8x32xf32>
    %386 = vector.extract_strided_slice %370 {offsets = [0, 64], sizes = [8, 32], strides = [1, 1]} : vector<8x96xf32> to vector<8x32xf32>
    %387 = math.tanh %385 : vector<8x32xf32>
    %388 = arith.mulf %386, %387 : vector<8x32xf32>
    %389 = vector.extract_strided_slice %378 {offsets = [0, 32], sizes = [8, 32], strides = [1, 1]} : vector<8x96xf32> to vector<8x32xf32>
    %390 = arith.mulf %389, %358 : vector<8x32xf32>
    %391 = vector.extract_strided_slice %378 {offsets = [0, 0], sizes = [8, 32], strides = [1, 1]} : vector<8x96xf32> to vector<8x32xf32>
    %392 = arith.mulf %391, %380 : vector<8x32xf32>
    %393 = arith.addf %390, %392 : vector<8x32xf32>
    %394 = vector.extract_strided_slice %378 {offsets = [0, 64], sizes = [8, 32], strides = [1, 1]} : vector<8x96xf32> to vector<8x32xf32>
    %395 = math.tanh %393 : vector<8x32xf32>
    %396 = arith.mulf %394, %395 : vector<8x32xf32>
    %c0_138 = arith.constant 0 : index
    %c0_139 = arith.constant 0 : index
    %397 = vector.load %arg9[%c0_138, %c0_139] : memref<64x64xf32, #tpu.memory_space<vmem>>, vector<8x32xf32>
    tpu.vector_store %arg9[%c0_138, %c0_139], %388 {strides = array<i32>} : memref<64x64xf32, #tpu.memory_space<vmem>>, vector<8x32xf32>,
    %c56_140 = arith.constant 56 : index
    %c32_141 = arith.constant 32 : index
    %398 = vector.load %arg9[%c56_140, %c32_141] : memref<64x64xf32, #tpu.memory_space<vmem>>, vector<8x32xf32>
    tpu.vector_store %arg9[%c56_140, %c32_141], %396 {strides = array<i32>} : memref<64x64xf32, #tpu.memory_space<vmem>>, vector<8x32xf32>,
    %cst_142 = arith.constant dense<0.000000e+00> : vector<8x128xf32>
    %399 = tpu.matmul %388, %355, %cst_142 {dimension_numbers = #tpu.dot_dimension_numbers<[1], [0], [0], [1], [0, 0, 1, 1], [], []>} : vector<8x32xf32>, vector<32x128xf32>, vector<8x128xf32> -> vector<8x128xf32>
    %c8_143 = arith.constant 8 : index
    %c0_144 = arith.constant 0 : index
    %400 = vector.load %arg10[%c8_143, %c0_144] : memref<64x256xf32, #tpu.memory_space<vmem>>, vector<8x128xf32>
    %401 = arith.addf %399, %400 : vector<8x128xf32>
    %cst_145 = arith.constant dense<0.000000e+00> : vector<8x128xf32>
    %402 = tpu.matmul %396, %357, %cst_145 {dimension_numbers = #tpu.dot_dimension_numbers<[1], [0], [0], [1], [0, 0, 1, 1], [], []>} : vector<8x32xf32>, vector<32x128xf32>, vector<8x128xf32> -> vector<8x128xf32>
    %c48_146 = arith.constant 48 : index
    %c128_147 = arith.constant 128 : index
    %403 = vector.load %arg10[%c48_146, %c128_147] : memref<64x256xf32, #tpu.memory_space<vmem>>, vector<8x128xf32>
    %404 = arith.addf %402, %403 : vector<8x128xf32>
    %405 = vector.extract_strided_slice %401 {offsets = [0, 0], sizes = [8, 96], strides = [1, 1]} : vector<8x128xf32> to vector<8x96xf32>
    %406 = arith.negf %405 : vector<8x96xf32>
    %407 = math.exp %406 : vector<8x96xf32>
    %cst_148 = arith.constant 1.000000e+00 : f32
    %408 = vector.broadcast %cst_148 : f32 to vector<8x96xf32>
    %409 = arith.addf %408, %407 : vector<8x96xf32>
    %410 = arith.divf %408, %409 : vector<8x96xf32>
    %411 = vector.extract_strided_slice %401 {offsets = [0, 96], sizes = [8, 32], strides = [1, 1]} : vector<8x128xf32> to vector<8x32xf32>
    %412 = math.tanh %411 : vector<8x32xf32>
    %413 = vector.extract_strided_slice %404 {offsets = [0, 0], sizes = [8, 96], strides = [1, 1]} : vector<8x128xf32> to vector<8x96xf32>
    %414 = arith.negf %413 : vector<8x96xf32>
    %415 = math.exp %414 : vector<8x96xf32>
    %cst_149 = arith.constant 1.000000e+00 : f32
    %416 = vector.broadcast %cst_149 : f32 to vector<8x96xf32>
    %417 = arith.addf %416, %415 : vector<8x96xf32>
    %418 = arith.divf %416, %417 : vector<8x96xf32>
    %419 = vector.extract_strided_slice %404 {offsets = [0, 96], sizes = [8, 32], strides = [1, 1]} : vector<8x128xf32> to vector<8x32xf32>
    %420 = math.tanh %419 : vector<8x32xf32>
    %421 = vector.extract_strided_slice %410 {offsets = [0, 32], sizes = [8, 32], strides = [1, 1]} : vector<8x96xf32> to vector<8x32xf32>
    %422 = arith.mulf %421, %385 : vector<8x32xf32>
    %423 = vector.extract_strided_slice %410 {offsets = [0, 0], sizes = [8, 32], strides = [1, 1]} : vector<8x96xf32> to vector<8x32xf32>
    %424 = arith.mulf %423, %412 : vector<8x32xf32>
    %425 = arith.addf %422, %424 : vector<8x32xf32>
    %426 = vector.extract_strided_slice %410 {offsets = [0, 64], sizes = [8, 32], strides = [1, 1]} : vector<8x96xf32> to vector<8x32xf32>
    %427 = math.tanh %425 : vector<8x32xf32>
    %428 = arith.mulf %426, %427 : vector<8x32xf32>
    %429 = vector.extract_strided_slice %418 {offsets = [0, 32], sizes = [8, 32], strides = [1, 1]} : vector<8x96xf32> to vector<8x32xf32>
    %430 = arith.mulf %429, %393 : vector<8x32xf32>
    %431 = vector.extract_strided_slice %418 {offsets = [0, 0], sizes = [8, 32], strides = [1, 1]} : vector<8x96xf32> to vector<8x32xf32>
    %432 = arith.mulf %431, %420 : vector<8x32xf32>
    %433 = arith.addf %430, %432 : vector<8x32xf32>
    %434 = vector.extract_strided_slice %418 {offsets = [0, 64], sizes = [8, 32], strides = [1, 1]} : vector<8x96xf32> to vector<8x32xf32>
    %435 = math.tanh %433 : vector<8x32xf32>
    %436 = arith.mulf %434, %435 : vector<8x32xf32>
    %c8_150 = arith.constant 8 : index
    %c0_151 = arith.constant 0 : index
    %437 = vector.load %arg9[%c8_150, %c0_151] : memref<64x64xf32, #tpu.memory_space<vmem>>, vector<8x32xf32>
    tpu.vector_store %arg9[%c8_150, %c0_151], %428 {strides = array<i32>} : memref<64x64xf32, #tpu.memory_space<vmem>>, vector<8x32xf32>,
    %c48_152 = arith.constant 48 : index
    %c32_153 = arith.constant 32 : index
    %438 = vector.load %arg9[%c48_152, %c32_153] : memref<64x64xf32, #tpu.memory_space<vmem>>, vector<8x32xf32>
    tpu.vector_store %arg9[%c48_152, %c32_153], %436 {strides = array<i32>} : memref<64x64xf32, #tpu.memory_space<vmem>>, vector<8x32xf32>,
    %cst_154 = arith.constant dense<0.000000e+00> : vector<8x128xf32>
    %439 = tpu.matmul %428, %355, %cst_154 {dimension_numbers = #tpu.dot_dimension_numbers<[1], [0], [0], [1], [0, 0, 1, 1], [], []>} : vector<8x32xf32>, vector<32x128xf32>, vector<8x128xf32> -> vector<8x128xf32>
    %c16_155 = arith.constant 16 : index
    %c0_156 = arith.constant 0 : index
    %440 = vector.load %arg10[%c16_155, %c0_156] : memref<64x256xf32, #tpu.memory_space<vmem>>, vector<8x128xf32>
    %441 = arith.addf %439, %440 : vector<8x128xf32>
    %cst_157 = arith.constant dense<0.000000e+00> : vector<8x128xf32>
    %442 = tpu.matmul %436, %357, %cst_157 {dimension_numbers = #tpu.dot_dimension_numbers<[1], [0], [0], [1], [0, 0, 1, 1], [], []>} : vector<8x32xf32>, vector<32x128xf32>, vector<8x128xf32> -> vector<8x128xf32>
    %c40_158 = arith.constant 40 : index
    %c128_159 = arith.constant 128 : index
    %443 = vector.load %arg10[%c40_158, %c128_159] : memref<64x256xf32, #tpu.memory_space<vmem>>, vector<8x128xf32>
    %444 = arith.addf %442, %443 : vector<8x128xf32>
    %445 = vector.extract_strided_slice %441 {offsets = [0, 0], sizes = [8, 96], strides = [1, 1]} : vector<8x128xf32> to vector<8x96xf32>
    %446 = arith.negf %445 : vector<8x96xf32>
    %447 = math.exp %446 : vector<8x96xf32>
    %cst_160 = arith.constant 1.000000e+00 : f32
    %448 = vector.broadcast %cst_160 : f32 to vector<8x96xf32>
    %449 = arith.addf %448, %447 : vector<8x96xf32>
    %450 = arith.divf %448, %449 : vector<8x96xf32>
    %451 = vector.extract_strided_slice %441 {offsets = [0, 96], sizes = [8, 32], strides = [1, 1]} : vector<8x128xf32> to vector<8x32xf32>
    %452 = math.tanh %451 : vector<8x32xf32>
    %453 = vector.extract_strided_slice %444 {offsets = [0, 0], sizes = [8, 96], strides = [1, 1]} : vector<8x128xf32> to vector<8x96xf32>
    %454 = arith.negf %453 : vector<8x96xf32>
    %455 = math.exp %454 : vector<8x96xf32>
    %cst_161 = arith.constant 1.000000e+00 : f32
    %456 = vector.broadcast %cst_161 : f32 to vector<8x96xf32>
    %457 = arith.addf %456, %455 : vector<8x96xf32>
    %458 = arith.divf %456, %457 : vector<8x96xf32>
    %459 = vector.extract_strided_slice %444 {offsets = [0, 96], sizes = [8, 32], strides = [1, 1]} : vector<8x128xf32> to vector<8x32xf32>
    %460 = math.tanh %459 : vector<8x32xf32>
    %461 = vector.extract_strided_slice %450 {offsets = [0, 32], sizes = [8, 32], strides = [1, 1]} : vector<8x96xf32> to vector<8x32xf32>
    %462 = arith.mulf %461, %425 : vector<8x32xf32>
    %463 = vector.extract_strided_slice %450 {offsets = [0, 0], sizes = [8, 32], strides = [1, 1]} : vector<8x96xf32> to vector<8x32xf32>
    %464 = arith.mulf %463, %452 : vector<8x32xf32>
    %465 = arith.addf %462, %464 : vector<8x32xf32>
    %466 = vector.extract_strided_slice %450 {offsets = [0, 64], sizes = [8, 32], strides = [1, 1]} : vector<8x96xf32> to vector<8x32xf32>
    %467 = math.tanh %465 : vector<8x32xf32>
    %468 = arith.mulf %466, %467 : vector<8x32xf32>
    %469 = vector.extract_strided_slice %458 {offsets = [0, 32], sizes = [8, 32], strides = [1, 1]} : vector<8x96xf32> to vector<8x32xf32>
    %470 = arith.mulf %469, %433 : vector<8x32xf32>
    %471 = vector.extract_strided_slice %458 {offsets = [0, 0], sizes = [8, 32], strides = [1, 1]} : vector<8x96xf32> to vector<8x32xf32>
    %472 = arith.mulf %471, %460 : vector<8x32xf32>
    %473 = arith.addf %470, %472 : vector<8x32xf32>
    %474 = vector.extract_strided_slice %458 {offsets = [0, 64], sizes = [8, 32], strides = [1, 1]} : vector<8x96xf32> to vector<8x32xf32>
    %475 = math.tanh %473 : vector<8x32xf32>
    %476 = arith.mulf %474, %475 : vector<8x32xf32>
    %c16_162 = arith.constant 16 : index
    %c0_163 = arith.constant 0 : index
    %477 = vector.load %arg9[%c16_162, %c0_163] : memref<64x64xf32, #tpu.memory_space<vmem>>, vector<8x32xf32>
    tpu.vector_store %arg9[%c16_162, %c0_163], %468 {strides = array<i32>} : memref<64x64xf32, #tpu.memory_space<vmem>>, vector<8x32xf32>,
    %c40_164 = arith.constant 40 : index
    %c32_165 = arith.constant 32 : index
    %478 = vector.load %arg9[%c40_164, %c32_165] : memref<64x64xf32, #tpu.memory_space<vmem>>, vector<8x32xf32>
    tpu.vector_store %arg9[%c40_164, %c32_165], %476 {strides = array<i32>} : memref<64x64xf32, #tpu.memory_space<vmem>>, vector<8x32xf32>,
    %cst_166 = arith.constant dense<0.000000e+00> : vector<8x128xf32>
    %479 = tpu.matmul %468, %355, %cst_166 {dimension_numbers = #tpu.dot_dimension_numbers<[1], [0], [0], [1], [0, 0, 1, 1], [], []>} : vector<8x32xf32>, vector<32x128xf32>, vector<8x128xf32> -> vector<8x128xf32>
    %c24_167 = arith.constant 24 : index
    %c0_168 = arith.constant 0 : index
    %480 = vector.load %arg10[%c24_167, %c0_168] : memref<64x256xf32, #tpu.memory_space<vmem>>, vector<8x128xf32>
    %481 = arith.addf %479, %480 : vector<8x128xf32>
    %cst_169 = arith.constant dense<0.000000e+00> : vector<8x128xf32>
    %482 = tpu.matmul %476, %357, %cst_169 {dimension_numbers = #tpu.dot_dimension_numbers<[1], [0], [0], [1], [0, 0, 1, 1], [], []>} : vector<8x32xf32>, vector<32x128xf32>, vector<8x128xf32> -> vector<8x128xf32>
    %c32_170 = arith.constant 32 : index
    %c128_171 = arith.constant 128 : index
    %483 = vector.load %arg10[%c32_170, %c128_171] : memref<64x256xf32, #tpu.memory_space<vmem>>, vector<8x128xf32>
    %484 = arith.addf %482, %483 : vector<8x128xf32>
    %485 = vector.extract_strided_slice %481 {offsets = [0, 0], sizes = [8, 96], strides = [1, 1]} : vector<8x128xf32> to vector<8x96xf32>
    %486 = arith.negf %485 : vector<8x96xf32>
    %487 = math.exp %486 : vector<8x96xf32>
    %cst_172 = arith.constant 1.000000e+00 : f32
    %488 = vector.broadcast %cst_172 : f32 to vector<8x96xf32>
    %489 = arith.addf %488, %487 : vector<8x96xf32>
    %490 = arith.divf %488, %489 : vector<8x96xf32>
    %491 = vector.extract_strided_slice %481 {offsets = [0, 96], sizes = [8, 32], strides = [1, 1]} : vector<8x128xf32> to vector<8x32xf32>
    %492 = math.tanh %491 : vector<8x32xf32>
    %493 = vector.extract_strided_slice %484 {offsets = [0, 0], sizes = [8, 96], strides = [1, 1]} : vector<8x128xf32> to vector<8x96xf32>
    %494 = arith.negf %493 : vector<8x96xf32>
    %495 = math.exp %494 : vector<8x96xf32>
    %cst_173 = arith.constant 1.000000e+00 : f32
    %496 = vector.broadcast %cst_173 : f32 to vector<8x96xf32>
    %497 = arith.addf %496, %495 : vector<8x96xf32>
    %498 = arith.divf %496, %497 : vector<8x96xf32>
    %499 = vector.extract_strided_slice %484 {offsets = [0, 96], sizes = [8, 32], strides = [1, 1]} : vector<8x128xf32> to vector<8x32xf32>
    %500 = math.tanh %499 : vector<8x32xf32>
    %501 = vector.extract_strided_slice %490 {offsets = [0, 32], sizes = [8, 32], strides = [1, 1]} : vector<8x96xf32> to vector<8x32xf32>
    %502 = arith.mulf %501, %465 : vector<8x32xf32>
    %503 = vector.extract_strided_slice %490 {offsets = [0, 0], sizes = [8, 32], strides = [1, 1]} : vector<8x96xf32> to vector<8x32xf32>
    %504 = arith.mulf %503, %492 : vector<8x32xf32>
    %505 = arith.addf %502, %504 : vector<8x32xf32>
    %506 = vector.extract_strided_slice %490 {offsets = [0, 64], sizes = [8, 32], strides = [1, 1]} : vector<8x96xf32> to vector<8x32xf32>
    %507 = math.tanh %505 : vector<8x32xf32>
    %508 = arith.mulf %506, %507 : vector<8x32xf32>
    %509 = vector.extract_strided_slice %498 {offsets = [0, 32], sizes = [8, 32], strides = [1, 1]} : vector<8x96xf32> to vector<8x32xf32>
    %510 = arith.mulf %509, %473 : vector<8x32xf32>
    %511 = vector.extract_strided_slice %498 {offsets = [0, 0], sizes = [8, 32], strides = [1, 1]} : vector<8x96xf32> to vector<8x32xf32>
    %512 = arith.mulf %511, %500 : vector<8x32xf32>
    %513 = arith.addf %510, %512 : vector<8x32xf32>
    %514 = vector.extract_strided_slice %498 {offsets = [0, 64], sizes = [8, 32], strides = [1, 1]} : vector<8x96xf32> to vector<8x32xf32>
    %515 = math.tanh %513 : vector<8x32xf32>
    %516 = arith.mulf %514, %515 : vector<8x32xf32>
    %c24_174 = arith.constant 24 : index
    %c0_175 = arith.constant 0 : index
    %517 = vector.load %arg9[%c24_174, %c0_175] : memref<64x64xf32, #tpu.memory_space<vmem>>, vector<8x32xf32>
    tpu.vector_store %arg9[%c24_174, %c0_175], %508 {strides = array<i32>} : memref<64x64xf32, #tpu.memory_space<vmem>>, vector<8x32xf32>,
    %c32_176 = arith.constant 32 : index
    %c32_177 = arith.constant 32 : index
    %518 = vector.load %arg9[%c32_176, %c32_177] : memref<64x64xf32, #tpu.memory_space<vmem>>, vector<8x32xf32>
    tpu.vector_store %arg9[%c32_176, %c32_177], %516 {strides = array<i32>} : memref<64x64xf32, #tpu.memory_space<vmem>>, vector<8x32xf32>,
    %cst_178 = arith.constant dense<0.000000e+00> : vector<8x128xf32>
    %519 = tpu.matmul %508, %355, %cst_178 {dimension_numbers = #tpu.dot_dimension_numbers<[1], [0], [0], [1], [0, 0, 1, 1], [], []>} : vector<8x32xf32>, vector<32x128xf32>, vector<8x128xf32> -> vector<8x128xf32>
    %c32_179 = arith.constant 32 : index
    %c0_180 = arith.constant 0 : index
    %520 = vector.load %arg10[%c32_179, %c0_180] : memref<64x256xf32, #tpu.memory_space<vmem>>, vector<8x128xf32>
    %521 = arith.addf %519, %520 : vector<8x128xf32>
    %cst_181 = arith.constant dense<0.000000e+00> : vector<8x128xf32>
    %522 = tpu.matmul %516, %357, %cst_181 {dimension_numbers = #tpu.dot_dimension_numbers<[1], [0], [0], [1], [0, 0, 1, 1], [], []>} : vector<8x32xf32>, vector<32x128xf32>, vector<8x128xf32> -> vector<8x128xf32>
    %c24_182 = arith.constant 24 : index
    %c128_183 = arith.constant 128 : index
    %523 = vector.load %arg10[%c24_182, %c128_183] : memref<64x256xf32, #tpu.memory_space<vmem>>, vector<8x128xf32>
    %524 = arith.addf %522, %523 : vector<8x128xf32>
    %525 = vector.extract_strided_slice %521 {offsets = [0, 0], sizes = [8, 96], strides = [1, 1]} : vector<8x128xf32> to vector<8x96xf32>
    %526 = arith.negf %525 : vector<8x96xf32>
    %527 = math.exp %526 : vector<8x96xf32>
    %cst_184 = arith.constant 1.000000e+00 : f32
    %528 = vector.broadcast %cst_184 : f32 to vector<8x96xf32>
    %529 = arith.addf %528, %527 : vector<8x96xf32>
    %530 = arith.divf %528, %529 : vector<8x96xf32>
    %531 = vector.extract_strided_slice %521 {offsets = [0, 96], sizes = [8, 32], strides = [1, 1]} : vector<8x128xf32> to vector<8x32xf32>
    %532 = math.tanh %531 : vector<8x32xf32>
    %533 = vector.extract_strided_slice %524 {offsets = [0, 0], sizes = [8, 96], strides = [1, 1]} : vector<8x128xf32> to vector<8x96xf32>
    %534 = arith.negf %533 : vector<8x96xf32>
    %535 = math.exp %534 : vector<8x96xf32>
    %cst_185 = arith.constant 1.000000e+00 : f32
    %536 = vector.broadcast %cst_185 : f32 to vector<8x96xf32>
    %537 = arith.addf %536, %535 : vector<8x96xf32>
    %538 = arith.divf %536, %537 : vector<8x96xf32>
    %539 = vector.extract_strided_slice %524 {offsets = [0, 96], sizes = [8, 32], strides = [1, 1]} : vector<8x128xf32> to vector<8x32xf32>
    %540 = math.tanh %539 : vector<8x32xf32>
    %541 = vector.extract_strided_slice %530 {offsets = [0, 32], sizes = [8, 32], strides = [1, 1]} : vector<8x96xf32> to vector<8x32xf32>
    %542 = arith.mulf %541, %505 : vector<8x32xf32>
    %543 = vector.extract_strided_slice %530 {offsets = [0, 0], sizes = [8, 32], strides = [1, 1]} : vector<8x96xf32> to vector<8x32xf32>
    %544 = arith.mulf %543, %532 : vector<8x32xf32>
    %545 = arith.addf %542, %544 : vector<8x32xf32>
    %546 = vector.extract_strided_slice %530 {offsets = [0, 64], sizes = [8, 32], strides = [1, 1]} : vector<8x96xf32> to vector<8x32xf32>
    %547 = math.tanh %545 : vector<8x32xf32>
    %548 = arith.mulf %546, %547 : vector<8x32xf32>
    %549 = vector.extract_strided_slice %538 {offsets = [0, 32], sizes = [8, 32], strides = [1, 1]} : vector<8x96xf32> to vector<8x32xf32>
    %550 = arith.mulf %549, %513 : vector<8x32xf32>
    %551 = vector.extract_strided_slice %538 {offsets = [0, 0], sizes = [8, 32], strides = [1, 1]} : vector<8x96xf32> to vector<8x32xf32>
    %552 = arith.mulf %551, %540 : vector<8x32xf32>
    %553 = arith.addf %550, %552 : vector<8x32xf32>
    %554 = vector.extract_strided_slice %538 {offsets = [0, 64], sizes = [8, 32], strides = [1, 1]} : vector<8x96xf32> to vector<8x32xf32>
    %555 = math.tanh %553 : vector<8x32xf32>
    %556 = arith.mulf %554, %555 : vector<8x32xf32>
    %c32_186 = arith.constant 32 : index
    %c0_187 = arith.constant 0 : index
    %557 = vector.load %arg9[%c32_186, %c0_187] : memref<64x64xf32, #tpu.memory_space<vmem>>, vector<8x32xf32>
    tpu.vector_store %arg9[%c32_186, %c0_187], %548 {strides = array<i32>} : memref<64x64xf32, #tpu.memory_space<vmem>>, vector<8x32xf32>,
    %c24_188 = arith.constant 24 : index
    %c32_189 = arith.constant 32 : index
    %558 = vector.load %arg9[%c24_188, %c32_189] : memref<64x64xf32, #tpu.memory_space<vmem>>, vector<8x32xf32>
    tpu.vector_store %arg9[%c24_188, %c32_189], %556 {strides = array<i32>} : memref<64x64xf32, #tpu.memory_space<vmem>>, vector<8x32xf32>,
    %cst_190 = arith.constant dense<0.000000e+00> : vector<8x128xf32>
    %559 = tpu.matmul %548, %355, %cst_190 {dimension_numbers = #tpu.dot_dimension_numbers<[1], [0], [0], [1], [0, 0, 1, 1], [], []>} : vector<8x32xf32>, vector<32x128xf32>, vector<8x128xf32> -> vector<8x128xf32>
    %c40_191 = arith.constant 40 : index
    %c0_192 = arith.constant 0 : index
    %560 = vector.load %arg10[%c40_191, %c0_192] : memref<64x256xf32, #tpu.memory_space<vmem>>, vector<8x128xf32>
    %561 = arith.addf %559, %560 : vector<8x128xf32>
    %cst_193 = arith.constant dense<0.000000e+00> : vector<8x128xf32>
    %562 = tpu.matmul %556, %357, %cst_193 {dimension_numbers = #tpu.dot_dimension_numbers<[1], [0], [0], [1], [0, 0, 1, 1], [], []>} : vector<8x32xf32>, vector<32x128xf32>, vector<8x128xf32> -> vector<8x128xf32>
    %c16_194 = arith.constant 16 : index
    %c128_195 = arith.constant 128 : index
    %563 = vector.load %arg10[%c16_194, %c128_195] : memref<64x256xf32, #tpu.memory_space<vmem>>, vector<8x128xf32>
    %564 = arith.addf %562, %563 : vector<8x128xf32>
    %565 = vector.extract_strided_slice %561 {offsets = [0, 0], sizes = [8, 96], strides = [1, 1]} : vector<8x128xf32> to vector<8x96xf32>
    %566 = arith.negf %565 : vector<8x96xf32>
    %567 = math.exp %566 : vector<8x96xf32>
    %cst_196 = arith.constant 1.000000e+00 : f32
    %568 = vector.broadcast %cst_196 : f32 to vector<8x96xf32>
    %569 = arith.addf %568, %567 : vector<8x96xf32>
    %570 = arith.divf %568, %569 : vector<8x96xf32>
    %571 = vector.extract_strided_slice %561 {offsets = [0, 96], sizes = [8, 32], strides = [1, 1]} : vector<8x128xf32> to vector<8x32xf32>
    %572 = math.tanh %571 : vector<8x32xf32>
    %573 = vector.extract_strided_slice %564 {offsets = [0, 0], sizes = [8, 96], strides = [1, 1]} : vector<8x128xf32> to vector<8x96xf32>
    %574 = arith.negf %573 : vector<8x96xf32>
    %575 = math.exp %574 : vector<8x96xf32>
    %cst_197 = arith.constant 1.000000e+00 : f32
    %576 = vector.broadcast %cst_197 : f32 to vector<8x96xf32>
    %577 = arith.addf %576, %575 : vector<8x96xf32>
    %578 = arith.divf %576, %577 : vector<8x96xf32>
    %579 = vector.extract_strided_slice %564 {offsets = [0, 96], sizes = [8, 32], strides = [1, 1]} : vector<8x128xf32> to vector<8x32xf32>
    %580 = math.tanh %579 : vector<8x32xf32>
    %581 = vector.extract_strided_slice %570 {offsets = [0, 32], sizes = [8, 32], strides = [1, 1]} : vector<8x96xf32> to vector<8x32xf32>
    %582 = arith.mulf %581, %545 : vector<8x32xf32>
    %583 = vector.extract_strided_slice %570 {offsets = [0, 0], sizes = [8, 32], strides = [1, 1]} : vector<8x96xf32> to vector<8x32xf32>
    %584 = arith.mulf %583, %572 : vector<8x32xf32>
    %585 = arith.addf %582, %584 : vector<8x32xf32>
    %586 = vector.extract_strided_slice %570 {offsets = [0, 64], sizes = [8, 32], strides = [1, 1]} : vector<8x96xf32> to vector<8x32xf32>
    %587 = math.tanh %585 : vector<8x32xf32>
    %588 = arith.mulf %586, %587 : vector<8x32xf32>
    %589 = vector.extract_strided_slice %578 {offsets = [0, 32], sizes = [8, 32], strides = [1, 1]} : vector<8x96xf32> to vector<8x32xf32>
    %590 = arith.mulf %589, %553 : vector<8x32xf32>
    %591 = vector.extract_strided_slice %578 {offsets = [0, 0], sizes = [8, 32], strides = [1, 1]} : vector<8x96xf32> to vector<8x32xf32>
    %592 = arith.mulf %591, %580 : vector<8x32xf32>
    %593 = arith.addf %590, %592 : vector<8x32xf32>
    %594 = vector.extract_strided_slice %578 {offsets = [0, 64], sizes = [8, 32], strides = [1, 1]} : vector<8x96xf32> to vector<8x32xf32>
    %595 = math.tanh %593 : vector<8x32xf32>
    %596 = arith.mulf %594, %595 : vector<8x32xf32>
    %c40_198 = arith.constant 40 : index
    %c0_199 = arith.constant 0 : index
    %597 = vector.load %arg9[%c40_198, %c0_199] : memref<64x64xf32, #tpu.memory_space<vmem>>, vector<8x32xf32>
    tpu.vector_store %arg9[%c40_198, %c0_199], %588 {strides = array<i32>} : memref<64x64xf32, #tpu.memory_space<vmem>>, vector<8x32xf32>,
    %c16_200 = arith.constant 16 : index
    %c32_201 = arith.constant 32 : index
    %598 = vector.load %arg9[%c16_200, %c32_201] : memref<64x64xf32, #tpu.memory_space<vmem>>, vector<8x32xf32>
    tpu.vector_store %arg9[%c16_200, %c32_201], %596 {strides = array<i32>} : memref<64x64xf32, #tpu.memory_space<vmem>>, vector<8x32xf32>,
    %cst_202 = arith.constant dense<0.000000e+00> : vector<8x128xf32>
    %599 = tpu.matmul %588, %355, %cst_202 {dimension_numbers = #tpu.dot_dimension_numbers<[1], [0], [0], [1], [0, 0, 1, 1], [], []>} : vector<8x32xf32>, vector<32x128xf32>, vector<8x128xf32> -> vector<8x128xf32>
    %c48_203 = arith.constant 48 : index
    %c0_204 = arith.constant 0 : index
    %600 = vector.load %arg10[%c48_203, %c0_204] : memref<64x256xf32, #tpu.memory_space<vmem>>, vector<8x128xf32>
    %601 = arith.addf %599, %600 : vector<8x128xf32>
    %cst_205 = arith.constant dense<0.000000e+00> : vector<8x128xf32>
    %602 = tpu.matmul %596, %357, %cst_205 {dimension_numbers = #tpu.dot_dimension_numbers<[1], [0], [0], [1], [0, 0, 1, 1], [], []>} : vector<8x32xf32>, vector<32x128xf32>, vector<8x128xf32> -> vector<8x128xf32>
    %c8_206 = arith.constant 8 : index
    %c128_207 = arith.constant 128 : index
    %603 = vector.load %arg10[%c8_206, %c128_207] : memref<64x256xf32, #tpu.memory_space<vmem>>, vector<8x128xf32>
    %604 = arith.addf %602, %603 : vector<8x128xf32>
    %605 = vector.extract_strided_slice %601 {offsets = [0, 0], sizes = [8, 96], strides = [1, 1]} : vector<8x128xf32> to vector<8x96xf32>
    %606 = arith.negf %605 : vector<8x96xf32>
    %607 = math.exp %606 : vector<8x96xf32>
    %cst_208 = arith.constant 1.000000e+00 : f32
    %608 = vector.broadcast %cst_208 : f32 to vector<8x96xf32>
    %609 = arith.addf %608, %607 : vector<8x96xf32>
    %610 = arith.divf %608, %609 : vector<8x96xf32>
    %611 = vector.extract_strided_slice %601 {offsets = [0, 96], sizes = [8, 32], strides = [1, 1]} : vector<8x128xf32> to vector<8x32xf32>
    %612 = math.tanh %611 : vector<8x32xf32>
    %613 = vector.extract_strided_slice %604 {offsets = [0, 0], sizes = [8, 96], strides = [1, 1]} : vector<8x128xf32> to vector<8x96xf32>
    %614 = arith.negf %613 : vector<8x96xf32>
    %615 = math.exp %614 : vector<8x96xf32>
    %cst_209 = arith.constant 1.000000e+00 : f32
    %616 = vector.broadcast %cst_209 : f32 to vector<8x96xf32>
    %617 = arith.addf %616, %615 : vector<8x96xf32>
    %618 = arith.divf %616, %617 : vector<8x96xf32>
    %619 = vector.extract_strided_slice %604 {offsets = [0, 96], sizes = [8, 32], strides = [1, 1]} : vector<8x128xf32> to vector<8x32xf32>
    %620 = math.tanh %619 : vector<8x32xf32>
    %621 = vector.extract_strided_slice %610 {offsets = [0, 32], sizes = [8, 32], strides = [1, 1]} : vector<8x96xf32> to vector<8x32xf32>
    %622 = arith.mulf %621, %585 : vector<8x32xf32>
    %623 = vector.extract_strided_slice %610 {offsets = [0, 0], sizes = [8, 32], strides = [1, 1]} : vector<8x96xf32> to vector<8x32xf32>
    %624 = arith.mulf %623, %612 : vector<8x32xf32>
    %625 = arith.addf %622, %624 : vector<8x32xf32>
    %626 = vector.extract_strided_slice %610 {offsets = [0, 64], sizes = [8, 32], strides = [1, 1]} : vector<8x96xf32> to vector<8x32xf32>
    %627 = math.tanh %625 : vector<8x32xf32>
    %628 = arith.mulf %626, %627 : vector<8x32xf32>
    %629 = vector.extract_strided_slice %618 {offsets = [0, 32], sizes = [8, 32], strides = [1, 1]} : vector<8x96xf32> to vector<8x32xf32>
    %630 = arith.mulf %629, %593 : vector<8x32xf32>
    %631 = vector.extract_strided_slice %618 {offsets = [0, 0], sizes = [8, 32], strides = [1, 1]} : vector<8x96xf32> to vector<8x32xf32>
    %632 = arith.mulf %631, %620 : vector<8x32xf32>
    %633 = arith.addf %630, %632 : vector<8x32xf32>
    %634 = vector.extract_strided_slice %618 {offsets = [0, 64], sizes = [8, 32], strides = [1, 1]} : vector<8x96xf32> to vector<8x32xf32>
    %635 = math.tanh %633 : vector<8x32xf32>
    %636 = arith.mulf %634, %635 : vector<8x32xf32>
    %c48_210 = arith.constant 48 : index
    %c0_211 = arith.constant 0 : index
    %637 = vector.load %arg9[%c48_210, %c0_211] : memref<64x64xf32, #tpu.memory_space<vmem>>, vector<8x32xf32>
    tpu.vector_store %arg9[%c48_210, %c0_211], %628 {strides = array<i32>} : memref<64x64xf32, #tpu.memory_space<vmem>>, vector<8x32xf32>,
    %c8_212 = arith.constant 8 : index
    %c32_213 = arith.constant 32 : index
    %638 = vector.load %arg9[%c8_212, %c32_213] : memref<64x64xf32, #tpu.memory_space<vmem>>, vector<8x32xf32>
    tpu.vector_store %arg9[%c8_212, %c32_213], %636 {strides = array<i32>} : memref<64x64xf32, #tpu.memory_space<vmem>>, vector<8x32xf32>,
    %cst_214 = arith.constant dense<0.000000e+00> : vector<8x128xf32>
    %639 = tpu.matmul %628, %355, %cst_214 {dimension_numbers = #tpu.dot_dimension_numbers<[1], [0], [0], [1], [0, 0, 1, 1], [], []>} : vector<8x32xf32>, vector<32x128xf32>, vector<8x128xf32> -> vector<8x128xf32>
    %c56_215 = arith.constant 56 : index
    %c0_216 = arith.constant 0 : index
    %640 = vector.load %arg10[%c56_215, %c0_216] : memref<64x256xf32, #tpu.memory_space<vmem>>, vector<8x128xf32>
    %641 = arith.addf %639, %640 : vector<8x128xf32>
    %cst_217 = arith.constant dense<0.000000e+00> : vector<8x128xf32>
    %642 = tpu.matmul %636, %357, %cst_217 {dimension_numbers = #tpu.dot_dimension_numbers<[1], [0], [0], [1], [0, 0, 1, 1], [], []>} : vector<8x32xf32>, vector<32x128xf32>, vector<8x128xf32> -> vector<8x128xf32>
    %c0_218 = arith.constant 0 : index
    %c128_219 = arith.constant 128 : index
    %643 = vector.load %arg10[%c0_218, %c128_219] : memref<64x256xf32, #tpu.memory_space<vmem>>, vector<8x128xf32>
    %644 = arith.addf %642, %643 : vector<8x128xf32>
    %645 = vector.extract_strided_slice %641 {offsets = [0, 0], sizes = [8, 96], strides = [1, 1]} : vector<8x128xf32> to vector<8x96xf32>
    %646 = arith.negf %645 : vector<8x96xf32>
    %647 = math.exp %646 : vector<8x96xf32>
    %cst_220 = arith.constant 1.000000e+00 : f32
    %648 = vector.broadcast %cst_220 : f32 to vector<8x96xf32>
    %649 = arith.addf %648, %647 : vector<8x96xf32>
    %650 = arith.divf %648, %649 : vector<8x96xf32>
    %651 = vector.extract_strided_slice %641 {offsets = [0, 96], sizes = [8, 32], strides = [1, 1]} : vector<8x128xf32> to vector<8x32xf32>
    %652 = math.tanh %651 : vector<8x32xf32>
    %653 = vector.extract_strided_slice %644 {offsets = [0, 0], sizes = [8, 96], strides = [1, 1]} : vector<8x128xf32> to vector<8x96xf32>
    %654 = arith.negf %653 : vector<8x96xf32>
    %655 = math.exp %654 : vector<8x96xf32>
    %cst_221 = arith.constant 1.000000e+00 : f32
    %656 = vector.broadcast %cst_221 : f32 to vector<8x96xf32>
    %657 = arith.addf %656, %655 : vector<8x96xf32>
    %658 = arith.divf %656, %657 : vector<8x96xf32>
    %659 = vector.extract_strided_slice %644 {offsets = [0, 96], sizes = [8, 32], strides = [1, 1]} : vector<8x128xf32> to vector<8x32xf32>
    %660 = math.tanh %659 : vector<8x32xf32>
    %661 = vector.extract_strided_slice %650 {offsets = [0, 32], sizes = [8, 32], strides = [1, 1]} : vector<8x96xf32> to vector<8x32xf32>
    %662 = arith.mulf %661, %625 : vector<8x32xf32>
    %663 = vector.extract_strided_slice %650 {offsets = [0, 0], sizes = [8, 32], strides = [1, 1]} : vector<8x96xf32> to vector<8x32xf32>
    %664 = arith.mulf %663, %652 : vector<8x32xf32>
    %665 = arith.addf %662, %664 : vector<8x32xf32>
    %666 = vector.extract_strided_slice %650 {offsets = [0, 64], sizes = [8, 32], strides = [1, 1]} : vector<8x96xf32> to vector<8x32xf32>
    %667 = math.tanh %665 : vector<8x32xf32>
    %668 = arith.mulf %666, %667 : vector<8x32xf32>
    %669 = vector.extract_strided_slice %658 {offsets = [0, 32], sizes = [8, 32], strides = [1, 1]} : vector<8x96xf32> to vector<8x32xf32>
    %670 = arith.mulf %669, %633 : vector<8x32xf32>
    %671 = vector.extract_strided_slice %658 {offsets = [0, 0], sizes = [8, 32], strides = [1, 1]} : vector<8x96xf32> to vector<8x32xf32>
    %672 = arith.mulf %671, %660 : vector<8x32xf32>
    %673 = arith.addf %670, %672 : vector<8x32xf32>
    %674 = vector.extract_strided_slice %658 {offsets = [0, 64], sizes = [8, 32], strides = [1, 1]} : vector<8x96xf32> to vector<8x32xf32>
    %675 = math.tanh %673 : vector<8x32xf32>
    %676 = arith.mulf %674, %675 : vector<8x32xf32>
    %c56_222 = arith.constant 56 : index
    %c0_223 = arith.constant 0 : index
    %677 = vector.load %arg9[%c56_222, %c0_223] : memref<64x64xf32, #tpu.memory_space<vmem>>, vector<8x32xf32>
    tpu.vector_store %arg9[%c56_222, %c0_223], %668 {strides = array<i32>} : memref<64x64xf32, #tpu.memory_space<vmem>>, vector<8x32xf32>,
    %c0_224 = arith.constant 0 : index
    %c32_225 = arith.constant 32 : index
    %678 = vector.load %arg9[%c0_224, %c32_225] : memref<64x64xf32, #tpu.memory_space<vmem>>, vector<8x32xf32>
    tpu.vector_store %arg9[%c0_224, %c32_225], %676 {strides = array<i32>} : memref<64x64xf32, #tpu.memory_space<vmem>>, vector<8x32xf32>,
    %c2_226 = arith.constant 2 : index
    %c0_227 = arith.constant 0 : index
    %c0_228 = arith.constant 0 : index
    %679 = vector.load %arg7[%c2_226, %c0_227, %c0_228] : memref<4x8x32xf32, #tpu.memory_space<vmem>>, vector<1x8x32xf32>
    %680 = vector.shape_cast %679 : vector<1x8x32xf32> to vector<8x32xf32>
    %681 = vector.shape_cast %668 : vector<8x32xf32> to vector<1x8x32xf32>
    tpu.vector_store %arg7[%c2_226, %c0_227, %c0_228], %681 {strides = array<i32>} : memref<4x8x32xf32, #tpu.memory_space<vmem>>, vector<1x8x32xf32>,
    %c3_229 = arith.constant 3 : index
    %c0_230 = arith.constant 0 : index
    %c0_231 = arith.constant 0 : index
    %682 = vector.load %arg7[%c3_229, %c0_230, %c0_231] : memref<4x8x32xf32, #tpu.memory_space<vmem>>, vector<1x8x32xf32>
    %683 = vector.shape_cast %682 : vector<1x8x32xf32> to vector<8x32xf32>
    %684 = vector.shape_cast %676 : vector<8x32xf32> to vector<1x8x32xf32>
    tpu.vector_store %arg7[%c3_229, %c0_230, %c0_231], %684 {strides = array<i32>} : memref<4x8x32xf32, #tpu.memory_space<vmem>>, vector<1x8x32xf32>,
    %c2_232 = arith.constant 2 : index
    %c0_233 = arith.constant 0 : index
    %c0_234 = arith.constant 0 : index
    %685 = vector.load %arg8[%c2_232, %c0_233, %c0_234] : memref<4x8x32xf32, #tpu.memory_space<vmem>>, vector<1x8x32xf32>
    %686 = vector.shape_cast %685 : vector<1x8x32xf32> to vector<8x32xf32>
    %687 = vector.shape_cast %665 : vector<8x32xf32> to vector<1x8x32xf32>
    tpu.vector_store %arg8[%c2_232, %c0_233, %c0_234], %687 {strides = array<i32>} : memref<4x8x32xf32, #tpu.memory_space<vmem>>, vector<1x8x32xf32>,
    %c3_235 = arith.constant 3 : index
    %c0_236 = arith.constant 0 : index
    %c0_237 = arith.constant 0 : index
    %688 = vector.load %arg8[%c3_235, %c0_236, %c0_237] : memref<4x8x32xf32, #tpu.memory_space<vmem>>, vector<1x8x32xf32>
    %689 = vector.shape_cast %688 : vector<1x8x32xf32> to vector<8x32xf32>
    %690 = vector.shape_cast %673 : vector<8x32xf32> to vector<1x8x32xf32>
    tpu.vector_store %arg8[%c3_235, %c0_236, %c0_237], %690 {strides = array<i32>} : memref<4x8x32xf32, #tpu.memory_space<vmem>>, vector<1x8x32xf32>,
    %c0_238 = arith.constant 0 : index
    %c0_239 = arith.constant 0 : index
    %691 = vector.load %arg9[%c0_238, %c0_239] : memref<64x64xf32, #tpu.memory_space<vmem>>, vector<64x32xf32>
    %c0_240 = arith.constant 0 : index
    %c32_241 = arith.constant 32 : index
    %692 = vector.load %arg9[%c0_240, %c32_241] : memref<64x64xf32, #tpu.memory_space<vmem>>, vector<64x32xf32>
    %693 = arith.addf %691, %692 : vector<64x32xf32>
    %c0_242 = arith.constant 0 : index
    %c0_243 = arith.constant 0 : index
    %694 = vector.load %arg1[%c0_242, %c0_243] : memref<64x32xf32, #tpu.memory_space<vmem>>, vector<64x32xf32>
    %695 = arith.addf %693, %694 : vector<64x32xf32>
    %c0_244 = arith.constant 0 : index
    %c0_245 = arith.constant 0 : index
    %696 = vector.load %arg6[%c0_244, %c0_245] : memref<64x32xf32, #tpu.memory_space<vmem>>, vector<64x32xf32>
    tpu.vector_store %arg6[%c0_244, %c0_245], %695 {strides = array<i32>} : memref<64x32xf32, #tpu.memory_space<vmem>>, vector<64x32xf32>,
    return
  }
  func.func @transform_0(%arg0: i32) -> (i32, i32) {
    %c0_i32 = arith.constant 0 : i32
    %c0_i32_0 = arith.constant 0 : i32
    %c0_i32_1 = arith.constant 0 : i32
    return %c0_i32, %c0_i32_0 : i32, i32
  }
  func.func @transform_1(%arg0: i32) -> (i32, i32) {
    %c0_i32 = arith.constant 0 : i32
    %c0_i32_0 = arith.constant 0 : i32
    %c0_i32_1 = arith.constant 0 : i32
    return %c0_i32, %c0_i32_0 : i32, i32
  }
  func.func @transform_2(%arg0: i32) -> (i32, i32, i32) {
    %c0_i32 = arith.constant 0 : i32
    %c0_i32_0 = arith.constant 0 : i32
    %c0_i32_1 = arith.constant 0 : i32
    %c0_i32_2 = arith.constant 0 : i32
    return %c0_i32, %c0_i32_0, %c0_i32_1 : i32, i32, i32
  }
  func.func @transform_3(%arg0: i32) -> (i32, i32, i32) {
    %c0_i32 = arith.constant 0 : i32
    %c0_i32_0 = arith.constant 0 : i32
    %c0_i32_1 = arith.constant 0 : i32
    %c0_i32_2 = arith.constant 0 : i32
    return %c0_i32, %c0_i32_0, %c0_i32_1 : i32, i32, i32
  }
  func.func @transform_4(%arg0: i32) -> (i32, i32, i32) {
    %c0_i32 = arith.constant 0 : i32
    %c0_i32_0 = arith.constant 0 : i32
    %c0_i32_1 = arith.constant 0 : i32
    %c0_i32_2 = arith.constant 0 : i32
    return %c0_i32, %c0_i32_0, %c0_i32_1 : i32, i32, i32
  }
  func.func @transform_5(%arg0: i32) -> (i32, i32) {
    %c0_i32 = arith.constant 0 : i32
    %c0_i32_0 = arith.constant 0 : i32
    %c0_i32_1 = arith.constant 0 : i32
    return %c0_i32, %c0_i32_0 : i32, i32
  }
  func.func @transform_6(%arg0: i32) -> (i32, i32, i32) {
    %c0_i32 = arith.constant 0 : i32
    %c0_i32_0 = arith.constant 0 : i32
    %c0_i32_1 = arith.constant 0 : i32
    %c0_i32_2 = arith.constant 0 : i32
    return %c0_i32, %c0_i32_0, %c0_i32_1 : i32, i32, i32
  }
  func.func @transform_7(%arg0: i32) -> (i32, i32, i32) {
    %c0_i32 = arith.constant 0 : i32
    %c0_i32_0 = arith.constant 0 : i32
    %c0_i32_1 = arith.constant 0 : i32
    %c0_i32_2 = arith.constant 0 : i32
    return %c0_i32, %c0_i32_0, %c0_i32_1 : i32, i32, i32
  }
}

</mosaic_0001>

<llo_original>
// kernel: bidirectional_lstm_forward.1
$region0: #{bidirectional_lstm_forward.1}
  #allocation0 [shape = 'u32[]', space=smem, size = 0x4, offset = 0x4, fixed_abs, tag = 'smem constant byte address 0x4 - core index']
  #allocation1 [shape = 'u32[144,128]{1,0:T(1,128)}', space=vmem, size = 0x12000, scoped, tag = 'internal scratch']
  #allocation2 [shape = 'f32[64,64]{1,0:T(8,128)}', space=vmem, size = 0x8000, scoped, tag = 'scratch operand']
  #allocation3 [shape = 'f32[64,256]{1,0:T(8,128)}', space=vmem, size = 0x10000, scoped, tag = 'scratch operand']
  %s0 = inlined_call_operand.vmem [shape: f32[64,32], index: 0, kind: input, shape index: {}]
  %s1 = inlined_call_operand.vmem [shape: f32[32,256], index: 1, kind: input, shape index: {}]
  %s2 = inlined_call_operand.hbm [shape: f32[1,64,256], index: 2, kind: input, shape index: {}]
  %s3 = inlined_call_operand.hbm [shape: f32[4,32,128], index: 3, kind: input, shape index: {}]
  %s4 = inlined_call_operand.vmem [shape: f32[2,1,256], index: 4, kind: input, shape index: {}]
  %s5 = inlined_call_operand.vmem [shape: f32[64,32], index: 5, kind: output, shape index: {0}]
  %s6 = inlined_call_operand.vmem [shape: f32[4,8,32], index: 6, kind: output, shape index: {1}]
  %s7 = inlined_call_operand.vmem [shape: f32[4,8,32], index: 7, kind: output, shape index: {2}]
  %8 = xla_tuple %s5, %s6, %s7
  %s9 = sld [smem:[#allocation0]]
  $region54: #{bidirectional_lstm_forward.1} parent=0
    _
  %s11 = ssub.s32 1, %s9
  %s12 = scalar_select 0, %s11, %s9
  $region1: #{bidirectional_lstm_forward.1} parent=0
    #allocation4 [shape = 'u8[65536]{0}', space=vmem, size = 0x10000, scoped, tag = 'input window, operand 2, single buffered']
    #allocation5 [shape = 's32[1]{0}', space=sflag, size = 0x4, scoped, tag = 'scoped memory for bidirectional_lstm_forward.1']
    #allocation6 [shape = 'u8[65536]{0}', space=vmem, size = 0x10000, scoped, tag = 'input window, operand 3, single buffered']
    #allocation7 [shape = 's32[1]{0}', space=sflag, size = 0x4, scoped, tag = 'scoped memory for bidirectional_lstm_forward.1']
    %13 = vsyncpa [#allocation5], 0
    %14 = vsyncpa [#allocation7], 0
    // Predicated region
    $region2: #{bidirectional_lstm_forward.1} parent=1 // pred_check
      _
    $region3: #{bidirectional_lstm_forward.1} parent=1 // pred_check_branch
      %16 = sbr.rel (0) target = $region5
    $region4: #{bidirectional_lstm_forward.1} parent=1 // pred_region
      _
    $region5: #{bidirectional_lstm_forward.1} parent=1 // pred_fallthru
      _
    // Predicated region
    $region6: #{bidirectional_lstm_forward.1} parent=1 // pred_check
      _
    $region7: #{bidirectional_lstm_forward.1} parent=1 // pred_check_branch
      %18 = sbr.rel (0) target = $region9
    $region8: #{bidirectional_lstm_forward.1} parent=1 // pred_region
      _
    $region9: #{bidirectional_lstm_forward.1} parent=1 // pred_fallthru
      _
    // Predicated region
    $region10: #{bidirectional_lstm_forward.1} parent=1 // pred_check
      _
    $region11: #{bidirectional_lstm_forward.1} parent=1 // pred_check_branch
      %20 = sbr.rel (0) target = $region13
    $region12: #{bidirectional_lstm_forward.1} parent=1 // pred_region
      %s22 = ssub.s32 2048, 2048
      %23 = vsyncadd [#allocation5], %s22
      %s24 = sshll.u32 [#allocation4], 4
      %s25 = int_to_ptr.vmem [resolvable:$true] %s24
      %30 = dma.hbm_to_vmem [thread:$0]  %s2, 2048, %s25, [#allocation5], 256, 256, 16
    $region13: #{bidirectional_lstm_forward.1} parent=1 // pred_fallthru
      _
    // Predicated region
    $region14: #{bidirectional_lstm_forward.1} parent=1 // pred_check
      _
    $region15: #{bidirectional_lstm_forward.1} parent=1 // pred_check_branch
      %32 = sbr.rel (0) target = $region17
    $region16: #{bidirectional_lstm_forward.1} parent=1 // pred_region
      %s34 = ssub.s32 2048, 2048
      %35 = vsyncadd [#allocation7], %s34
      %s36 = sshll.u32 [#allocation6], 4
      %s37 = int_to_ptr.vmem [resolvable:$true] %s36
      %42 = dma.hbm_to_vmem [thread:$0]  %s3, 2048, %s37, [#allocation7], 128, 128, 8
    $region17: #{bidirectional_lstm_forward.1} parent=1 // pred_fallthru
      _
    // Predicated region
    $region18: #{bidirectional_lstm_forward.1} parent=1 // pred_check
      _
    $region19: #{bidirectional_lstm_forward.1} parent=1 // pred_check_branch
      %44 = sbr.rel (0) target = $region21
    $region20: #{bidirectional_lstm_forward.1} parent=1 // pred_region
      _
    $region21: #{bidirectional_lstm_forward.1} parent=1 // pred_fallthru
      _
    // Predicated region
    $region22: #{bidirectional_lstm_forward.1} parent=1 // pred_check
      _
    $region23: #{bidirectional_lstm_forward.1} parent=1 // pred_check_branch
      %46 = sbr.rel (0) target = $region25
    $region24: #{bidirectional_lstm_forward.1} parent=1 // pred_region
      %47 = dma.done [#allocation5], 2048
    $region25: #{bidirectional_lstm_forward.1} parent=1 // pred_fallthru
      _
    // Predicated region
    $region26: #{bidirectional_lstm_forward.1} parent=1 // pred_check
      _
    $region27: #{bidirectional_lstm_forward.1} parent=1 // pred_check_branch
      %49 = sbr.rel (0) target = $region29
    $region28: #{bidirectional_lstm_forward.1} parent=1 // pred_region
      %50 = dma.done [#allocation7], 2048
    $region29: #{bidirectional_lstm_forward.1} parent=1 // pred_fallthru
      _
    %v51 = vld [vmem:[%s0] sm:$0xff]
    %v52 = vld [vmem:[%s0 + $0x8] sm:$0xff]
    %v53 = vld [vmem:[%s0 + $0x10] sm:$0xff]
    %v54 = vld [vmem:[%s0 + $0x18] sm:$0xff]
    %v55 = vld [vmem:[%s0 + $0x20] sm:$0xff]
    %v56 = vld [vmem:[%s0 + $0x28] sm:$0xff]
    %v57 = vld [vmem:[%s0 + $0x30] sm:$0xff]
    %v58 = vld [vmem:[%s0 + $0x38] sm:$0xff]
    %v59 = vld [vmem:[%s1] sm:$0xff]
    %v60 = vld [vmem:[%s1 + $0x8] sm:$0xff]
    %v61 = vld [vmem:[%s1 + $0x10] sm:$0xff]
    %v62 = vld [vmem:[%s1 + $0x18] sm:$0xff]
    %v63 = vld [vmem:[%s1 + $0x20] sm:$0xff]
    %v64 = vld [vmem:[%s1 + $0x28] sm:$0xff]
    %v65 = vld [vmem:[%s1 + $0x30] sm:$0xff]
    %v66 = vld [vmem:[%s1 + $0x38] sm:$0xff]
    %v67 = vld [vmem:[%s4] sm:$0x3]
    %v69 = vlaneseq
    %v70 = vshrl.u32 %v69, 7
    %v71 = vsub.s32 0, %v70
    %v72 = vrot.slane %v67, %v71
    %v73 = vlaneseq
    %v74 = vshrl.u32 %v73, 7
    %v75 = vsub.s32 1, %v74
    %v76 = vrot.slane %v67, %v75
    %vm79 = vcmask 261120
    %v81 = vsel %vm79, %v51, 0
    %v84 = vsel %vm79, %v52, 0
    %v87 = vsel %vm79, %v53, 0
    %v90 = vsel %vm79, %v54, 0
    %v93 = vsel %vm79, %v55, 0
    %v96 = vsel %vm79, %v56, 0
    %v99 = vsel %vm79, %v57, 0
    %v102 = vsel %vm79, %v58, 0
    %104 = vmatprep.subr.mxu0 %v60
    %105 = vmatpush1.msra.mxu0 %v59
    %106 = vmatprep.subr.mxu0 %v62
    %107 = vmatpush1.msra.mxu0 %v61
    %108 = vmatprep.subr.mxu0 %v64
    %109 = vmatpush1.msra.mxu0 %v63
    %110 = vmatprep.subr.mxu0 %v66
    %111 = vmatpush1.msra.mxu0 %v65
    %112 = vmatprep.subr.mxu0 0.0
    %113 = vmatpush1.msra.mxu0 0.0
    %114 = vmatprep.subr.mxu0 0.0
    %115 = vmatpush1.msra.mxu0 0.0
    %116 = vmatprep.subr.mxu0 0.0
    %117 = vmatpush1.msra.mxu0 0.0
    %118 = vmatprep.subr.mxu0 0.0
    %119 = vmatpush1.msra.mxu0 0.0
    %120 = vmatprep.subr.mxu0 0.0
    %121 = vmatpush1.msra.mxu0 0.0
    %122 = vmatprep.subr.mxu0 0.0
    %123 = vmatpush1.msra.mxu0 0.0
    %124 = vmatprep.subr.mxu0 0.0
    %125 = vmatpush1.msra.mxu0 0.0
    %126 = vmatprep.subr.mxu0 0.0
    %127 = vmatpush1.msra.mxu0 0.0
    %128 = vmatprep.subr.mxu0 0.0
    %129 = vmatpush1.msra.mxu0 0.0
    %130 = vmatprep.subr.mxu0 0.0
    %131 = vmatpush1.msra.mxu0 0.0
    %132 = vmatprep.subr.mxu0 0.0
    %133 = vmatpush1.msra.mxu0 0.0
    %134 = vmatprep.subr.mxu0 0.0
    %135 = vmatpush1.msra.mxu0 0.0
    %136 = vmatprep.subr.mxu0 0.0
    %137 = vmatpush1.msra.mxu0 0.0
    %138 = vmatprep.subr.mxu0 0.0
    %139 = vmatpush1.msra.mxu0 0.0
    %140 = vmatprep.subr.mxu0 0.0
    %141 = vmatpush1.msra.mxu0 0.0
    %142 = vmatprep.subr.mxu0 0.0
    %143 = vmatpush1.msra.mxu0 0.0
    %144 = vmatprep.subr.mxu0 0.0
    %145 = vmatpush1.msra.mxu0 0.0
    %146 = vmatprep.subr.mxu0 0.0
    %147 = vmatpush1.msra.mxu0 0.0
    %148 = vmatprep.subr.mxu0 0.0
    %149 = vmatpush1.msra.mxu0 0.0
    %150 = vmatprep.subr.mxu0 0.0
    %151 = vmatpush1.msra.mxu0 0.0
    %152 = vmatprep.subr.mxu0 0.0
    %153 = vmatpush1.msra.mxu0 0.0
    %154 = vmatprep.subr.mxu0 0.0
    %155 = vmatpush1.msra.mxu0 0.0
    %156 = vmatprep.subr.mxu0 0.0
    %157 = vmatpush1.msra.mxu0 0.0
    %158 = vmatprep.subr.mxu0 0.0
    %159 = vmatpush1.msra.mxu0 0.0
    %160 = vmatprep.subr.mxu0 0.0
    %161 = vmatpush1.msra.mxu0 0.0
    %162 = vmatprep.subr.mxu0 0.0
    %163 = vmatpush1.msra.mxu0 0.0
    %164 = vmatprep.subr.mxu0 0.0
    %165 = vmatpush1.msra.mxu0 0.0
    %166 = vmatprep.subr.mxu0 0.0
    %167 = vmatpush1.msra.mxu0 0.0
    %168 = vmatprep.mubr.f32.mxu0 0.0
    %169 = vmatmul.mubr.f32.gmra.mrb[0].mxu0 %v81
    %v170 = vpop.f32.mrb[0].mxu0
    %v171 = vadd.f32 %v72, %v170
    %v172 = vpop.f32.mrb[0].mxu0
    %v173 = vadd.f32 %v76, %v172
    %174 = vmatprep.mubr.f32.mxu0 0.0
    %175 = vmatmul.mubr.f32.gmra.mrb[0].mxu0 %v84
    %v176 = vpop.f32.mrb[0].mxu0
    %v177 = vadd.f32 %v72, %v176
    %v178 = vpop.f32.mrb[0].mxu0
    %v179 = vadd.f32 %v76, %v178
    %180 = vmatprep.mubr.f32.mxu0 0.0
    %181 = vmatmul.mubr.f32.gmra.mrb[0].mxu0 %v87
    %v182 = vpop.f32.mrb[0].mxu0
    %v183 = vadd.f32 %v72, %v182
    %v184 = vpop.f32.mrb[0].mxu0
    %v185 = vadd.f32 %v76, %v184
    %186 = vmatprep.mubr.f32.mxu0 0.0
    %187 = vmatmul.mubr.f32.gmra.mrb[0].mxu0 %v90
    %v188 = vpop.f32.mrb[0].mxu0
    %v189 = vadd.f32 %v72, %v188
    %v190 = vpop.f32.mrb[0].mxu0
    %v191 = vadd.f32 %v76, %v190
    %192 = vmatprep.mubr.f32.mxu0 0.0
    %193 = vmatmul.mubr.f32.gmra.mrb[0].mxu0 %v93
    %v194 = vpop.f32.mrb[0].mxu0
    %v195 = vadd.f32 %v72, %v194
    %v196 = vpop.f32.mrb[0].mxu0
    %v197 = vadd.f32 %v76, %v196
    %198 = vmatprep.mubr.f32.mxu0 0.0
    %199 = vmatmul.mubr.f32.gmra.mrb[0].mxu0 %v96
    %v200 = vpop.f32.mrb[0].mxu0
    %v201 = vadd.f32 %v72, %v200
    %v202 = vpop.f32.mrb[0].mxu0
    %v203 = vadd.f32 %v76, %v202
    %204 = vmatprep.mubr.f32.mxu0 0.0
    %205 = vmatmul.mubr.f32.gmra.mrb[0].mxu0 %v99
    %v206 = vpop.f32.mrb[0].mxu0
    %v207 = vadd.f32 %v72, %v206
    %v208 = vpop.f32.mrb[0].mxu0
    %v209 = vadd.f32 %v76, %v208
    %210 = vmatprep.mubr.f32.mxu0 0.0
    %211 = vmatmul.mubr.f32.gmra.mrb[0].mxu0 %v102
    %v212 = vpop.f32.mrb[0].mxu0
    %v213 = vadd.f32 %v72, %v212
    %v214 = vpop.f32.mrb[0].mxu0
    %v215 = vadd.f32 %v76, %v214
    %216 = vdwg.mxu0
    %217 = vst [vmem:[#allocation3] sm:$0xff] %v171
    %218 = vst [vmem:[#allocation3 + $0x8] sm:$0xff] %v173
    %219 = vst [vmem:[#allocation3 + $0x10] sm:$0xff] %v177
    %220 = vst [vmem:[#allocation3 + $0x18] sm:$0xff] %v179
    %221 = vst [vmem:[#allocation3 + $0x20] sm:$0xff] %v183
    %222 = vst [vmem:[#allocation3 + $0x28] sm:$0xff] %v185
    %223 = vst [vmem:[#allocation3 + $0x30] sm:$0xff] %v189
    %224 = vst [vmem:[#allocation3 + $0x38] sm:$0xff] %v191
    %225 = vst [vmem:[#allocation3 + $0x40] sm:$0xff] %v195
    %226 = vst [vmem:[#allocation3 + $0x48] sm:$0xff] %v197
    %227 = vst [vmem:[#allocation3 + $0x50] sm:$0xff] %v201
    %228 = vst [vmem:[#allocation3 + $0x58] sm:$0xff] %v203
    %229 = vst [vmem:[#allocation3 + $0x60] sm:$0xff] %v207
    %230 = vst [vmem:[#allocation3 + $0x68] sm:$0xff] %v209
    %231 = vst [vmem:[#allocation3 + $0x70] sm:$0xff] %v213
    %232 = vst [vmem:[#allocation3 + $0x78] sm:$0xff] %v215
    %v233 = vld [vmem:[#allocation6] sm:$0xff]
    %v234 = vld [vmem:[#allocation6 + $0x8] sm:$0xff]
    %v235 = vld [vmem:[#allocation6 + $0x10] sm:$0xff]
    %v236 = vld [vmem:[#allocation6 + $0x18] sm:$0xff]
    %s237 = scalar_lea.vmem [#allocation6], 32
    %v238 = vld [vmem:[%s237] sm:$0xff]
    %v239 = vld [vmem:[%s237 + $0x8] sm:$0xff]
    %v240 = vld [vmem:[%s237 + $0x10] sm:$0xff]
    %v241 = vld [vmem:[%s237 + $0x18] sm:$0xff]
    %v242 = vld [vmem:[#allocation3] sm:$0xff]
    %v244 = vsel %vm79, 0.0, 0
    %246 = vmatprep.subr.mxu0 0.0
    %247 = vmatpush1.msra.mxu0 %v233
    %248 = vmatprep.subr.mxu0 0.0
    %249 = vmatpush1.msra.mxu0 %v234
    %250 = vmatprep.subr.mxu0 0.0
    %251 = vmatpush1.msra.mxu0 %v235
    %252 = vmatprep.subr.mxu0 0.0
    %253 = vmatpush1.msra.mxu0 %v236
    %254 = vmatprep.subr.mxu0 0.0
    %255 = vmatpush1.msra.mxu0 0.0
    %256 = vmatprep.subr.mxu0 0.0
    %257 = vmatpush1.msra.mxu0 0.0
    %258 = vmatprep.subr.mxu0 0.0
    %259 = vmatpush1.msra.mxu0 0.0
    %260 = vmatprep.subr.mxu0 0.0
    %261 = vmatpush1.msra.mxu0 0.0
    %262 = vmatprep.subr.mxu0 0.0
    %263 = vmatpush1.msra.mxu0 0.0
    %264 = vmatprep.subr.mxu0 0.0
    %265 = vmatpush1.msra.mxu0 0.0
    %266 = vmatprep.subr.mxu0 0.0
    %267 = vmatpush1.msra.mxu0 0.0
    %268 = vmatprep.subr.mxu0 0.0
    %269 = vmatpush1.msra.mxu0 0.0
    %270 = vmatprep.subr.mxu0 0.0
    %271 = vmatpush1.msra.mxu0 0.0
    %272 = vmatprep.subr.mxu0 0.0
    %273 = vmatpush1.msra.mxu0 0.0
    %274 = vmatprep.subr.mxu0 0.0
    %275 = vmatpush1.msra.mxu0 0.0
    %276 = vmatprep.subr.mxu0 0.0
    %277 = vmatpush1.msra.mxu0 0.0
    %278 = vmatprep.subr.mxu0 0.0
    %279 = vmatpush1.msra.mxu0 0.0
    %280 = vmatprep.subr.mxu0 0.0
    %281 = vmatpush1.msra.mxu0 0.0
    %282 = vmatprep.subr.mxu0 0.0
    %283 = vmatpush1.msra.mxu0 0.0
    %284 = vmatprep.subr.mxu0 0.0
    %285 = vmatpush1.msra.mxu0 0.0
    %286 = vmatprep.subr.mxu0 0.0
    %287 = vmatpush1.msra.mxu0 0.0
    %288 = vmatprep.subr.mxu0 0.0
    %289 = vmatpush1.msra.mxu0 0.0
    %290 = vmatprep.subr.mxu0 0.0
    %291 = vmatpush1.msra.mxu0 0.0
    %292 = vmatprep.subr.mxu0 0.0
    %293 = vmatpush1.msra.mxu0 0.0
    %294 = vmatprep.subr.mxu0 0.0
    %295 = vmatpush1.msra.mxu0 0.0
    %296 = vmatprep.subr.mxu0 0.0
    %297 = vmatpush1.msra.mxu0 0.0
    %298 = vmatprep.subr.mxu0 0.0
    %299 = vmatpush1.msra.mxu0 0.0
    %300 = vmatprep.subr.mxu0 0.0
    %301 = vmatpush1.msra.mxu0 0.0
    %302 = vmatprep.subr.mxu0 0.0
    %303 = vmatpush1.msra.mxu0 0.0
    %304 = vmatprep.subr.mxu0 0.0
    %305 = vmatpush1.msra.mxu0 0.0
    %306 = vmatprep.subr.mxu0 0.0
    %307 = vmatpush1.msra.mxu0 0.0
    %308 = vmatprep.subr.mxu0 0.0
    %309 = vmatpush1.msra.mxu0 0.0
    %310 = vmatprep.mubr.f32.mxu0 0.0
    %311 = vmatmul.mubr.f32.gmra.mrb[0].mxu0 %v244
    %v312 = vpop.f32.mrb[0].mxu0
    %v313 = vadd.f32 %v242, %v312
    %v314 = vpop.f32.mrb[0].mxu0
    %315 = vdwg.mxu0
    %v316 = vld [vmem:[#allocation3 + $0x78] sm:$0xff]
    %317 = vmatprep.subr.mxu0 0.0
    %318 = vmatpush1.msra.mxu0 %v238
    %319 = vmatprep.subr.mxu0 0.0
    %320 = vmatpush1.msra.mxu0 %v239
    %321 = vmatprep.subr.mxu0 0.0
    %322 = vmatpush1.msra.mxu0 %v240
    %323 = vmatprep.subr.mxu0 0.0
    %324 = vmatpush1.msra.mxu0 %v241
    %325 = vmatprep.subr.mxu0 0.0
    %326 = vmatpush1.msra.mxu0 0.0
    %327 = vmatprep.subr.mxu0 0.0
    %328 = vmatpush1.msra.mxu0 0.0
    %329 = vmatprep.subr.mxu0 0.0
    %330 = vmatpush1.msra.mxu0 0.0
    %331 = vmatprep.subr.mxu0 0.0
    %332 = vmatpush1.msra.mxu0 0.0
    %333 = vmatprep.subr.mxu0 0.0
    %334 = vmatpush1.msra.mxu0 0.0
    %335 = vmatprep.subr.mxu0 0.0
    %336 = vmatpush1.msra.mxu0 0.0
    %337 = vmatprep.subr.mxu0 0.0
    %338 = vmatpush1.msra.mxu0 0.0
    %339 = vmatprep.subr.mxu0 0.0
    %340 = vmatpush1.msra.mxu0 0.0
    %341 = vmatprep.subr.mxu0 0.0
    %342 = vmatpush1.msra.mxu0 0.0
    %343 = vmatprep.subr.mxu0 0.0
    %344 = vmatpush1.msra.mxu0 0.0
    %345 = vmatprep.subr.mxu0 0.0
    %346 = vmatpush1.msra.mxu0 0.0
    %347 = vmatprep.subr.mxu0 0.0
    %348 = vmatpush1.msra.mxu0 0.0
    %349 = vmatprep.subr.mxu0 0.0
    %350 = vmatpush1.msra.mxu0 0.0
    %351 = vmatprep.subr.mxu0 0.0
    %352 = vmatpush1.msra.mxu0 0.0
    %353 = vmatprep.subr.mxu0 0.0
    %354 = vmatpush1.msra.mxu0 0.0
    %355 = vmatprep.subr.mxu0 0.0
    %356 = vmatpush1.msra.mxu0 0.0
    %357 = vmatprep.subr.mxu0 0.0
    %358 = vmatpush1.msra.mxu0 0.0
    %359 = vmatprep.subr.mxu0 0.0
    %360 = vmatpush1.msra.mxu0 0.0
    %361 = vmatprep.subr.mxu0 0.0
    %362 = vmatpush1.msra.mxu0 0.0
    %363 = vmatprep.subr.mxu0 0.0
    %364 = vmatpush1.msra.mxu0 0.0
    %365 = vmatprep.subr.mxu0 0.0
    %366 = vmatpush1.msra.mxu0 0.0
    %367 = vmatprep.subr.mxu0 0.0
    %368 = vmatpush1.msra.mxu0 0.0
    %369 = vmatprep.subr.mxu0 0.0
    %370 = vmatpush1.msra.mxu0 0.0
    %371 = vmatprep.subr.mxu0 0.0
    %372 = vmatpush1.msra.mxu0 0.0
    %373 = vmatprep.subr.mxu0 0.0
    %374 = vmatpush1.msra.mxu0 0.0
    %375 = vmatprep.subr.mxu0 0.0
    %376 = vmatpush1.msra.mxu0 0.0
    %377 = vmatprep.subr.mxu0 0.0
    %378 = vmatpush1.msra.mxu0 0.0
    %379 = vmatprep.subr.mxu0 0.0
    %380 = vmatpush1.msra.mxu0 0.0
    %381 = vmatprep.mubr.f32.mxu0 0.0
    %382 = vmatmul.mubr.f32.gmra.mrb[0].mxu0 %v244
    %v383 = vpop.f32.mrb[0].mxu0
    %v384 = vadd.f32 %v316, %v383
    %v385 = vpop.f32.mrb[0].mxu0
    %386 = vdwg.mxu0
    %v387 = vxor.u32 %v313, 2147483648
    %v388 = vmul.f32 %v387, 1.442695
    %v389 = vpow.pop %v388
    %v390 = vadd.f32 %v389, 1.0
    %v391 = vrcp.pop %v390
    %v392 = vmul.f32 1.0, %v391
    %v393 = vtanh.pop %v313
    %v394 = vxor.u32 %v384, 2147483648
    %v395 = vmul.f32 %v394, 1.442695
    %v396 = vpow.pop %v395
    %v397 = vadd.f32 %v396, 1.0
    %v398 = vrcp.pop %v397
    %v399 = vmul.f32 1.0, %v398
    %v400 = vtanh.pop %v384
    %v401 = vmul.f32 %v392, 0.0
    %403 = vrot.lane.b32.xlu0 %v393, 32
    %v404 = vpop.permute.xlu0 %403
    %v406 = vmul.f32 %v392, %v404
    %408 = vrot.lane.b32.xlu0 %v406, 32
    %v409 = vpop.permute.xlu0 %408
    %v411 = vadd.f32 %v401, %v409
    %v412 = vtanh.pop %v411
    %414 = vrot.lane.b32.xlu0 %v412, 32
    %v415 = vpop.permute.xlu0 %414
    %v417 = vmul.f32 %v392, %v415
    %v418 = vmul.f32 %v399, 0.0
    %420 = vrot.lane.b32.xlu0 %v400, 32
    %v421 = vpop.permute.xlu0 %420
    %v423 = vmul.f32 %v399, %v421
    %425 = vrot.lane.b32.xlu0 %v423, 32
    %v426 = vpop.permute.xlu0 %425
    %v428 = vadd.f32 %v418, %v426
    %v429 = vtanh.pop %v428
    %431 = vrot.lane.b32.xlu0 %v429, 32
    %v432 = vpop.permute.xlu0 %431
    %v434 = vmul.f32 %v399, %v432
    %436 = vrot.lane.b32.xlu0 %v417, 64
    %v437 = vpop.permute.xlu0 %436
    %439 = vst.msk [vmem:[#allocation2] sm:$0xff] %vm79, %v437
    %441 = vrot.lane.b32.xlu0 %v434, 96
    %v442 = vpop.permute.xlu0 %441
    %vm444 = vcmask 523520
    %445 = vst.msk [vmem:[#allocation2 + $0x38] sm:$0xff] %vm444, %v442
    %v446 = vld [vmem:[#allocation3 + $0x10] sm:$0xff]
    %v447 = vsel %vm79, %v437, 0
    %449 = vmatprep.subr.mxu0 0.0
    %450 = vmatpush1.msra.mxu0 %v233
    %451 = vmatprep.subr.mxu0 0.0
    %452 = vmatpush1.msra.mxu0 %v234
    %453 = vmatprep.subr.mxu0 0.0
    %454 = vmatpush1.msra.mxu0 %v235
    %455 = vmatprep.subr.mxu0 0.0
    %456 = vmatpush1.msra.mxu0 %v236
    %457 = vmatprep.subr.mxu0 0.0
    %458 = vmatpush1.msra.mxu0 0.0
    %459 = vmatprep.subr.mxu0 0.0
    %460 = vmatpush1.msra.mxu0 0.0
    %461 = vmatprep.subr.mxu0 0.0
    %462 = vmatpush1.msra.mxu0 0.0
    %463 = vmatprep.subr.mxu0 0.0
    %464 = vmatpush1.msra.mxu0 0.0
    %465 = vmatprep.subr.mxu0 0.0
    %466 = vmatpush1.msra.mxu0 0.0
    %467 = vmatprep.subr.mxu0 0.0
    %468 = vmatpush1.msra.mxu0 0.0
    %469 = vmatprep.subr.mxu0 0.0
    %470 = vmatpush1.msra.mxu0 0.0
    %471 = vmatprep.subr.mxu0 0.0
    %472 = vmatpush1.msra.mxu0 0.0
    %473 = vmatprep.subr.mxu0 0.0
    %474 = vmatpush1.msra.mxu0 0.0
    %475 = vmatprep.subr.mxu0 0.0
    %476 = vmatpush1.msra.mxu0 0.0
    %477 = vmatprep.subr.mxu0 0.0
    %478 = vmatpush1.msra.mxu0 0.0
    %479 = vmatprep.subr.mxu0 0.0
    %480 = vmatpush1.msra.mxu0 0.0
    %481 = vmatprep.subr.mxu0 0.0
    %482 = vmatpush1.msra.mxu0 0.0
    %483 = vmatprep.subr.mxu0 0.0
    %484 = vmatpush1.msra.mxu0 0.0
    %485 = vmatprep.subr.mxu0 0.0
    %486 = vmatpush1.msra.mxu0 0.0
    %487 = vmatprep.subr.mxu0 0.0
    %488 = vmatpush1.msra.mxu0 0.0
    %489 = vmatprep.subr.mxu0 0.0
    %490 = vmatpush1.msra.mxu0 0.0
    %491 = vmatprep.subr.mxu0 0.0
    %492 = vmatpush1.msra.mxu0 0.0
    %493 = vmatprep.subr.mxu0 0.0
    %494 = vmatpush1.msra.mxu0 0.0
    %495 = vmatprep.subr.mxu0 0.0
    %496 = vmatpush1.msra.mxu0 0.0
    %497 = vmatprep.subr.mxu0 0.0
    %498 = vmatpush1.msra.mxu0 0.0
    %499 = vmatprep.subr.mxu0 0.0
    %500 = vmatpush1.msra.mxu0 0.0
    %501 = vmatprep.subr.mxu0 0.0
    %502 = vmatpush1.msra.mxu0 0.0
    %503 = vmatprep.subr.mxu0 0.0
    %504 = vmatpush1.msra.mxu0 0.0
    %505 = vmatprep.subr.mxu0 0.0
    %506 = vmatpush1.msra.mxu0 0.0
    %507 = vmatprep.subr.mxu0 0.0
    %508 = vmatpush1.msra.mxu0 0.0
    %509 = vmatprep.subr.mxu0 0.0
    %510 = vmatpush1.msra.mxu0 0.0
    %511 = vmatprep.subr.mxu0 0.0
    %512 = vmatpush1.msra.mxu0 0.0
    %513 = vmatprep.mubr.f32.mxu0 0.0
    %514 = vmatmul.mubr.f32.gmra.mrb[0].mxu0 %v447
    %v515 = vpop.f32.mrb[0].mxu0
    %v516 = vadd.f32 %v446, %v515
    %v517 = vpop.f32.mrb[0].mxu0
    %518 = vdwg.mxu0
    %v519 = vld [vmem:[#allocation3 + $0x68] sm:$0xff]
    %520 = vrot.lane.b32.xlu0 %v434, 64
    %v521 = vpop.permute.xlu0 %520
    %v522 = vsel %vm79, %v521, 0
    %524 = vmatprep.subr.mxu0 0.0
    %525 = vmatpush1.msra.mxu0 %v238
    %526 = vmatprep.subr.mxu0 0.0
    %527 = vmatpush1.msra.mxu0 %v239
    %528 = vmatprep.subr.mxu0 0.0
    %529 = vmatpush1.msra.mxu0 %v240
    %530 = vmatprep.subr.mxu0 0.0
    %531 = vmatpush1.msra.mxu0 %v241
    %532 = vmatprep.subr.mxu0 0.0
    %533 = vmatpush1.msra.mxu0 0.0
    %534 = vmatprep.subr.mxu0 0.0
    %535 = vmatpush1.msra.mxu0 0.0
    %536 = vmatprep.subr.mxu0 0.0
    %537 = vmatpush1.msra.mxu0 0.0
    %538 = vmatprep.subr.mxu0 0.0
    %539 = vmatpush1.msra.mxu0 0.0
    %540 = vmatprep.subr.mxu0 0.0
    %541 = vmatpush1.msra.mxu0 0.0
    %542 = vmatprep.subr.mxu0 0.0
    %543 = vmatpush1.msra.mxu0 0.0
    %544 = vmatprep.subr.mxu0 0.0
    %545 = vmatpush1.msra.mxu0 0.0
    %546 = vmatprep.subr.mxu0 0.0
    %547 = vmatpush1.msra.mxu0 0.0
    %548 = vmatprep.subr.mxu0 0.0
    %549 = vmatpush1.msra.mxu0 0.0
    %550 = vmatprep.subr.mxu0 0.0
    %551 = vmatpush1.msra.mxu0 0.0
    %552 = vmatprep.subr.mxu0 0.0
    %553 = vmatpush1.msra.mxu0 0.0
    %554 = vmatprep.subr.mxu0 0.0
    %555 = vmatpush1.msra.mxu0 0.0
    %556 = vmatprep.subr.mxu0 0.0
    %557 = vmatpush1.msra.mxu0 0.0
    %558 = vmatprep.subr.mxu0 0.0
    %559 = vmatpush1.msra.mxu0 0.0
    %560 = vmatprep.subr.mxu0 0.0
    %561 = vmatpush1.msra.mxu0 0.0
    %562 = vmatprep.subr.mxu0 0.0
    %563 = vmatpush1.msra.mxu0 0.0
    %564 = vmatprep.subr.mxu0 0.0
    %565 = vmatpush1.msra.mxu0 0.0
    %566 = vmatprep.subr.mxu0 0.0
    %567 = vmatpush1.msra.mxu0 0.0
    %568 = vmatprep.subr.mxu0 0.0
    %569 = vmatpush1.msra.mxu0 0.0
    %570 = vmatprep.subr.mxu0 0.0
    %571 = vmatpush1.msra.mxu0 0.0
    %572 = vmatprep.subr.mxu0 0.0
    %573 = vmatpush1.msra.mxu0 0.0
    %574 = vmatprep.subr.mxu0 0.0
    %575 = vmatpush1.msra.mxu0 0.0
    %576 = vmatprep.subr.mxu0 0.0
    %577 = vmatpush1.msra.mxu0 0.0
    %578 = vmatprep.subr.mxu0 0.0
    %579 = vmatpush1.msra.mxu0 0.0
    %580 = vmatprep.subr.mxu0 0.0
    %581 = vmatpush1.msra.mxu0 0.0
    %582 = vmatprep.subr.mxu0 0.0
    %583 = vmatpush1.msra.mxu0 0.0
    %584 = vmatprep.subr.mxu0 0.0
    %585 = vmatpush1.msra.mxu0 0.0
    %586 = vmatprep.subr.mxu0 0.0
    %587 = vmatpush1.msra.mxu0 0.0
    %588 = vmatprep.mubr.f32.mxu0 0.0
    %589 = vmatmul.mubr.f32.gmra.mrb[0].mxu0 %v522
    %v590 = vpop.f32.mrb[0].mxu0
    %v591 = vadd.f32 %v519, %v590
    %v592 = vpop.f32.mrb[0].mxu0
    %593 = vdwg.mxu0
    %v594 = vxor.u32 %v516, 2147483648
    %v595 = vmul.f32 %v594, 1.442695
    %v596 = vpow.pop %v595
    %v597 = vadd.f32 %v596, 1.0
    %v598 = vrcp.pop %v597
    %v599 = vmul.f32 1.0, %v598
    %v600 = vtanh.pop %v516
    %v601 = vxor.u32 %v591, 2147483648
    %v602 = vmul.f32 %v601, 1.442695
    %v603 = vpow.pop %v602
    %v604 = vadd.f32 %v603, 1.0
    %v605 = vrcp.pop %v604
    %v606 = vmul.f32 1.0, %v605
    %v607 = vtanh.pop %v591
    %v608 = vmul.f32 %v599, %v411
    %610 = vrot.lane.b32.xlu0 %v600, 32
    %v611 = vpop.permute.xlu0 %610
    %v613 = vmul.f32 %v599, %v611
    %615 = vrot.lane.b32.xlu0 %v613, 32
    %v616 = vpop.permute.xlu0 %615
    %v618 = vadd.f32 %v608, %v616
    %v619 = vtanh.pop %v618
    %621 = vrot.lane.b32.xlu0 %v619, 32
    %v622 = vpop.permute.xlu0 %621
    %v624 = vmul.f32 %v599, %v622
    %v625 = vmul.f32 %v606, %v428
    %627 = vrot.lane.b32.xlu0 %v607, 32
    %v628 = vpop.permute.xlu0 %627
    %v630 = vmul.f32 %v606, %v628
    %632 = vrot.lane.b32.xlu0 %v630, 32
    %v633 = vpop.permute.xlu0 %632
    %v635 = vadd.f32 %v625, %v633
    %v636 = vtanh.pop %v635
    %638 = vrot.lane.b32.xlu0 %v636, 32
    %v639 = vpop.permute.xlu0 %638
    %v641 = vmul.f32 %v606, %v639
    %643 = vrot.lane.b32.xlu0 %v624, 64
    %v644 = vpop.permute.xlu0 %643
    %646 = vst.msk [vmem:[#allocation2 + $0x8] sm:$0xff] %vm79, %v644
    %648 = vrot.lane.b32.xlu0 %v641, 96
    %v649 = vpop.permute.xlu0 %648
    %651 = vst.msk [vmem:[#allocation2 + $0x30] sm:$0xff] %vm444, %v649
    %v652 = vld [vmem:[#allocation3 + $0x20] sm:$0xff]
    %v653 = vsel %vm79, %v644, 0
    %655 = vmatprep.subr.mxu0 0.0
    %656 = vmatpush1.msra.mxu0 %v233
    %657 = vmatprep.subr.mxu0 0.0
    %658 = vmatpush1.msra.mxu0 %v234
    %659 = vmatprep.subr.mxu0 0.0
    %660 = vmatpush1.msra.mxu0 %v235
    %661 = vmatprep.subr.mxu0 0.0
    %662 = vmatpush1.msra.mxu0 %v236
    %663 = vmatprep.subr.mxu0 0.0
    %664 = vmatpush1.msra.mxu0 0.0
    %665 = vmatprep.subr.mxu0 0.0
    %666 = vmatpush1.msra.mxu0 0.0
    %667 = vmatprep.subr.mxu0 0.0
    %668 = vmatpush1.msra.mxu0 0.0
    %669 = vmatprep.subr.mxu0 0.0
    %670 = vmatpush1.msra.mxu0 0.0
    %671 = vmatprep.subr.mxu0 0.0
    %672 = vmatpush1.msra.mxu0 0.0
    %673 = vmatprep.subr.mxu0 0.0
    %674 = vmatpush1.msra.mxu0 0.0
    %675 = vmatprep.subr.mxu0 0.0
    %676 = vmatpush1.msra.mxu0 0.0
    %677 = vmatprep.subr.mxu0 0.0
    %678 = vmatpush1.msra.mxu0 0.0
    %679 = vmatprep.subr.mxu0 0.0
    %680 = vmatpush1.msra.mxu0 0.0
    %681 = vmatprep.subr.mxu0 0.0
    %682 = vmatpush1.msra.mxu0 0.0
    %683 = vmatprep.subr.mxu0 0.0
    %684 = vmatpush1.msra.mxu0 0.0
    %685 = vmatprep.subr.mxu0 0.0
    %686 = vmatpush1.msra.mxu0 0.0
    %687 = vmatprep.subr.mxu0 0.0
    %688 = vmatpush1.msra.mxu0 0.0
    %689 = vmatprep.subr.mxu0 0.0
    %690 = vmatpush1.msra.mxu0 0.0
    %691 = vmatprep.subr.mxu0 0.0
    %692 = vmatpush1.msra.mxu0 0.0
    %693 = vmatprep.subr.mxu0 0.0
    %694 = vmatpush1.msra.mxu0 0.0
    %695 = vmatprep.subr.mxu0 0.0
    %696 = vmatpush1.msra.mxu0 0.0
    %697 = vmatprep.subr.mxu0 0.0
    %698 = vmatpush1.msra.mxu0 0.0
    %699 = vmatprep.subr.mxu0 0.0
    %700 = vmatpush1.msra.mxu0 0.0
    %701 = vmatprep.subr.mxu0 0.0
    %702 = vmatpush1.msra.mxu0 0.0
    %703 = vmatprep.subr.mxu0 0.0
    %704 = vmatpush1.msra.mxu0 0.0
    %705 = vmatprep.subr.mxu0 0.0
    %706 = vmatpush1.msra.mxu0 0.0
    %707 = vmatprep.subr.mxu0 0.0
    %708 = vmatpush1.msra.mxu0 0.0
    %709 = vmatprep.subr.mxu0 0.0
    %710 = vmatpush1.msra.mxu0 0.0
    %711 = vmatprep.subr.mxu0 0.0
    %712 = vmatpush1.msra.mxu0 0.0
    %713 = vmatprep.subr.mxu0 0.0
    %714 = vmatpush1.msra.mxu0 0.0
    %715 = vmatprep.subr.mxu0 0.0
    %716 = vmatpush1.msra.mxu0 0.0
    %717 = vmatprep.subr.mxu0 0.0
    %718 = vmatpush1.msra.mxu0 0.0
    %719 = vmatprep.mubr.f32.mxu0 0.0
    %720 = vmatmul.mubr.f32.gmra.mrb[0].mxu0 %v653
    %v721 = vpop.f32.mrb[0].mxu0
    %v722 = vadd.f32 %v652, %v721
    %v723 = vpop.f32.mrb[0].mxu0
    %724 = vdwg.mxu0
    %v725 = vld [vmem:[#allocation3 + $0x58] sm:$0xff]
    %726 = vrot.lane.b32.xlu0 %v641, 64
    %v727 = vpop.permute.xlu0 %726
    %v728 = vsel %vm79, %v727, 0
    %730 = vmatprep.subr.mxu0 0.0
    %731 = vmatpush1.msra.mxu0 %v238
    %732 = vmatprep.subr.mxu0 0.0
    %733 = vmatpush1.msra.mxu0 %v239
    %734 = vmatprep.subr.mxu0 0.0
    %735 = vmatpush1.msra.mxu0 %v240
    %736 = vmatprep.subr.mxu0 0.0
    %737 = vmatpush1.msra.mxu0 %v241
    %738 = vmatprep.subr.mxu0 0.0
    %739 = vmatpush1.msra.mxu0 0.0
    %740 = vmatprep.subr.mxu0 0.0
    %741 = vmatpush1.msra.mxu0 0.0
    %742 = vmatprep.subr.mxu0 0.0
    %743 = vmatpush1.msra.mxu0 0.0
    %744 = vmatprep.subr.mxu0 0.0
    %745 = vmatpush1.msra.mxu0 0.0
    %746 = vmatprep.subr.mxu0 0.0
    %747 = vmatpush1.msra.mxu0 0.0
    %748 = vmatprep.subr.mxu0 0.0
    %749 = vmatpush1.msra.mxu0 0.0
    %750 = vmatprep.subr.mxu0 0.0
    %751 = vmatpush1.msra.mxu0 0.0
    %752 = vmatprep.subr.mxu0 0.0
    %753 = vmatpush1.msra.mxu0 0.0
    %754 = vmatprep.subr.mxu0 0.0
    %755 = vmatpush1.msra.mxu0 0.0
    %756 = vmatprep.subr.mxu0 0.0
    %757 = vmatpush1.msra.mxu0 0.0
    %758 = vmatprep.subr.mxu0 0.0
    %759 = vmatpush1.msra.mxu0 0.0
    %760 = vmatprep.subr.mxu0 0.0
    %761 = vmatpush1.msra.mxu0 0.0
    %762 = vmatprep.subr.mxu0 0.0
    %763 = vmatpush1.msra.mxu0 0.0
    %764 = vmatprep.subr.mxu0 0.0
    %765 = vmatpush1.msra.mxu0 0.0
    %766 = vmatprep.subr.mxu0 0.0
    %767 = vmatpush1.msra.mxu0 0.0
    %768 = vmatprep.subr.mxu0 0.0
    %769 = vmatpush1.msra.mxu0 0.0
    %770 = vmatprep.subr.mxu0 0.0
    %771 = vmatpush1.msra.mxu0 0.0
    %772 = vmatprep.subr.mxu0 0.0
    %773 = vmatpush1.msra.mxu0 0.0
    %774 = vmatprep.subr.mxu0 0.0
    %775 = vmatpush1.msra.mxu0 0.0
    %776 = vmatprep.subr.mxu0 0.0
    %777 = vmatpush1.msra.mxu0 0.0
    %778 = vmatprep.subr.mxu0 0.0
    %779 = vmatpush1.msra.mxu0 0.0
    %780 = vmatprep.subr.mxu0 0.0
    %781 = vmatpush1.msra.mxu0 0.0
    %782 = vmatprep.subr.mxu0 0.0
    %783 = vmatpush1.msra.mxu0 0.0
    %784 = vmatprep.subr.mxu0 0.0
    %785 = vmatpush1.msra.mxu0 0.0
    %786 = vmatprep.subr.mxu0 0.0
    %787 = vmatpush1.msra.mxu0 0.0
    %788 = vmatprep.subr.mxu0 0.0
    %789 = vmatpush1.msra.mxu0 0.0
    %790 = vmatprep.subr.mxu0 0.0
    %791 = vmatpush1.msra.mxu0 0.0
    %792 = vmatprep.subr.mxu0 0.0
    %793 = vmatpush1.msra.mxu0 0.0
    %794 = vmatprep.mubr.f32.mxu0 0.0
    %795 = vmatmul.mubr.f32.gmra.mrb[0].mxu0 %v728
    %v796 = vpop.f32.mrb[0].mxu0
    %v797 = vadd.f32 %v725, %v796
    %v798 = vpop.f32.mrb[0].mxu0
    %799 = vdwg.mxu0
    %v800 = vxor.u32 %v722, 2147483648
    %v801 = vmul.f32 %v800, 1.442695
    %v802 = vpow.pop %v801
    %v803 = vadd.f32 %v802, 1.0
    %v804 = vrcp.pop %v803
    %v805 = vmul.f32 1.0, %v804
    %v806 = vtanh.pop %v722
    %v807 = vxor.u32 %v797, 2147483648
    %v808 = vmul.f32 %v807, 1.442695
    %v809 = vpow.pop %v808
    %v810 = vadd.f32 %v809, 1.0
    %v811 = vrcp.pop %v810
    %v812 = vmul.f32 1.0, %v811
    %v813 = vtanh.pop %v797
    %v814 = vmul.f32 %v805, %v618
    %816 = vrot.lane.b32.xlu0 %v806, 32
    %v817 = vpop.permute.xlu0 %816
    %v819 = vmul.f32 %v805, %v817
    %821 = vrot.lane.b32.xlu0 %v819, 32
    %v822 = vpop.permute.xlu0 %821
    %v824 = vadd.f32 %v814, %v822
    %v825 = vtanh.pop %v824
    %827 = vrot.lane.b32.xlu0 %v825, 32
    %v828 = vpop.permute.xlu0 %827
    %v830 = vmul.f32 %v805, %v828
    %v831 = vmul.f32 %v812, %v635
    %833 = vrot.lane.b32.xlu0 %v813, 32
    %v834 = vpop.permute.xlu0 %833
    %v836 = vmul.f32 %v812, %v834
    %838 = vrot.lane.b32.xlu0 %v836, 32
    %v839 = vpop.permute.xlu0 %838
    %v841 = vadd.f32 %v831, %v839
    %v842 = vtanh.pop %v841
    %844 = vrot.lane.b32.xlu0 %v842, 32
    %v845 = vpop.permute.xlu0 %844
    %v847 = vmul.f32 %v812, %v845
    %849 = vrot.lane.b32.xlu0 %v830, 64
    %v850 = vpop.permute.xlu0 %849
    %852 = vst.msk [vmem:[#allocation2 + $0x10] sm:$0xff] %vm79, %v850
    %854 = vrot.lane.b32.xlu0 %v847, 96
    %v855 = vpop.permute.xlu0 %854
    %857 = vst.msk [vmem:[#allocation2 + $0x28] sm:$0xff] %vm444, %v855
    %v858 = vld [vmem:[#allocation3 + $0x30] sm:$0xff]
    %v859 = vsel %vm79, %v850, 0
    %861 = vmatprep.subr.mxu0 0.0
    %862 = vmatpush1.msra.mxu0 %v233
    %863 = vmatprep.subr.mxu0 0.0
    %864 = vmatpush1.msra.mxu0 %v234
    %865 = vmatprep.subr.mxu0 0.0
    %866 = vmatpush1.msra.mxu0 %v235
    %867 = vmatprep.subr.mxu0 0.0
    %868 = vmatpush1.msra.mxu0 %v236
    %869 = vmatprep.subr.mxu0 0.0
    %870 = vmatpush1.msra.mxu0 0.0
    %871 = vmatprep.subr.mxu0 0.0
    %872 = vmatpush1.msra.mxu0 0.0
    %873 = vmatprep.subr.mxu0 0.0
    %874 = vmatpush1.msra.mxu0 0.0
    %875 = vmatprep.subr.mxu0 0.0
    %876 = vmatpush1.msra.mxu0 0.0
    %877 = vmatprep.subr.mxu0 0.0
    %878 = vmatpush1.msra.mxu0 0.0
    %879 = vmatprep.subr.mxu0 0.0
    %880 = vmatpush1.msra.mxu0 0.0
    %881 = vmatprep.subr.mxu0 0.0
    %882 = vmatpush1.msra.mxu0 0.0
    %883 = vmatprep.subr.mxu0 0.0
    %884 = vmatpush1.msra.mxu0 0.0
    %885 = vmatprep.subr.mxu0 0.0
    %886 = vmatpush1.msra.mxu0 0.0
    %887 = vmatprep.subr.mxu0 0.0
    %888 = vmatpush1.msra.mxu0 0.0
    %889 = vmatprep.subr.mxu0 0.0
    %890 = vmatpush1.msra.mxu0 0.0
    %891 = vmatprep.subr.mxu0 0.0
    %892 = vmatpush1.msra.mxu0 0.0
    %893 = vmatprep.subr.mxu0 0.0
    %894 = vmatpush1.msra.mxu0 0.0
    %895 = vmatprep.subr.mxu0 0.0
    %896 = vmatpush1.msra.mxu0 0.0
    %897 = vmatprep.subr.mxu0 0.0
    %898 = vmatpush1.msra.mxu0 0.0
    %899 = vmatprep.subr.mxu0 0.0
    %900 = vmatpush1.msra.mxu0 0.0
    %901 = vmatprep.subr.mxu0 0.0
    %902 = vmatpush1.msra.mxu0 0.0
    %903 = vmatprep.subr.mxu0 0.0
    %904 = vmatpush1.msra.mxu0 0.0
    %905 = vmatprep.subr.mxu0 0.0
    %906 = vmatpush1.msra.mxu0 0.0
    %907 = vmatprep.subr.mxu0 0.0
    %908 = vmatpush1.msra.mxu0 0.0
    %909 = vmatprep.subr.mxu0 0.0
    %910 = vmatpush1.msra.mxu0 0.0
    %911 = vmatprep.subr.mxu0 0.0
    %912 = vmatpush1.msra.mxu0 0.0
    %913 = vmatprep.subr.mxu0 0.0
    %914 = vmatpush1.msra.mxu0 0.0
    %915 = vmatprep.subr.mxu0 0.0
    %916 = vmatpush1.msra.mxu0 0.0
    %917 = vmatprep.subr.mxu0 0.0
    %918 = vmatpush1.msra.mxu0 0.0
    %919 = vmatprep.subr.mxu0 0.0
    %920 = vmatpush1.msra.mxu0 0.0
    %921 = vmatprep.subr.mxu0 0.0
    %922 = vmatpush1.msra.mxu0 0.0
    %923 = vmatprep.subr.mxu0 0.0
    %924 = vmatpush1.msra.mxu0 0.0
    %925 = vmatprep.mubr.f32.mxu0 0.0
    %926 = vmatmul.mubr.f32.gmra.mrb[0].mxu0 %v859
    %v927 = vpop.f32.mrb[0].mxu0
    %v928 = vadd.f32 %v858, %v927
    %v929 = vpop.f32.mrb[0].mxu0
    %930 = vdwg.mxu0
    %v931 = vld [vmem:[#allocation3 + $0x48] sm:$0xff]
    %932 = vrot.lane.b32.xlu0 %v847, 64
    %v933 = vpop.permute.xlu0 %932
    %v934 = vsel %vm79, %v933, 0
    %936 = vmatprep.subr.mxu0 0.0
    %937 = vmatpush1.msra.mxu0 %v238
    %938 = vmatprep.subr.mxu0 0.0
    %939 = vmatpush1.msra.mxu0 %v239
    %940 = vmatprep.subr.mxu0 0.0
    %941 = vmatpush1.msra.mxu0 %v240
    %942 = vmatprep.subr.mxu0 0.0
    %943 = vmatpush1.msra.mxu0 %v241
    %944 = vmatprep.subr.mxu0 0.0
    %945 = vmatpush1.msra.mxu0 0.0
    %946 = vmatprep.subr.mxu0 0.0
    %947 = vmatpush1.msra.mxu0 0.0
    %948 = vmatprep.subr.mxu0 0.0
    %949 = vmatpush1.msra.mxu0 0.0
    %950 = vmatprep.subr.mxu0 0.0
    %951 = vmatpush1.msra.mxu0 0.0
    %952 = vmatprep.subr.mxu0 0.0
    %953 = vmatpush1.msra.mxu0 0.0
    %954 = vmatprep.subr.mxu0 0.0
    %955 = vmatpush1.msra.mxu0 0.0
    %956 = vmatprep.subr.mxu0 0.0
    %957 = vmatpush1.msra.mxu0 0.0
    %958 = vmatprep.subr.mxu0 0.0
    %959 = vmatpush1.msra.mxu0 0.0
    %960 = vmatprep.subr.mxu0 0.0
    %961 = vmatpush1.msra.mxu0 0.0
    %962 = vmatprep.subr.mxu0 0.0
    %963 = vmatpush1.msra.mxu0 0.0
    %964 = vmatprep.subr.mxu0 0.0
    %965 = vmatpush1.msra.mxu0 0.0
    %966 = vmatprep.subr.mxu0 0.0
    %967 = vmatpush1.msra.mxu0 0.0
    %968 = vmatprep.subr.mxu0 0.0
    %969 = vmatpush1.msra.mxu0 0.0
    %970 = vmatprep.subr.mxu0 0.0
    %971 = vmatpush1.msra.mxu0 0.0
    %972 = vmatprep.subr.mxu0 0.0
    %973 = vmatpush1.msra.mxu0 0.0
    %974 = vmatprep.subr.mxu0 0.0
    %975 = vmatpush1.msra.mxu0 0.0
    %976 = vmatprep.subr.mxu0 0.0
    %977 = vmatpush1.msra.mxu0 0.0
    %978 = vmatprep.subr.mxu0 0.0
    %979 = vmatpush1.msra.mxu0 0.0
    %980 = vmatprep.subr.mxu0 0.0
    %981 = vmatpush1.msra.mxu0 0.0
    %982 = vmatprep.subr.mxu0 0.0
    %983 = vmatpush1.msra.mxu0 0.0
    %984 = vmatprep.subr.mxu0 0.0
    %985 = vmatpush1.msra.mxu0 0.0
    %986 = vmatprep.subr.mxu0 0.0
    %987 = vmatpush1.msra.mxu0 0.0
    %988 = vmatprep.subr.mxu0 0.0
    %989 = vmatpush1.msra.mxu0 0.0
    %990 = vmatprep.subr.mxu0 0.0
    %991 = vmatpush1.msra.mxu0 0.0
    %992 = vmatprep.subr.mxu0 0.0
    %993 = vmatpush1.msra.mxu0 0.0
    %994 = vmatprep.subr.mxu0 0.0
    %995 = vmatpush1.msra.mxu0 0.0
    %996 = vmatprep.subr.mxu0 0.0
    %997 = vmatpush1.msra.mxu0 0.0
    %998 = vmatprep.subr.mxu0 0.0
    %999 = vmatpush1.msra.mxu0 0.0
    %1000 = vmatprep.mubr.f32.mxu0 0.0
    %1001 = vmatmul.mubr.f32.gmra.mrb[0].mxu0 %v934
    %v1002 = vpop.f32.mrb[0].mxu0
    %v1003 = vadd.f32 %v931, %v1002
    %v1004 = vpop.f32.mrb[0].mxu0
    %1005 = vdwg.mxu0
    %v1006 = vxor.u32 %v928, 2147483648
    %v1007 = vmul.f32 %v1006, 1.442695
    %v1008 = vpow.pop %v1007
    %v1009 = vadd.f32 %v1008, 1.0
    %v1010 = vrcp.pop %v1009
    %v1011 = vmul.f32 1.0, %v1010
    %v1012 = vtanh.pop %v928
    %v1013 = vxor.u32 %v1003, 2147483648
    %v1014 = vmul.f32 %v1013, 1.442695
    %v1015 = vpow.pop %v1014
    %v1016 = vadd.f32 %v1015, 1.0
    %v1017 = vrcp.pop %v1016
    %v1018 = vmul.f32 1.0, %v1017
    %v1019 = vtanh.pop %v1003
    %v1020 = vmul.f32 %v1011, %v824
    %1022 = vrot.lane.b32.xlu0 %v1012, 32
    %v1023 = vpop.permute.xlu0 %1022
    %v1025 = vmul.f32 %v1011, %v1023
    %1027 = vrot.lane.b32.xlu0 %v1025, 32
    %v1028 = vpop.permute.xlu0 %1027
    %v1030 = vadd.f32 %v1020, %v1028
    %v1031 = vtanh.pop %v1030
    %1033 = vrot.lane.b32.xlu0 %v1031, 32
    %v1034 = vpop.permute.xlu0 %1033
    %v1036 = vmul.f32 %v1011, %v1034
    %v1037 = vmul.f32 %v1018, %v841
    %1039 = vrot.lane.b32.xlu0 %v1019, 32
    %v1040 = vpop.permute.xlu0 %1039
    %v1042 = vmul.f32 %v1018, %v1040
    %1044 = vrot.lane.b32.xlu0 %v1042, 32
    %v1045 = vpop.permute.xlu0 %1044
    %v1047 = vadd.f32 %v1037, %v1045
    %v1048 = vtanh.pop %v1047
    %1050 = vrot.lane.b32.xlu0 %v1048, 32
    %v1051 = vpop.permute.xlu0 %1050
    %v1053 = vmul.f32 %v1018, %v1051
    %1055 = vrot.lane.b32.xlu0 %v1036, 64
    %v1056 = vpop.permute.xlu0 %1055
    %1058 = vst.msk [vmem:[#allocation2 + $0x18] sm:$0xff] %vm79, %v1056
    %1060 = vrot.lane.b32.xlu0 %v1053, 96
    %v1061 = vpop.permute.xlu0 %1060
    %1063 = vst.msk [vmem:[#allocation2 + $0x20] sm:$0xff] %vm444, %v1061
    %v1064 = vld [vmem:[#allocation3 + $0x40] sm:$0xff]
    %v1065 = vsel %vm79, %v1056, 0
    %1067 = vmatprep.subr.mxu0 0.0
    %1068 = vmatpush1.msra.mxu0 %v233
    %1069 = vmatprep.subr.mxu0 0.0
    %1070 = vmatpush1.msra.mxu0 %v234
    %1071 = vmatprep.subr.mxu0 0.0
    %1072 = vmatpush1.msra.mxu0 %v235
    %1073 = vmatprep.subr.mxu0 0.0
    %1074 = vmatpush1.msra.mxu0 %v236
    %1075 = vmatprep.subr.mxu0 0.0
    %1076 = vmatpush1.msra.mxu0 0.0
    %1077 = vmatprep.subr.mxu0 0.0
    %1078 = vmatpush1.msra.mxu0 0.0
    %1079 = vmatprep.subr.mxu0 0.0
    %1080 = vmatpush1.msra.mxu0 0.0
    %1081 = vmatprep.subr.mxu0 0.0
    %1082 = vmatpush1.msra.mxu0 0.0
    %1083 = vmatprep.subr.mxu0 0.0
    %1084 = vmatpush1.msra.mxu0 0.0
    %1085 = vmatprep.subr.mxu0 0.0
    %1086 = vmatpush1.msra.mxu0 0.0
    %1087 = vmatprep.subr.mxu0 0.0
    %1088 = vmatpush1.msra.mxu0 0.0
    %1089 = vmatprep.subr.mxu0 0.0
    %1090 = vmatpush1.msra.mxu0 0.0
    %1091 = vmatprep.subr.mxu0 0.0
    %1092 = vmatpush1.msra.mxu0 0.0
    %1093 = vmatprep.subr.mxu0 0.0
    %1094 = vmatpush1.msra.mxu0 0.0
    %1095 = vmatprep.subr.mxu0 0.0
    %1096 = vmatpush1.msra.mxu0 0.0
    %1097 = vmatprep.subr.mxu0 0.0
    %1098 = vmatpush1.msra.mxu0 0.0
    %1099 = vmatprep.subr.mxu0 0.0
    %1100 = vmatpush1.msra.mxu0 0.0
    %1101 = vmatprep.subr.mxu0 0.0
    %1102 = vmatpush1.msra.mxu0 0.0
    %1103 = vmatprep.subr.mxu0 0.0
    %1104 = vmatpush1.msra.mxu0 0.0
    %1105 = vmatprep.subr.mxu0 0.0
    %1106 = vmatpush1.msra.mxu0 0.0
    %1107 = vmatprep.subr.mxu0 0.0
    %1108 = vmatpush1.msra.mxu0 0.0
    %1109 = vmatprep.subr.mxu0 0.0
    %1110 = vmatpush1.msra.mxu0 0.0
    %1111 = vmatprep.subr.mxu0 0.0
    %1112 = vmatpush1.msra.mxu0 0.0
    %1113 = vmatprep.subr.mxu0 0.0
    %1114 = vmatpush1.msra.mxu0 0.0
    %1115 = vmatprep.subr.mxu0 0.0
    %1116 = vmatpush1.msra.mxu0 0.0
    %1117 = vmatprep.subr.mxu0 0.0
    %1118 = vmatpush1.msra.mxu0 0.0
    %1119 = vmatprep.subr.mxu0 0.0
    %1120 = vmatpush1.msra.mxu0 0.0
    %1121 = vmatprep.subr.mxu0 0.0
    %1122 = vmatpush1.msra.mxu0 0.0
    %1123 = vmatprep.subr.mxu0 0.0
    %1124 = vmatpush1.msra.mxu0 0.0
    %1125 = vmatprep.subr.mxu0 0.0
    %1126 = vmatpush1.msra.mxu0 0.0
    %1127 = vmatprep.subr.mxu0 0.0
    %1128 = vmatpush1.msra.mxu0 0.0
    %1129 = vmatprep.subr.mxu0 0.0
    %1130 = vmatpush1.msra.mxu0 0.0
    %1131 = vmatprep.mubr.f32.mxu0 0.0
    %1132 = vmatmul.mubr.f32.gmra.mrb[0].mxu0 %v1065
    %v1133 = vpop.f32.mrb[0].mxu0
    %v1134 = vadd.f32 %v1064, %v1133
    %v1135 = vpop.f32.mrb[0].mxu0
    %1136 = vdwg.mxu0
    %v1137 = vld [vmem:[#allocation3 + $0x38] sm:$0xff]
    %1138 = vrot.lane.b32.xlu0 %v1053, 64
    %v1139 = vpop.permute.xlu0 %1138
    %v1140 = vsel %vm79, %v1139, 0
    %1142 = vmatprep.subr.mxu0 0.0
    %1143 = vmatpush1.msra.mxu0 %v238
    %1144 = vmatprep.subr.mxu0 0.0
    %1145 = vmatpush1.msra.mxu0 %v239
    %1146 = vmatprep.subr.mxu0 0.0
    %1147 = vmatpush1.msra.mxu0 %v240
    %1148 = vmatprep.subr.mxu0 0.0
    %1149 = vmatpush1.msra.mxu0 %v241
    %1150 = vmatprep.subr.mxu0 0.0
    %1151 = vmatpush1.msra.mxu0 0.0
    %1152 = vmatprep.subr.mxu0 0.0
    %1153 = vmatpush1.msra.mxu0 0.0
    %1154 = vmatprep.subr.mxu0 0.0
    %1155 = vmatpush1.msra.mxu0 0.0
    %1156 = vmatprep.subr.mxu0 0.0
    %1157 = vmatpush1.msra.mxu0 0.0
    %1158 = vmatprep.subr.mxu0 0.0
    %1159 = vmatpush1.msra.mxu0 0.0
    %1160 = vmatprep.subr.mxu0 0.0
    %1161 = vmatpush1.msra.mxu0 0.0
    %1162 = vmatprep.subr.mxu0 0.0
    %1163 = vmatpush1.msra.mxu0 0.0
    %1164 = vmatprep.subr.mxu0 0.0
    %1165 = vmatpush1.msra.mxu0 0.0
    %1166 = vmatprep.subr.mxu0 0.0
    %1167 = vmatpush1.msra.mxu0 0.0
    %1168 = vmatprep.subr.mxu0 0.0
    %1169 = vmatpush1.msra.mxu0 0.0
    %1170 = vmatprep.subr.mxu0 0.0
    %1171 = vmatpush1.msra.mxu0 0.0
    %1172 = vmatprep.subr.mxu0 0.0
    %1173 = vmatpush1.msra.mxu0 0.0
    %1174 = vmatprep.subr.mxu0 0.0
    %1175 = vmatpush1.msra.mxu0 0.0
    %1176 = vmatprep.subr.mxu0 0.0
    %1177 = vmatpush1.msra.mxu0 0.0
    %1178 = vmatprep.subr.mxu0 0.0
    %1179 = vmatpush1.msra.mxu0 0.0
    %1180 = vmatprep.subr.mxu0 0.0
    %1181 = vmatpush1.msra.mxu0 0.0
    %1182 = vmatprep.subr.mxu0 0.0
    %1183 = vmatpush1.msra.mxu0 0.0
    %1184 = vmatprep.subr.mxu0 0.0
    %1185 = vmatpush1.msra.mxu0 0.0
    %1186 = vmatprep.subr.mxu0 0.0
    %1187 = vmatpush1.msra.mxu0 0.0
    %1188 = vmatprep.subr.mxu0 0.0
    %1189 = vmatpush1.msra.mxu0 0.0
    %1190 = vmatprep.subr.mxu0 0.0
    %1191 = vmatpush1.msra.mxu0 0.0
    %1192 = vmatprep.subr.mxu0 0.0
    %1193 = vmatpush1.msra.mxu0 0.0
    %1194 = vmatprep.subr.mxu0 0.0
    %1195 = vmatpush1.msra.mxu0 0.0
    %1196 = vmatprep.subr.mxu0 0.0
    %1197 = vmatpush1.msra.mxu0 0.0
    %1198 = vmatprep.subr.mxu0 0.0
    %1199 = vmatpush1.msra.mxu0 0.0
    %1200 = vmatprep.subr.mxu0 0.0
    %1201 = vmatpush1.msra.mxu0 0.0
    %1202 = vmatprep.subr.mxu0 0.0
    %1203 = vmatpush1.msra.mxu0 0.0
    %1204 = vmatprep.subr.mxu0 0.0
    %1205 = vmatpush1.msra.mxu0 0.0
    %1206 = vmatprep.mubr.f32.mxu0 0.0
    %1207 = vmatmul.mubr.f32.gmra.mrb[0].mxu0 %v1140
    %v1208 = vpop.f32.mrb[0].mxu0
    %v1209 = vadd.f32 %v1137, %v1208
    %v1210 = vpop.f32.mrb[0].mxu0
    %1211 = vdwg.mxu0
    %v1212 = vxor.u32 %v1134, 2147483648
    %v1213 = vmul.f32 %v1212, 1.442695
    %v1214 = vpow.pop %v1213
    %v1215 = vadd.f32 %v1214, 1.0
    %v1216 = vrcp.pop %v1215
    %v1217 = vmul.f32 1.0, %v1216
    %v1218 = vtanh.pop %v1134
    %v1219 = vxor.u32 %v1209, 2147483648
    %v1220 = vmul.f32 %v1219, 1.442695
    %v1221 = vpow.pop %v1220
    %v1222 = vadd.f32 %v1221, 1.0
    %v1223 = vrcp.pop %v1222
    %v1224 = vmul.f32 1.0, %v1223
    %v1225 = vtanh.pop %v1209
    %v1226 = vmul.f32 %v1217, %v1030
    %1228 = vrot.lane.b32.xlu0 %v1218, 32
    %v1229 = vpop.permute.xlu0 %1228
    %v1231 = vmul.f32 %v1217, %v1229
    %1233 = vrot.lane.b32.xlu0 %v1231, 32
    %v1234 = vpop.permute.xlu0 %1233
    %v1236 = vadd.f32 %v1226, %v1234
    %v1237 = vtanh.pop %v1236
    %1239 = vrot.lane.b32.xlu0 %v1237, 32
    %v1240 = vpop.permute.xlu0 %1239
    %v1242 = vmul.f32 %v1217, %v1240
    %v1243 = vmul.f32 %v1224, %v1047
    %1245 = vrot.lane.b32.xlu0 %v1225, 32
    %v1246 = vpop.permute.xlu0 %1245
    %v1248 = vmul.f32 %v1224, %v1246
    %1250 = vrot.lane.b32.xlu0 %v1248, 32
    %v1251 = vpop.permute.xlu0 %1250
    %v1253 = vadd.f32 %v1243, %v1251
    %v1254 = vtanh.pop %v1253
    %1256 = vrot.lane.b32.xlu0 %v1254, 32
    %v1257 = vpop.permute.xlu0 %1256
    %v1259 = vmul.f32 %v1224, %v1257
    %1261 = vrot.lane.b32.xlu0 %v1242, 64
    %v1262 = vpop.permute.xlu0 %1261
    %1264 = vst.msk [vmem:[#allocation2 + $0x20] sm:$0xff] %vm79, %v1262
    %1266 = vrot.lane.b32.xlu0 %v1259, 96
    %v1267 = vpop.permute.xlu0 %1266
    %1269 = vst.msk [vmem:[#allocation2 + $0x18] sm:$0xff] %vm444, %v1267
    %v1270 = vld [vmem:[#allocation3 + $0x50] sm:$0xff]
    %v1271 = vsel %vm79, %v1262, 0
    %1273 = vmatprep.subr.mxu0 0.0
    %1274 = vmatpush1.msra.mxu0 %v233
    %1275 = vmatprep.subr.mxu0 0.0
    %1276 = vmatpush1.msra.mxu0 %v234
    %1277 = vmatprep.subr.mxu0 0.0
    %1278 = vmatpush1.msra.mxu0 %v235
    %1279 = vmatprep.subr.mxu0 0.0
    %1280 = vmatpush1.msra.mxu0 %v236
    %1281 = vmatprep.subr.mxu0 0.0
    %1282 = vmatpush1.msra.mxu0 0.0
    %1283 = vmatprep.subr.mxu0 0.0
    %1284 = vmatpush1.msra.mxu0 0.0
    %1285 = vmatprep.subr.mxu0 0.0
    %1286 = vmatpush1.msra.mxu0 0.0
    %1287 = vmatprep.subr.mxu0 0.0
    %1288 = vmatpush1.msra.mxu0 0.0
    %1289 = vmatprep.subr.mxu0 0.0
    %1290 = vmatpush1.msra.mxu0 0.0
    %1291 = vmatprep.subr.mxu0 0.0
    %1292 = vmatpush1.msra.mxu0 0.0
    %1293 = vmatprep.subr.mxu0 0.0
    %1294 = vmatpush1.msra.mxu0 0.0
    %1295 = vmatprep.subr.mxu0 0.0
    %1296 = vmatpush1.msra.mxu0 0.0
    %1297 = vmatprep.subr.mxu0 0.0
    %1298 = vmatpush1.msra.mxu0 0.0
    %1299 = vmatprep.subr.mxu0 0.0
    %1300 = vmatpush1.msra.mxu0 0.0
    %1301 = vmatprep.subr.mxu0 0.0
    %1302 = vmatpush1.msra.mxu0 0.0
    %1303 = vmatprep.subr.mxu0 0.0
    %1304 = vmatpush1.msra.mxu0 0.0
    %1305 = vmatprep.subr.mxu0 0.0
    %1306 = vmatpush1.msra.mxu0 0.0
    %1307 = vmatprep.subr.mxu0 0.0
    %1308 = vmatpush1.msra.mxu0 0.0
    %1309 = vmatprep.subr.mxu0 0.0
    %1310 = vmatpush1.msra.mxu0 0.0
    %1311 = vmatprep.subr.mxu0 0.0
    %1312 = vmatpush1.msra.mxu0 0.0
    %1313 = vmatprep.subr.mxu0 0.0
    %1314 = vmatpush1.msra.mxu0 0.0
    %1315 = vmatprep.subr.mxu0 0.0
    %1316 = vmatpush1.msra.mxu0 0.0
    %1317 = vmatprep.subr.mxu0 0.0
    %1318 = vmatpush1.msra.mxu0 0.0
    %1319 = vmatprep.subr.mxu0 0.0
    %1320 = vmatpush1.msra.mxu0 0.0
    %1321 = vmatprep.subr.mxu0 0.0
    %1322 = vmatpush1.msra.mxu0 0.0
    %1323 = vmatprep.subr.mxu0 0.0
    %1324 = vmatpush1.msra.mxu0 0.0
    %1325 = vmatprep.subr.mxu0 0.0
    %1326 = vmatpush1.msra.mxu0 0.0
    %1327 = vmatprep.subr.mxu0 0.0
    %1328 = vmatpush1.msra.mxu0 0.0
    %1329 = vmatprep.subr.mxu0 0.0
    %1330 = vmatpush1.msra.mxu0 0.0
    %1331 = vmatprep.subr.mxu0 0.0
    %1332 = vmatpush1.msra.mxu0 0.0
    %1333 = vmatprep.subr.mxu0 0.0
    %1334 = vmatpush1.msra.mxu0 0.0
    %1335 = vmatprep.subr.mxu0 0.0
    %1336 = vmatpush1.msra.mxu0 0.0
    %1337 = vmatprep.mubr.f32.mxu0 0.0
    %1338 = vmatmul.mubr.f32.gmra.mrb[0].mxu0 %v1271
    %v1339 = vpop.f32.mrb[0].mxu0
    %v1340 = vadd.f32 %v1270, %v1339
    %v1341 = vpop.f32.mrb[0].mxu0
    %1342 = vdwg.mxu0
    %v1343 = vld [vmem:[#allocation3 + $0x28] sm:$0xff]
    %1344 = vrot.lane.b32.xlu0 %v1259, 64
    %v1345 = vpop.permute.xlu0 %1344
    %v1346 = vsel %vm79, %v1345, 0
    %1348 = vmatprep.subr.mxu0 0.0
    %1349 = vmatpush1.msra.mxu0 %v238
    %1350 = vmatprep.subr.mxu0 0.0
    %1351 = vmatpush1.msra.mxu0 %v239
    %1352 = vmatprep.subr.mxu0 0.0
    %1353 = vmatpush1.msra.mxu0 %v240
    %1354 = vmatprep.subr.mxu0 0.0
    %1355 = vmatpush1.msra.mxu0 %v241
    %1356 = vmatprep.subr.mxu0 0.0
    %1357 = vmatpush1.msra.mxu0 0.0
    %1358 = vmatprep.subr.mxu0 0.0
    %1359 = vmatpush1.msra.mxu0 0.0
    %1360 = vmatprep.subr.mxu0 0.0
    %1361 = vmatpush1.msra.mxu0 0.0
    %1362 = vmatprep.subr.mxu0 0.0
    %1363 = vmatpush1.msra.mxu0 0.0
    %1364 = vmatprep.subr.mxu0 0.0
    %1365 = vmatpush1.msra.mxu0 0.0
    %1366 = vmatprep.subr.mxu0 0.0
    %1367 = vmatpush1.msra.mxu0 0.0
    %1368 = vmatprep.subr.mxu0 0.0
    %1369 = vmatpush1.msra.mxu0 0.0
    %1370 = vmatprep.subr.mxu0 0.0
    %1371 = vmatpush1.msra.mxu0 0.0
    %1372 = vmatprep.subr.mxu0 0.0
    %1373 = vmatpush1.msra.mxu0 0.0
    %1374 = vmatprep.subr.mxu0 0.0
    %1375 = vmatpush1.msra.mxu0 0.0
    %1376 = vmatprep.subr.mxu0 0.0
    %1377 = vmatpush1.msra.mxu0 0.0
    %1378 = vmatprep.subr.mxu0 0.0
    %1379 = vmatpush1.msra.mxu0 0.0
    %1380 = vmatprep.subr.mxu0 0.0
    %1381 = vmatpush1.msra.mxu0 0.0
    %1382 = vmatprep.subr.mxu0 0.0
    %1383 = vmatpush1.msra.mxu0 0.0
    %1384 = vmatprep.subr.mxu0 0.0
    %1385 = vmatpush1.msra.mxu0 0.0
    %1386 = vmatprep.subr.mxu0 0.0
    %1387 = vmatpush1.msra.mxu0 0.0
    %1388 = vmatprep.subr.mxu0 0.0
    %1389 = vmatpush1.msra.mxu0 0.0
    %1390 = vmatprep.subr.mxu0 0.0
    %1391 = vmatpush1.msra.mxu0 0.0
    %1392 = vmatprep.subr.mxu0 0.0
    %1393 = vmatpush1.msra.mxu0 0.0
    %1394 = vmatprep.subr.mxu0 0.0
    %1395 = vmatpush1.msra.mxu0 0.0
    %1396 = vmatprep.subr.mxu0 0.0
    %1397 = vmatpush1.msra.mxu0 0.0
    %1398 = vmatprep.subr.mxu0 0.0
    %1399 = vmatpush1.msra.mxu0 0.0
    %1400 = vmatprep.subr.mxu0 0.0
    %1401 = vmatpush1.msra.mxu0 0.0
    %1402 = vmatprep.subr.mxu0 0.0
    %1403 = vmatpush1.msra.mxu0 0.0
    %1404 = vmatprep.subr.mxu0 0.0
    %1405 = vmatpush1.msra.mxu0 0.0
    %1406 = vmatprep.subr.mxu0 0.0
    %1407 = vmatpush1.msra.mxu0 0.0
    %1408 = vmatprep.subr.mxu0 0.0
    %1409 = vmatpush1.msra.mxu0 0.0
    %1410 = vmatprep.subr.mxu0 0.0
    %1411 = vmatpush1.msra.mxu0 0.0
    %1412 = vmatprep.mubr.f32.mxu0 0.0
    %1413 = vmatmul.mubr.f32.gmra.mrb[0].mxu0 %v1346
    %v1414 = vpop.f32.mrb[0].mxu0
    %v1415 = vadd.f32 %v1343, %v1414
    %v1416 = vpop.f32.mrb[0].mxu0
    %1417 = vdwg.mxu0
    %v1418 = vxor.u32 %v1340, 2147483648
    %v1419 = vmul.f32 %v1418, 1.442695
    %v1420 = vpow.pop %v1419
    %v1421 = vadd.f32 %v1420, 1.0
    %v1422 = vrcp.pop %v1421
    %v1423 = vmul.f32 1.0, %v1422
    %v1424 = vtanh.pop %v1340
    %v1425 = vxor.u32 %v1415, 2147483648
    %v1426 = vmul.f32 %v1425, 1.442695
    %v1427 = vpow.pop %v1426
    %v1428 = vadd.f32 %v1427, 1.0
    %v1429 = vrcp.pop %v1428
    %v1430 = vmul.f32 1.0, %v1429
    %v1431 = vtanh.pop %v1415
    %v1432 = vmul.f32 %v1423, %v1236
    %1434 = vrot.lane.b32.xlu0 %v1424, 32
    %v1435 = vpop.permute.xlu0 %1434
    %v1437 = vmul.f32 %v1423, %v1435
    %1439 = vrot.lane.b32.xlu0 %v1437, 32
    %v1440 = vpop.permute.xlu0 %1439
    %v1442 = vadd.f32 %v1432, %v1440
    %v1443 = vtanh.pop %v1442
    %1445 = vrot.lane.b32.xlu0 %v1443, 32
    %v1446 = vpop.permute.xlu0 %1445
    %v1448 = vmul.f32 %v1423, %v1446
    %v1449 = vmul.f32 %v1430, %v1253
    %1451 = vrot.lane.b32.xlu0 %v1431, 32
    %v1452 = vpop.permute.xlu0 %1451
    %v1454 = vmul.f32 %v1430, %v1452
    %1456 = vrot.lane.b32.xlu0 %v1454, 32
    %v1457 = vpop.permute.xlu0 %1456
    %v1459 = vadd.f32 %v1449, %v1457
    %v1460 = vtanh.pop %v1459
    %1462 = vrot.lane.b32.xlu0 %v1460, 32
    %v1463 = vpop.permute.xlu0 %1462
    %v1465 = vmul.f32 %v1430, %v1463
    %1467 = vrot.lane.b32.xlu0 %v1448, 64
    %v1468 = vpop.permute.xlu0 %1467
    %1470 = vst.msk [vmem:[#allocation2 + $0x28] sm:$0xff] %vm79, %v1468
    %1472 = vrot.lane.b32.xlu0 %v1465, 96
    %v1473 = vpop.permute.xlu0 %1472
    %1475 = vst.msk [vmem:[#allocation2 + $0x10] sm:$0xff] %vm444, %v1473
    %v1476 = vld [vmem:[#allocation3 + $0x60] sm:$0xff]
    %v1477 = vsel %vm79, %v1468, 0
    %1479 = vmatprep.subr.mxu0 0.0
    %1480 = vmatpush1.msra.mxu0 %v233
    %1481 = vmatprep.subr.mxu0 0.0
    %1482 = vmatpush1.msra.mxu0 %v234
    %1483 = vmatprep.subr.mxu0 0.0
    %1484 = vmatpush1.msra.mxu0 %v235
    %1485 = vmatprep.subr.mxu0 0.0
    %1486 = vmatpush1.msra.mxu0 %v236
    %1487 = vmatprep.subr.mxu0 0.0
    %1488 = vmatpush1.msra.mxu0 0.0
    %1489 = vmatprep.subr.mxu0 0.0
    %1490 = vmatpush1.msra.mxu0 0.0
    %1491 = vmatprep.subr.mxu0 0.0
    %1492 = vmatpush1.msra.mxu0 0.0
    %1493 = vmatprep.subr.mxu0 0.0
    %1494 = vmatpush1.msra.mxu0 0.0
    %1495 = vmatprep.subr.mxu0 0.0
    %1496 = vmatpush1.msra.mxu0 0.0
    %1497 = vmatprep.subr.mxu0 0.0
    %1498 = vmatpush1.msra.mxu0 0.0
    %1499 = vmatprep.subr.mxu0 0.0
    %1500 = vmatpush1.msra.mxu0 0.0
    %1501 = vmatprep.subr.mxu0 0.0
    %1502 = vmatpush1.msra.mxu0 0.0
    %1503 = vmatprep.subr.mxu0 0.0
    %1504 = vmatpush1.msra.mxu0 0.0
    %1505 = vmatprep.subr.mxu0 0.0
    %1506 = vmatpush1.msra.mxu0 0.0
    %1507 = vmatprep.subr.mxu0 0.0
    %1508 = vmatpush1.msra.mxu0 0.0
    %1509 = vmatprep.subr.mxu0 0.0
    %1510 = vmatpush1.msra.mxu0 0.0
    %1511 = vmatprep.subr.mxu0 0.0
    %1512 = vmatpush1.msra.mxu0 0.0
    %1513 = vmatprep.subr.mxu0 0.0
    %1514 = vmatpush1.msra.mxu0 0.0
    %1515 = vmatprep.subr.mxu0 0.0
    %1516 = vmatpush1.msra.mxu0 0.0
    %1517 = vmatprep.subr.mxu0 0.0
    %1518 = vmatpush1.msra.mxu0 0.0
    %1519 = vmatprep.subr.mxu0 0.0
    %1520 = vmatpush1.msra.mxu0 0.0
    %1521 = vmatprep.subr.mxu0 0.0
    %1522 = vmatpush1.msra.mxu0 0.0
    %1523 = vmatprep.subr.mxu0 0.0
    %1524 = vmatpush1.msra.mxu0 0.0
    %1525 = vmatprep.subr.mxu0 0.0
    %1526 = vmatpush1.msra.mxu0 0.0
    %1527 = vmatprep.subr.mxu0 0.0
    %1528 = vmatpush1.msra.mxu0 0.0
    %1529 = vmatprep.subr.mxu0 0.0
    %1530 = vmatpush1.msra.mxu0 0.0
    %1531 = vmatprep.subr.mxu0 0.0
    %1532 = vmatpush1.msra.mxu0 0.0
    %1533 = vmatprep.subr.mxu0 0.0
    %1534 = vmatpush1.msra.mxu0 0.0
    %1535 = vmatprep.subr.mxu0 0.0
    %1536 = vmatpush1.msra.mxu0 0.0
    %1537 = vmatprep.subr.mxu0 0.0
    %1538 = vmatpush1.msra.mxu0 0.0
    %1539 = vmatprep.subr.mxu0 0.0
    %1540 = vmatpush1.msra.mxu0 0.0
    %1541 = vmatprep.subr.mxu0 0.0
    %1542 = vmatpush1.msra.mxu0 0.0
    %1543 = vmatprep.mubr.f32.mxu0 0.0
    %1544 = vmatmul.mubr.f32.gmra.mrb[0].mxu0 %v1477
    %v1545 = vpop.f32.mrb[0].mxu0
    %v1546 = vadd.f32 %v1476, %v1545
    %v1547 = vpop.f32.mrb[0].mxu0
    %1548 = vdwg.mxu0
    %v1549 = vld [vmem:[#allocation3 + $0x18] sm:$0xff]
    %1550 = vrot.lane.b32.xlu0 %v1465, 64
    %v1551 = vpop.permute.xlu0 %1550
    %v1552 = vsel %vm79, %v1551, 0
    %1554 = vmatprep.subr.mxu0 0.0
    %1555 = vmatpush1.msra.mxu0 %v238
    %1556 = vmatprep.subr.mxu0 0.0
    %1557 = vmatpush1.msra.mxu0 %v239
    %1558 = vmatprep.subr.mxu0 0.0
    %1559 = vmatpush1.msra.mxu0 %v240
    %1560 = vmatprep.subr.mxu0 0.0
    %1561 = vmatpush1.msra.mxu0 %v241
    %1562 = vmatprep.subr.mxu0 0.0
    %1563 = vmatpush1.msra.mxu0 0.0
    %1564 = vmatprep.subr.mxu0 0.0
    %1565 = vmatpush1.msra.mxu0 0.0
    %1566 = vmatprep.subr.mxu0 0.0
    %1567 = vmatpush1.msra.mxu0 0.0
    %1568 = vmatprep.subr.mxu0 0.0
    %1569 = vmatpush1.msra.mxu0 0.0
    %1570 = vmatprep.subr.mxu0 0.0
    %1571 = vmatpush1.msra.mxu0 0.0
    %1572 = vmatprep.subr.mxu0 0.0
    %1573 = vmatpush1.msra.mxu0 0.0
    %1574 = vmatprep.subr.mxu0 0.0
    %1575 = vmatpush1.msra.mxu0 0.0
    %1576 = vmatprep.subr.mxu0 0.0
    %1577 = vmatpush1.msra.mxu0 0.0
    %1578 = vmatprep.subr.mxu0 0.0
    %1579 = vmatpush1.msra.mxu0 0.0
    %1580 = vmatprep.subr.mxu0 0.0
    %1581 = vmatpush1.msra.mxu0 0.0
    %1582 = vmatprep.subr.mxu0 0.0
    %1583 = vmatpush1.msra.mxu0 0.0
    %1584 = vmatprep.subr.mxu0 0.0
    %1585 = vmatpush1.msra.mxu0 0.0
    %1586 = vmatprep.subr.mxu0 0.0
    %1587 = vmatpush1.msra.mxu0 0.0
    %1588 = vmatprep.subr.mxu0 0.0
    %1589 = vmatpush1.msra.mxu0 0.0
    %1590 = vmatprep.subr.mxu0 0.0
    %1591 = vmatpush1.msra.mxu0 0.0
    %1592 = vmatprep.subr.mxu0 0.0
    %1593 = vmatpush1.msra.mxu0 0.0
    %1594 = vmatprep.subr.mxu0 0.0
    %1595 = vmatpush1.msra.mxu0 0.0
    %1596 = vmatprep.subr.mxu0 0.0
    %1597 = vmatpush1.msra.mxu0 0.0
    %1598 = vmatprep.subr.mxu0 0.0
    %1599 = vmatpush1.msra.mxu0 0.0
    %1600 = vmatprep.subr.mxu0 0.0
    %1601 = vmatpush1.msra.mxu0 0.0
    %1602 = vmatprep.subr.mxu0 0.0
    %1603 = vmatpush1.msra.mxu0 0.0
    %1604 = vmatprep.subr.mxu0 0.0
    %1605 = vmatpush1.msra.mxu0 0.0
    %1606 = vmatprep.subr.mxu0 0.0
    %1607 = vmatpush1.msra.mxu0 0.0
    %1608 = vmatprep.subr.mxu0 0.0
    %1609 = vmatpush1.msra.mxu0 0.0
    %1610 = vmatprep.subr.mxu0 0.0
    %1611 = vmatpush1.msra.mxu0 0.0
    %1612 = vmatprep.subr.mxu0 0.0
    %1613 = vmatpush1.msra.mxu0 0.0
    %1614 = vmatprep.subr.mxu0 0.0
    %1615 = vmatpush1.msra.mxu0 0.0
    %1616 = vmatprep.subr.mxu0 0.0
    %1617 = vmatpush1.msra.mxu0 0.0
    %1618 = vmatprep.mubr.f32.mxu0 0.0
    %1619 = vmatmul.mubr.f32.gmra.mrb[0].mxu0 %v1552
    %v1620 = vpop.f32.mrb[0].mxu0
    %v1621 = vadd.f32 %v1549, %v1620
    %v1622 = vpop.f32.mrb[0].mxu0
    %1623 = vdwg.mxu0
    %v1624 = vxor.u32 %v1546, 2147483648
    %v1625 = vmul.f32 %v1624, 1.442695
    %v1626 = vpow.pop %v1625
    %v1627 = vadd.f32 %v1626, 1.0
    %v1628 = vrcp.pop %v1627
    %v1629 = vmul.f32 1.0, %v1628
    %v1630 = vtanh.pop %v1546
    %v1631 = vxor.u32 %v1621, 2147483648
    %v1632 = vmul.f32 %v1631, 1.442695
    %v1633 = vpow.pop %v1632
    %v1634 = vadd.f32 %v1633, 1.0
    %v1635 = vrcp.pop %v1634
    %v1636 = vmul.f32 1.0, %v1635
    %v1637 = vtanh.pop %v1621
    %v1638 = vmul.f32 %v1629, %v1442
    %1640 = vrot.lane.b32.xlu0 %v1630, 32
    %v1641 = vpop.permute.xlu0 %1640
    %v1643 = vmul.f32 %v1629, %v1641
    %1645 = vrot.lane.b32.xlu0 %v1643, 32
    %v1646 = vpop.permute.xlu0 %1645
    %v1648 = vadd.f32 %v1638, %v1646
    %v1649 = vtanh.pop %v1648
    %1651 = vrot.lane.b32.xlu0 %v1649, 32
    %v1652 = vpop.permute.xlu0 %1651
    %v1654 = vmul.f32 %v1629, %v1652
    %v1655 = vmul.f32 %v1636, %v1459
    %1657 = vrot.lane.b32.xlu0 %v1637, 32
    %v1658 = vpop.permute.xlu0 %1657
    %v1660 = vmul.f32 %v1636, %v1658
    %1662 = vrot.lane.b32.xlu0 %v1660, 32
    %v1663 = vpop.permute.xlu0 %1662
    %v1665 = vadd.f32 %v1655, %v1663
    %v1666 = vtanh.pop %v1665
    %1668 = vrot.lane.b32.xlu0 %v1666, 32
    %v1669 = vpop.permute.xlu0 %1668
    %v1671 = vmul.f32 %v1636, %v1669
    %1673 = vrot.lane.b32.xlu0 %v1654, 64
    %v1674 = vpop.permute.xlu0 %1673
    %1676 = vst.msk [vmem:[#allocation2 + $0x30] sm:$0xff] %vm79, %v1674
    %1678 = vrot.lane.b32.xlu0 %v1671, 96
    %v1679 = vpop.permute.xlu0 %1678
    %1681 = vst.msk [vmem:[#allocation2 + $0x8] sm:$0xff] %vm444, %v1679
    %v1682 = vld [vmem:[#allocation3 + $0x70] sm:$0xff]
    %v1683 = vsel %vm79, %v1674, 0
    %1685 = vmatprep.subr.mxu0 0.0
    %1686 = vmatpush1.msra.mxu0 %v233
    %1687 = vmatprep.subr.mxu0 0.0
    %1688 = vmatpush1.msra.mxu0 %v234
    %1689 = vmatprep.subr.mxu0 0.0
    %1690 = vmatpush1.msra.mxu0 %v235
    %1691 = vmatprep.subr.mxu0 0.0
    %1692 = vmatpush1.msra.mxu0 %v236
    %1693 = vmatprep.subr.mxu0 0.0
    %1694 = vmatpush1.msra.mxu0 0.0
    %1695 = vmatprep.subr.mxu0 0.0
    %1696 = vmatpush1.msra.mxu0 0.0
    %1697 = vmatprep.subr.mxu0 0.0
    %1698 = vmatpush1.msra.mxu0 0.0
    %1699 = vmatprep.subr.mxu0 0.0
    %1700 = vmatpush1.msra.mxu0 0.0
    %1701 = vmatprep.subr.mxu0 0.0
    %1702 = vmatpush1.msra.mxu0 0.0
    %1703 = vmatprep.subr.mxu0 0.0
    %1704 = vmatpush1.msra.mxu0 0.0
    %1705 = vmatprep.subr.mxu0 0.0
    %1706 = vmatpush1.msra.mxu0 0.0
    %1707 = vmatprep.subr.mxu0 0.0
    %1708 = vmatpush1.msra.mxu0 0.0
    %1709 = vmatprep.subr.mxu0 0.0
    %1710 = vmatpush1.msra.mxu0 0.0
    %1711 = vmatprep.subr.mxu0 0.0
    %1712 = vmatpush1.msra.mxu0 0.0
    %1713 = vmatprep.subr.mxu0 0.0
    %1714 = vmatpush1.msra.mxu0 0.0
    %1715 = vmatprep.subr.mxu0 0.0
    %1716 = vmatpush1.msra.mxu0 0.0
    %1717 = vmatprep.subr.mxu0 0.0
    %1718 = vmatpush1.msra.mxu0 0.0
    %1719 = vmatprep.subr.mxu0 0.0
    %1720 = vmatpush1.msra.mxu0 0.0
    %1721 = vmatprep.subr.mxu0 0.0
    %1722 = vmatpush1.msra.mxu0 0.0
    %1723 = vmatprep.subr.mxu0 0.0
    %1724 = vmatpush1.msra.mxu0 0.0
    %1725 = vmatprep.subr.mxu0 0.0
    %1726 = vmatpush1.msra.mxu0 0.0
    %1727 = vmatprep.subr.mxu0 0.0
    %1728 = vmatpush1.msra.mxu0 0.0
    %1729 = vmatprep.subr.mxu0 0.0
    %1730 = vmatpush1.msra.mxu0 0.0
    %1731 = vmatprep.subr.mxu0 0.0
    %1732 = vmatpush1.msra.mxu0 0.0
    %1733 = vmatprep.subr.mxu0 0.0
    %1734 = vmatpush1.msra.mxu0 0.0
    %1735 = vmatprep.subr.mxu0 0.0
    %1736 = vmatpush1.msra.mxu0 0.0
    %1737 = vmatprep.subr.mxu0 0.0
    %1738 = vmatpush1.msra.mxu0 0.0
    %1739 = vmatprep.subr.mxu0 0.0
    %1740 = vmatpush1.msra.mxu0 0.0
    %1741 = vmatprep.subr.mxu0 0.0
    %1742 = vmatpush1.msra.mxu0 0.0
    %1743 = vmatprep.subr.mxu0 0.0
    %1744 = vmatpush1.msra.mxu0 0.0
    %1745 = vmatprep.subr.mxu0 0.0
    %1746 = vmatpush1.msra.mxu0 0.0
    %1747 = vmatprep.subr.mxu0 0.0
    %1748 = vmatpush1.msra.mxu0 0.0
    %1749 = vmatprep.mubr.f32.mxu0 0.0
    %1750 = vmatmul.mubr.f32.gmra.mrb[0].mxu0 %v1683
    %v1751 = vpop.f32.mrb[0].mxu0
    %v1752 = vadd.f32 %v1682, %v1751
    %v1753 = vpop.f32.mrb[0].mxu0
    %1754 = vdwg.mxu0
    %v1755 = vld [vmem:[#allocation3 + $0x8] sm:$0xff]
    %1756 = vrot.lane.b32.xlu0 %v1671, 64
    %v1757 = vpop.permute.xlu0 %1756
    %v1758 = vsel %vm79, %v1757, 0
    %1760 = vmatprep.subr.mxu0 0.0
    %1761 = vmatpush1.msra.mxu0 %v238
    %1762 = vmatprep.subr.mxu0 0.0
    %1763 = vmatpush1.msra.mxu0 %v239
    %1764 = vmatprep.subr.mxu0 0.0
    %1765 = vmatpush1.msra.mxu0 %v240
    %1766 = vmatprep.subr.mxu0 0.0
    %1767 = vmatpush1.msra.mxu0 %v241
    %1768 = vmatprep.subr.mxu0 0.0
    %1769 = vmatpush1.msra.mxu0 0.0
    %1770 = vmatprep.subr.mxu0 0.0
    %1771 = vmatpush1.msra.mxu0 0.0
    %1772 = vmatprep.subr.mxu0 0.0
    %1773 = vmatpush1.msra.mxu0 0.0
    %1774 = vmatprep.subr.mxu0 0.0
    %1775 = vmatpush1.msra.mxu0 0.0
    %1776 = vmatprep.subr.mxu0 0.0
    %1777 = vmatpush1.msra.mxu0 0.0
    %1778 = vmatprep.subr.mxu0 0.0
    %1779 = vmatpush1.msra.mxu0 0.0
    %1780 = vmatprep.subr.mxu0 0.0
    %1781 = vmatpush1.msra.mxu0 0.0
    %1782 = vmatprep.subr.mxu0 0.0
    %1783 = vmatpush1.msra.mxu0 0.0
    %1784 = vmatprep.subr.mxu0 0.0
    %1785 = vmatpush1.msra.mxu0 0.0
    %1786 = vmatprep.subr.mxu0 0.0
    %1787 = vmatpush1.msra.mxu0 0.0
    %1788 = vmatprep.subr.mxu0 0.0
    %1789 = vmatpush1.msra.mxu0 0.0
    %1790 = vmatprep.subr.mxu0 0.0
    %1791 = vmatpush1.msra.mxu0 0.0
    %1792 = vmatprep.subr.mxu0 0.0
    %1793 = vmatpush1.msra.mxu0 0.0
    %1794 = vmatprep.subr.mxu0 0.0
    %1795 = vmatpush1.msra.mxu0 0.0
    %1796 = vmatprep.subr.mxu0 0.0
    %1797 = vmatpush1.msra.mxu0 0.0
    %1798 = vmatprep.subr.mxu0 0.0
    %1799 = vmatpush1.msra.mxu0 0.0
    %1800 = vmatprep.subr.mxu0 0.0
    %1801 = vmatpush1.msra.mxu0 0.0
    %1802 = vmatprep.subr.mxu0 0.0
    %1803 = vmatpush1.msra.mxu0 0.0
    %1804 = vmatprep.subr.mxu0 0.0
    %1805 = vmatpush1.msra.mxu0 0.0
    %1806 = vmatprep.subr.mxu0 0.0
    %1807 = vmatpush1.msra.mxu0 0.0
    %1808 = vmatprep.subr.mxu0 0.0
    %1809 = vmatpush1.msra.mxu0 0.0
    %1810 = vmatprep.subr.mxu0 0.0
    %1811 = vmatpush1.msra.mxu0 0.0
    %1812 = vmatprep.subr.mxu0 0.0
    %1813 = vmatpush1.msra.mxu0 0.0
    %1814 = vmatprep.subr.mxu0 0.0
    %1815 = vmatpush1.msra.mxu0 0.0
    %1816 = vmatprep.subr.mxu0 0.0
    %1817 = vmatpush1.msra.mxu0 0.0
    %1818 = vmatprep.subr.mxu0 0.0
    %1819 = vmatpush1.msra.mxu0 0.0
    %1820 = vmatprep.subr.mxu0 0.0
    %1821 = vmatpush1.msra.mxu0 0.0
    %1822 = vmatprep.subr.mxu0 0.0
    %1823 = vmatpush1.msra.mxu0 0.0
    %1824 = vmatprep.mubr.f32.mxu0 0.0
    %1825 = vmatmul.mubr.f32.gmra.mrb[0].mxu0 %v1758
    %v1826 = vpop.f32.mrb[0].mxu0
    %v1827 = vadd.f32 %v1755, %v1826
    %v1828 = vpop.f32.mrb[0].mxu0
    %1829 = vdwg.mxu0
    %v1830 = vxor.u32 %v1752, 2147483648
    %v1831 = vmul.f32 %v1830, 1.442695
    %v1832 = vpow.pop %v1831
    %v1833 = vadd.f32 %v1832, 1.0
    %v1834 = vrcp.pop %v1833
    %v1835 = vmul.f32 1.0, %v1834
    %v1836 = vtanh.pop %v1752
    %v1837 = vxor.u32 %v1827, 2147483648
    %v1838 = vmul.f32 %v1837, 1.442695
    %v1839 = vpow.pop %v1838
    %v1840 = vadd.f32 %v1839, 1.0
    %v1841 = vrcp.pop %v1840
    %v1842 = vmul.f32 1.0, %v1841
    %v1843 = vtanh.pop %v1827
    %v1844 = vmul.f32 %v1835, %v1648
    %1846 = vrot.lane.b32.xlu0 %v1836, 32
    %v1847 = vpop.permute.xlu0 %1846
    %v1849 = vmul.f32 %v1835, %v1847
    %1851 = vrot.lane.b32.xlu0 %v1849, 32
    %v1852 = vpop.permute.xlu0 %1851
    %v1854 = vadd.f32 %v1844, %v1852
    %v1855 = vtanh.pop %v1854
    %1857 = vrot.lane.b32.xlu0 %v1855, 32
    %v1858 = vpop.permute.xlu0 %1857
    %v1860 = vmul.f32 %v1835, %v1858
    %v1861 = vmul.f32 %v1842, %v1665
    %1863 = vrot.lane.b32.xlu0 %v1843, 32
    %v1864 = vpop.permute.xlu0 %1863
    %v1866 = vmul.f32 %v1842, %v1864
    %1868 = vrot.lane.b32.xlu0 %v1866, 32
    %v1869 = vpop.permute.xlu0 %1868
    %v1871 = vadd.f32 %v1861, %v1869
    %v1872 = vtanh.pop %v1871
    %1874 = vrot.lane.b32.xlu0 %v1872, 32
    %v1875 = vpop.permute.xlu0 %1874
    %v1877 = vmul.f32 %v1842, %v1875
    %1879 = vrot.lane.b32.xlu0 %v1860, 64
    %v1880 = vpop.permute.xlu0 %1879
    %1882 = vst.msk [vmem:[#allocation2 + $0x38] sm:$0xff] %vm79, %v1880
    %1884 = vrot.lane.b32.xlu0 %v1877, 96
    %v1885 = vpop.permute.xlu0 %1884
    %1887 = vst.msk [vmem:[#allocation2] sm:$0xff] %vm444, %v1885
    %1888 = vst.msk [vmem:[%s6] sm:$0xff] %vm79, %v1880
    %1889 = vrot.lane.b32.xlu0 %v1877, 64
    %v1890 = vpop.permute.xlu0 %1889
    %s1892 = scalar_lea.vmem %s6, 8
    %1893 = vst.msk [vmem:[%s1892] sm:$0xff] %vm79, %v1890
    %1895 = vrot.lane.b32.xlu0 %v1854, 96
    %v1896 = vpop.permute.xlu0 %1895
    %1898 = vst.msk [vmem:[%s7] sm:$0xff] %vm79, %v1896
    %1900 = vrot.lane.b32.xlu0 %v1871, 96
    %v1901 = vpop.permute.xlu0 %1900
    %s1903 = scalar_lea.vmem %s7, 8
    %1904 = vst.msk [vmem:[%s1903] sm:$0xff] %vm79, %v1901
    %v1905 = vld [vmem:[#allocation2] sm:$0xff]
    %v1906 = vld [vmem:[#allocation2 + $0x8] sm:$0xff]
    %v1907 = vld [vmem:[#allocation2 + $0x10] sm:$0xff]
    %v1908 = vld [vmem:[#allocation2 + $0x18] sm:$0xff]
    %v1909 = vld [vmem:[#allocation2 + $0x20] sm:$0xff]
    %v1910 = vld [vmem:[#allocation2 + $0x28] sm:$0xff]
    %v1911 = vld [vmem:[#allocation2 + $0x30] sm:$0xff]
    %v1912 = vld [vmem:[#allocation2 + $0x38] sm:$0xff]
    %v1913 = vld [vmem:[#allocation4] sm:$0xff]
    %v1914 = vld [vmem:[#allocation4 + $0x8] sm:$0xff]
    %v1915 = vld [vmem:[#allocation4 + $0x10] sm:$0xff]
    %v1916 = vld [vmem:[#allocation4 + $0x18] sm:$0xff]
    %v1917 = vld [vmem:[#allocation4 + $0x20] sm:$0xff]
    %v1918 = vld [vmem:[#allocation4 + $0x28] sm:$0xff]
    %v1919 = vld [vmem:[#allocation4 + $0x30] sm:$0xff]
    %v1920 = vld [vmem:[#allocation4 + $0x38] sm:$0xff]
    %v1921 = vld [vmem:[#allocation4 + $0x40] sm:$0xff]
    %v1922 = vld [vmem:[#allocation4 + $0x48] sm:$0xff]
    %v1923 = vld [vmem:[#allocation4 + $0x50] sm:$0xff]
    %v1924 = vld [vmem:[#allocation4 + $0x58] sm:$0xff]
    %v1925 = vld [vmem:[#allocation4 + $0x60] sm:$0xff]
    %v1926 = vld [vmem:[#allocation4 + $0x68] sm:$0xff]
    %v1927 = vld [vmem:[#allocation4 + $0x70] sm:$0xff]
    %v1928 = vld [vmem:[#allocation4 + $0x78] sm:$0xff]
    %s1929 = scalar_lea.vmem %s4, 2
    %v1930 = vld [vmem:[%s1929] sm:$0x3]
    %v1932 = vlaneseq
    %v1933 = vshrl.u32 %v1932, 7
    %v1934 = vsub.s32 0, %v1933
    %v1935 = vrot.slane %v1930, %v1934
    %v1936 = vlaneseq
    %v1937 = vshrl.u32 %v1936, 7
    %v1938 = vsub.s32 1, %v1937
    %v1939 = vrot.slane %v1930, %v1938
    %vm1942 = vcmask 523264
    %v1944 = vsel %vm1942, %v1905, 0
    %v1947 = vsel %vm1942, %v1906, 0
    %v1950 = vsel %vm1942, %v1907, 0
    %v1953 = vsel %vm1942, %v1908, 0
    %v1956 = vsel %vm1942, %v1909, 0
    %v1959 = vsel %vm1942, %v1910, 0
    %v1962 = vsel %vm1942, %v1911, 0
    %v1965 = vsel %vm1942, %v1912, 0
    %1967 = vmatprep.subr.mxu0 %v1914
    %1968 = vmatpush1.msra.mxu0 %v1913
    %1969 = vmatprep.subr.mxu0 %v1916
    %1970 = vmatpush1.msra.mxu0 %v1915
    %1971 = vmatprep.subr.mxu0 %v1918
    %1972 = vmatpush1.msra.mxu0 %v1917
    %1973 = vmatprep.subr.mxu0 %v1920
    %1974 = vmatpush1.msra.mxu0 %v1919
    %1975 = vmatprep.subr.mxu0 %v1922
    %1976 = vmatpush1.msra.mxu0 %v1921
    %1977 = vmatprep.subr.mxu0 %v1924
    %1978 = vmatpush1.msra.mxu0 %v1923
    %1979 = vmatprep.subr.mxu0 %v1926
    %1980 = vmatpush1.msra.mxu0 %v1925
    %1981 = vmatprep.subr.mxu0 %v1928
    %1982 = vmatpush1.msra.mxu0 %v1927
    %1983 = vmatprep.subr.mxu0 0.0
    %1984 = vmatpush1.msra.mxu0 0.0
    %1985 = vmatprep.subr.mxu0 0.0
    %1986 = vmatpush1.msra.mxu0 0.0
    %1987 = vmatprep.subr.mxu0 0.0
    %1988 = vmatpush1.msra.mxu0 0.0
    %1989 = vmatprep.subr.mxu0 0.0
    %1990 = vmatpush1.msra.mxu0 0.0
    %1991 = vmatprep.subr.mxu0 0.0
    %1992 = vmatpush1.msra.mxu0 0.0
    %1993 = vmatprep.subr.mxu0 0.0
    %1994 = vmatpush1.msra.mxu0 0.0
    %1995 = vmatprep.subr.mxu0 0.0
    %1996 = vmatpush1.msra.mxu0 0.0
    %1997 = vmatprep.subr.mxu0 0.0
    %1998 = vmatpush1.msra.mxu0 0.0
    %1999 = vmatprep.subr.mxu0 0.0
    %2000 = vmatpush1.msra.mxu0 0.0
    %2001 = vmatprep.subr.mxu0 0.0
    %2002 = vmatpush1.msra.mxu0 0.0
    %2003 = vmatprep.subr.mxu0 0.0
    %2004 = vmatpush1.msra.mxu0 0.0
    %2005 = vmatprep.subr.mxu0 0.0
    %2006 = vmatpush1.msra.mxu0 0.0
    %2007 = vmatprep.subr.mxu0 0.0
    %2008 = vmatpush1.msra.mxu0 0.0
    %2009 = vmatprep.subr.mxu0 0.0
    %2010 = vmatpush1.msra.mxu0 0.0
    %2011 = vmatprep.subr.mxu0 0.0
    %2012 = vmatpush1.msra.mxu0 0.0
    %2013 = vmatprep.subr.mxu0 0.0
    %2014 = vmatpush1.msra.mxu0 0.0
    %2015 = vmatprep.subr.mxu0 0.0
    %2016 = vmatpush1.msra.mxu0 0.0
    %2017 = vmatprep.subr.mxu0 0.0
    %2018 = vmatpush1.msra.mxu0 0.0
    %2019 = vmatprep.subr.mxu0 0.0
    %2020 = vmatpush1.msra.mxu0 0.0
    %2021 = vmatprep.subr.mxu0 0.0
    %2022 = vmatpush1.msra.mxu0 0.0
    %2023 = vmatprep.subr.mxu0 0.0
    %2024 = vmatpush1.msra.mxu0 0.0
    %2025 = vmatprep.subr.mxu0 0.0
    %2026 = vmatpush1.msra.mxu0 0.0
    %2027 = vmatprep.subr.mxu0 0.0
    %2028 = vmatpush1.msra.mxu0 0.0
    %2029 = vmatprep.subr.mxu0 0.0
    %2030 = vmatpush1.msra.mxu0 0.0
    %2031 = vmatprep.mubr.f32.mxu0 0.0
    %2032 = vmatmul.mubr.f32.gmra.mrb[0].mxu0 %v1944
    %v2033 = vpop.f32.mrb[0].mxu0
    %v2034 = vadd.f32 %v1935, %v2033
    %v2035 = vpop.f32.mrb[0].mxu0
    %v2036 = vadd.f32 %v1939, %v2035
    %2037 = vmatprep.mubr.f32.mxu0 0.0
    %2038 = vmatmul.mubr.f32.gmra.mrb[0].mxu0 %v1947
    %v2039 = vpop.f32.mrb[0].mxu0
    %v2040 = vadd.f32 %v1935, %v2039
    %v2041 = vpop.f32.mrb[0].mxu0
    %v2042 = vadd.f32 %v1939, %v2041
    %2043 = vmatprep.mubr.f32.mxu0 0.0
    %2044 = vmatmul.mubr.f32.gmra.mrb[0].mxu0 %v1950
    %v2045 = vpop.f32.mrb[0].mxu0
    %v2046 = vadd.f32 %v1935, %v2045
    %v2047 = vpop.f32.mrb[0].mxu0
    %v2048 = vadd.f32 %v1939, %v2047
    %2049 = vmatprep.mubr.f32.mxu0 0.0
    %2050 = vmatmul.mubr.f32.gmra.mrb[0].mxu0 %v1953
    %v2051 = vpop.f32.mrb[0].mxu0
    %v2052 = vadd.f32 %v1935, %v2051
    %v2053 = vpop.f32.mrb[0].mxu0
    %v2054 = vadd.f32 %v1939, %v2053
    %2055 = vmatprep.mubr.f32.mxu0 0.0
    %2056 = vmatmul.mubr.f32.gmra.mrb[0].mxu0 %v1956
    %v2057 = vpop.f32.mrb[0].mxu0
    %v2058 = vadd.f32 %v1935, %v2057
    %v2059 = vpop.f32.mrb[0].mxu0
    %v2060 = vadd.f32 %v1939, %v2059
    %2061 = vmatprep.mubr.f32.mxu0 0.0
    %2062 = vmatmul.mubr.f32.gmra.mrb[0].mxu0 %v1959
    %v2063 = vpop.f32.mrb[0].mxu0
    %v2064 = vadd.f32 %v1935, %v2063
    %v2065 = vpop.f32.mrb[0].mxu0
    %v2066 = vadd.f32 %v1939, %v2065
    %2067 = vmatprep.mubr.f32.mxu0 0.0
    %2068 = vmatmul.mubr.f32.gmra.mrb[0].mxu0 %v1962
    %v2069 = vpop.f32.mrb[0].mxu0
    %v2070 = vadd.f32 %v1935, %v2069
    %v2071 = vpop.f32.mrb[0].mxu0
    %v2072 = vadd.f32 %v1939, %v2071
    %2073 = vmatprep.mubr.f32.mxu0 0.0
    %2074 = vmatmul.mubr.f32.gmra.mrb[0].mxu0 %v1965
    %v2075 = vpop.f32.mrb[0].mxu0
    %v2076 = vadd.f32 %v1935, %v2075
    %v2077 = vpop.f32.mrb[0].mxu0
    %v2078 = vadd.f32 %v1939, %v2077
    %2079 = vdwg.mxu0
    %2080 = vst [vmem:[#allocation3] sm:$0xff] %v2034
    %2081 = vst [vmem:[#allocation3 + $0x8] sm:$0xff] %v2036
    %2082 = vst [vmem:[#allocation3 + $0x10] sm:$0xff] %v2040
    %2083 = vst [vmem:[#allocation3 + $0x18] sm:$0xff] %v2042
    %2084 = vst [vmem:[#allocation3 + $0x20] sm:$0xff] %v2046
    %2085 = vst [vmem:[#allocation3 + $0x28] sm:$0xff] %v2048
    %2086 = vst [vmem:[#allocation3 + $0x30] sm:$0xff] %v2052
    %2087 = vst [vmem:[#allocation3 + $0x38] sm:$0xff] %v2054
    %2088 = vst [vmem:[#allocation3 + $0x40] sm:$0xff] %v2058
    %2089 = vst [vmem:[#allocation3 + $0x48] sm:$0xff] %v2060
    %2090 = vst [vmem:[#allocation3 + $0x50] sm:$0xff] %v2064
    %2091 = vst [vmem:[#allocation3 + $0x58] sm:$0xff] %v2066
    %2092 = vst [vmem:[#allocation3 + $0x60] sm:$0xff] %v2070
    %2093 = vst [vmem:[#allocation3 + $0x68] sm:$0xff] %v2072
    %2094 = vst [vmem:[#allocation3 + $0x70] sm:$0xff] %v2076
    %2095 = vst [vmem:[#allocation3 + $0x78] sm:$0xff] %v2078
    %s2096 = scalar_lea.vmem [#allocation6], 64
    %v2097 = vld [vmem:[%s2096] sm:$0xff]
    %v2098 = vld [vmem:[%s2096 + $0x8] sm:$0xff]
    %v2099 = vld [vmem:[%s2096 + $0x10] sm:$0xff]
    %v2100 = vld [vmem:[%s2096 + $0x18] sm:$0xff]
    %s2101 = scalar_lea.vmem [#allocation6], 96
    %v2102 = vld [vmem:[%s2101] sm:$0xff]
    %v2103 = vld [vmem:[%s2101 + $0x8] sm:$0xff]
    %v2104 = vld [vmem:[%s2101 + $0x10] sm:$0xff]
    %v2105 = vld [vmem:[%s2101 + $0x18] sm:$0xff]
    %v2106 = vld [vmem:[#allocation3] sm:$0xff]
    %2107 = vmatprep.subr.mxu0 0.0
    %2108 = vmatpush1.msra.mxu0 %v2097
    %2109 = vmatprep.subr.mxu0 0.0
    %2110 = vmatpush1.msra.mxu0 %v2098
    %2111 = vmatprep.subr.mxu0 0.0
    %2112 = vmatpush1.msra.mxu0 %v2099
    %2113 = vmatprep.subr.mxu0 0.0
    %2114 = vmatpush1.msra.mxu0 %v2100
    %2115 = vmatprep.subr.mxu0 0.0
    %2116 = vmatpush1.msra.mxu0 0.0
    %2117 = vmatprep.subr.mxu0 0.0
    %2118 = vmatpush1.msra.mxu0 0.0
    %2119 = vmatprep.subr.mxu0 0.0
    %2120 = vmatpush1.msra.mxu0 0.0
    %2121 = vmatprep.subr.mxu0 0.0
    %2122 = vmatpush1.msra.mxu0 0.0
    %2123 = vmatprep.subr.mxu0 0.0
    %2124 = vmatpush1.msra.mxu0 0.0
    %2125 = vmatprep.subr.mxu0 0.0
    %2126 = vmatpush1.msra.mxu0 0.0
    %2127 = vmatprep.subr.mxu0 0.0
    %2128 = vmatpush1.msra.mxu0 0.0
    %2129 = vmatprep.subr.mxu0 0.0
    %2130 = vmatpush1.msra.mxu0 0.0
    %2131 = vmatprep.subr.mxu0 0.0
    %2132 = vmatpush1.msra.mxu0 0.0
    %2133 = vmatprep.subr.mxu0 0.0
    %2134 = vmatpush1.msra.mxu0 0.0
    %2135 = vmatprep.subr.mxu0 0.0
    %2136 = vmatpush1.msra.mxu0 0.0
    %2137 = vmatprep.subr.mxu0 0.0
    %2138 = vmatpush1.msra.mxu0 0.0
    %2139 = vmatprep.subr.mxu0 0.0
    %2140 = vmatpush1.msra.mxu0 0.0
    %2141 = vmatprep.subr.mxu0 0.0
    %2142 = vmatpush1.msra.mxu0 0.0
    %2143 = vmatprep.subr.mxu0 0.0
    %2144 = vmatpush1.msra.mxu0 0.0
    %2145 = vmatprep.subr.mxu0 0.0
    %2146 = vmatpush1.msra.mxu0 0.0
    %2147 = vmatprep.subr.mxu0 0.0
    %2148 = vmatpush1.msra.mxu0 0.0
    %2149 = vmatprep.subr.mxu0 0.0
    %2150 = vmatpush1.msra.mxu0 0.0
    %2151 = vmatprep.subr.mxu0 0.0
    %2152 = vmatpush1.msra.mxu0 0.0
    %2153 = vmatprep.subr.mxu0 0.0
    %2154 = vmatpush1.msra.mxu0 0.0
    %2155 = vmatprep.subr.mxu0 0.0
    %2156 = vmatpush1.msra.mxu0 0.0
    %2157 = vmatprep.subr.mxu0 0.0
    %2158 = vmatpush1.msra.mxu0 0.0
    %2159 = vmatprep.subr.mxu0 0.0
    %2160 = vmatpush1.msra.mxu0 0.0
    %2161 = vmatprep.subr.mxu0 0.0
    %2162 = vmatpush1.msra.mxu0 0.0
    %2163 = vmatprep.subr.mxu0 0.0
    %2164 = vmatpush1.msra.mxu0 0.0
    %2165 = vmatprep.subr.mxu0 0.0
    %2166 = vmatpush1.msra.mxu0 0.0
    %2167 = vmatprep.subr.mxu0 0.0
    %2168 = vmatpush1.msra.mxu0 0.0
    %2169 = vmatprep.subr.mxu0 0.0
    %2170 = vmatpush1.msra.mxu0 0.0
    %2171 = vmatprep.mubr.f32.mxu0 0.0
    %2172 = vmatmul.mubr.f32.gmra.mrb[0].mxu0 %v244
    %v2173 = vpop.f32.mrb[0].mxu0
    %v2174 = vadd.f32 %v2106, %v2173
    %v2175 = vpop.f32.mrb[0].mxu0
    %2176 = vdwg.mxu0
    %v2177 = vld [vmem:[#allocation3 + $0x78] sm:$0xff]
    %2178 = vmatprep.subr.mxu0 0.0
    %2179 = vmatpush1.msra.mxu0 %v2102
    %2180 = vmatprep.subr.mxu0 0.0
    %2181 = vmatpush1.msra.mxu0 %v2103
    %2182 = vmatprep.subr.mxu0 0.0
    %2183 = vmatpush1.msra.mxu0 %v2104
    %2184 = vmatprep.subr.mxu0 0.0
    %2185 = vmatpush1.msra.mxu0 %v2105
    %2186 = vmatprep.subr.mxu0 0.0
    %2187 = vmatpush1.msra.mxu0 0.0
    %2188 = vmatprep.subr.mxu0 0.0
    %2189 = vmatpush1.msra.mxu0 0.0
    %2190 = vmatprep.subr.mxu0 0.0
    %2191 = vmatpush1.msra.mxu0 0.0
    %2192 = vmatprep.subr.mxu0 0.0
    %2193 = vmatpush1.msra.mxu0 0.0
    %2194 = vmatprep.subr.mxu0 0.0
    %2195 = vmatpush1.msra.mxu0 0.0
    %2196 = vmatprep.subr.mxu0 0.0
    %2197 = vmatpush1.msra.mxu0 0.0
    %2198 = vmatprep.subr.mxu0 0.0
    %2199 = vmatpush1.msra.mxu0 0.0
    %2200 = vmatprep.subr.mxu0 0.0
    %2201 = vmatpush1.msra.mxu0 0.0
    %2202 = vmatprep.subr.mxu0 0.0
    %2203 = vmatpush1.msra.mxu0 0.0
    %2204 = vmatprep.subr.mxu0 0.0
    %2205 = vmatpush1.msra.mxu0 0.0
    %2206 = vmatprep.subr.mxu0 0.0
    %2207 = vmatpush1.msra.mxu0 0.0
    %2208 = vmatprep.subr.mxu0 0.0
    %2209 = vmatpush1.msra.mxu0 0.0
    %2210 = vmatprep.subr.mxu0 0.0
    %2211 = vmatpush1.msra.mxu0 0.0
    %2212 = vmatprep.subr.mxu0 0.0
    %2213 = vmatpush1.msra.mxu0 0.0
    %2214 = vmatprep.subr.mxu0 0.0
    %2215 = vmatpush1.msra.mxu0 0.0
    %2216 = vmatprep.subr.mxu0 0.0
    %2217 = vmatpush1.msra.mxu0 0.0
    %2218 = vmatprep.subr.mxu0 0.0
    %2219 = vmatpush1.msra.mxu0 0.0
    %2220 = vmatprep.subr.mxu0 0.0
    %2221 = vmatpush1.msra.mxu0 0.0
    %2222 = vmatprep.subr.mxu0 0.0
    %2223 = vmatpush1.msra.mxu0 0.0
    %2224 = vmatprep.subr.mxu0 0.0
    %2225 = vmatpush1.msra.mxu0 0.0
    %2226 = vmatprep.subr.mxu0 0.0
    %2227 = vmatpush1.msra.mxu0 0.0
    %2228 = vmatprep.subr.mxu0 0.0
    %2229 = vmatpush1.msra.mxu0 0.0
    %2230 = vmatprep.subr.mxu0 0.0
    %2231 = vmatpush1.msra.mxu0 0.0
    %2232 = vmatprep.subr.mxu0 0.0
    %2233 = vmatpush1.msra.mxu0 0.0
    %2234 = vmatprep.subr.mxu0 0.0
    %2235 = vmatpush1.msra.mxu0 0.0
    %2236 = vmatprep.subr.mxu0 0.0
    %2237 = vmatpush1.msra.mxu0 0.0
    %2238 = vmatprep.subr.mxu0 0.0
    %2239 = vmatpush1.msra.mxu0 0.0
    %2240 = vmatprep.subr.mxu0 0.0
    %2241 = vmatpush1.msra.mxu0 0.0
    %2242 = vmatprep.mubr.f32.mxu0 0.0
    %2243 = vmatmul.mubr.f32.gmra.mrb[0].mxu0 %v244
    %v2244 = vpop.f32.mrb[0].mxu0
    %v2245 = vadd.f32 %v2177, %v2244
    %v2246 = vpop.f32.mrb[0].mxu0
    %2247 = vdwg.mxu0
    %v2248 = vxor.u32 %v2174, 2147483648
    %v2249 = vmul.f32 %v2248, 1.442695
    %v2250 = vpow.pop %v2249
    %v2251 = vadd.f32 %v2250, 1.0
    %v2252 = vrcp.pop %v2251
    %v2253 = vmul.f32 1.0, %v2252
    %v2254 = vtanh.pop %v2174
    %v2255 = vxor.u32 %v2245, 2147483648
    %v2256 = vmul.f32 %v2255, 1.442695
    %v2257 = vpow.pop %v2256
    %v2258 = vadd.f32 %v2257, 1.0
    %v2259 = vrcp.pop %v2258
    %v2260 = vmul.f32 1.0, %v2259
    %v2261 = vtanh.pop %v2245
    %v2262 = vmul.f32 %v2253, 0.0
    %2264 = vrot.lane.b32.xlu0 %v2254, 32
    %v2265 = vpop.permute.xlu0 %2264
    %v2267 = vmul.f32 %v2253, %v2265
    %2269 = vrot.lane.b32.xlu0 %v2267, 32
    %v2270 = vpop.permute.xlu0 %2269
    %v2272 = vadd.f32 %v2262, %v2270
    %v2273 = vtanh.pop %v2272
    %2275 = vrot.lane.b32.xlu0 %v2273, 32
    %v2276 = vpop.permute.xlu0 %2275
    %v2278 = vmul.f32 %v2253, %v2276
    %v2279 = vmul.f32 %v2260, 0.0
    %2281 = vrot.lane.b32.xlu0 %v2261, 32
    %v2282 = vpop.permute.xlu0 %2281
    %v2284 = vmul.f32 %v2260, %v2282
    %2286 = vrot.lane.b32.xlu0 %v2284, 32
    %v2287 = vpop.permute.xlu0 %2286
    %v2289 = vadd.f32 %v2279, %v2287
    %v2290 = vtanh.pop %v2289
    %2292 = vrot.lane.b32.xlu0 %v2290, 32
    %v2293 = vpop.permute.xlu0 %2292
    %v2295 = vmul.f32 %v2260, %v2293
    %2297 = vrot.lane.b32.xlu0 %v2278, 64
    %v2298 = vpop.permute.xlu0 %2297
    %2300 = vst.msk [vmem:[#allocation2] sm:$0xff] %vm79, %v2298
    %2302 = vrot.lane.b32.xlu0 %v2295, 96
    %v2303 = vpop.permute.xlu0 %2302
    %2305 = vst.msk [vmem:[#allocation2 + $0x38] sm:$0xff] %vm444, %v2303
    %v2306 = vld [vmem:[#allocation3 + $0x10] sm:$0xff]
    %v2307 = vsel %vm79, %v2298, 0
    %2309 = vmatprep.subr.mxu0 0.0
    %2310 = vmatpush1.msra.mxu0 %v2097
    %2311 = vmatprep.subr.mxu0 0.0
    %2312 = vmatpush1.msra.mxu0 %v2098
    %2313 = vmatprep.subr.mxu0 0.0
    %2314 = vmatpush1.msra.mxu0 %v2099
    %2315 = vmatprep.subr.mxu0 0.0
    %2316 = vmatpush1.msra.mxu0 %v2100
    %2317 = vmatprep.subr.mxu0 0.0
    %2318 = vmatpush1.msra.mxu0 0.0
    %2319 = vmatprep.subr.mxu0 0.0
    %2320 = vmatpush1.msra.mxu0 0.0
    %2321 = vmatprep.subr.mxu0 0.0
    %2322 = vmatpush1.msra.mxu0 0.0
    %2323 = vmatprep.subr.mxu0 0.0
    %2324 = vmatpush1.msra.mxu0 0.0
    %2325 = vmatprep.subr.mxu0 0.0
    %2326 = vmatpush1.msra.mxu0 0.0
    %2327 = vmatprep.subr.mxu0 0.0
    %2328 = vmatpush1.msra.mxu0 0.0
    %2329 = vmatprep.subr.mxu0 0.0
    %2330 = vmatpush1.msra.mxu0 0.0
    %2331 = vmatprep.subr.mxu0 0.0
    %2332 = vmatpush1.msra.mxu0 0.0
    %2333 = vmatprep.subr.mxu0 0.0
    %2334 = vmatpush1.msra.mxu0 0.0
    %2335 = vmatprep.subr.mxu0 0.0
    %2336 = vmatpush1.msra.mxu0 0.0
    %2337 = vmatprep.subr.mxu0 0.0
    %2338 = vmatpush1.msra.mxu0 0.0
    %2339 = vmatprep.subr.mxu0 0.0
    %2340 = vmatpush1.msra.mxu0 0.0
    %2341 = vmatprep.subr.mxu0 0.0
    %2342 = vmatpush1.msra.mxu0 0.0
    %2343 = vmatprep.subr.mxu0 0.0
    %2344 = vmatpush1.msra.mxu0 0.0
    %2345 = vmatprep.subr.mxu0 0.0
    %2346 = vmatpush1.msra.mxu0 0.0
    %2347 = vmatprep.subr.mxu0 0.0
    %2348 = vmatpush1.msra.mxu0 0.0
    %2349 = vmatprep.subr.mxu0 0.0
    %2350 = vmatpush1.msra.mxu0 0.0
    %2351 = vmatprep.subr.mxu0 0.0
    %2352 = vmatpush1.msra.mxu0 0.0
    %2353 = vmatprep.subr.mxu0 0.0
    %2354 = vmatpush1.msra.mxu0 0.0
    %2355 = vmatprep.subr.mxu0 0.0
    %2356 = vmatpush1.msra.mxu0 0.0
    %2357 = vmatprep.subr.mxu0 0.0
    %2358 = vmatpush1.msra.mxu0 0.0
    %2359 = vmatprep.subr.mxu0 0.0
    %2360 = vmatpush1.msra.mxu0 0.0
    %2361 = vmatprep.subr.mxu0 0.0
    %2362 = vmatpush1.msra.mxu0 0.0
    %2363 = vmatprep.subr.mxu0 0.0
    %2364 = vmatpush1.msra.mxu0 0.0
    %2365 = vmatprep.subr.mxu0 0.0
    %2366 = vmatpush1.msra.mxu0 0.0
    %2367 = vmatprep.subr.mxu0 0.0
    %2368 = vmatpush1.msra.mxu0 0.0
    %2369 = vmatprep.subr.mxu0 0.0
    %2370 = vmatpush1.msra.mxu0 0.0
    %2371 = vmatprep.subr.mxu0 0.0
    %2372 = vmatpush1.msra.mxu0 0.0
    %2373 = vmatprep.mubr.f32.mxu0 0.0
    %2374 = vmatmul.mubr.f32.gmra.mrb[0].mxu0 %v2307
    %v2375 = vpop.f32.mrb[0].mxu0
    %v2376 = vadd.f32 %v2306, %v2375
    %v2377 = vpop.f32.mrb[0].mxu0
    %2378 = vdwg.mxu0
    %v2379 = vld [vmem:[#allocation3 + $0x68] sm:$0xff]
    %2380 = vrot.lane.b32.xlu0 %v2295, 64
    %v2381 = vpop.permute.xlu0 %2380
    %v2382 = vsel %vm79, %v2381, 0
    %2384 = vmatprep.subr.mxu0 0.0
    %2385 = vmatpush1.msra.mxu0 %v2102
    %2386 = vmatprep.subr.mxu0 0.0
    %2387 = vmatpush1.msra.mxu0 %v2103
    %2388 = vmatprep.subr.mxu0 0.0
    %2389 = vmatpush1.msra.mxu0 %v2104
    %2390 = vmatprep.subr.mxu0 0.0
    %2391 = vmatpush1.msra.mxu0 %v2105
    %2392 = vmatprep.subr.mxu0 0.0
    %2393 = vmatpush1.msra.mxu0 0.0
    %2394 = vmatprep.subr.mxu0 0.0
    %2395 = vmatpush1.msra.mxu0 0.0
    %2396 = vmatprep.subr.mxu0 0.0
    %2397 = vmatpush1.msra.mxu0 0.0
    %2398 = vmatprep.subr.mxu0 0.0
    %2399 = vmatpush1.msra.mxu0 0.0
    %2400 = vmatprep.subr.mxu0 0.0
    %2401 = vmatpush1.msra.mxu0 0.0
    %2402 = vmatprep.subr.mxu0 0.0
    %2403 = vmatpush1.msra.mxu0 0.0
    %2404 = vmatprep.subr.mxu0 0.0
    %2405 = vmatpush1.msra.mxu0 0.0
    %2406 = vmatprep.subr.mxu0 0.0
    %2407 = vmatpush1.msra.mxu0 0.0
    %2408 = vmatprep.subr.mxu0 0.0
    %2409 = vmatpush1.msra.mxu0 0.0
    %2410 = vmatprep.subr.mxu0 0.0
    %2411 = vmatpush1.msra.mxu0 0.0
    %2412 = vmatprep.subr.mxu0 0.0
    %2413 = vmatpush1.msra.mxu0 0.0
    %2414 = vmatprep.subr.mxu0 0.0
    %2415 = vmatpush1.msra.mxu0 0.0
    %2416 = vmatprep.subr.mxu0 0.0
    %2417 = vmatpush1.msra.mxu0 0.0
    %2418 = vmatprep.subr.mxu0 0.0
    %2419 = vmatpush1.msra.mxu0 0.0
    %2420 = vmatprep.subr.mxu0 0.0
    %2421 = vmatpush1.msra.mxu0 0.0
    %2422 = vmatprep.subr.mxu0 0.0
    %2423 = vmatpush1.msra.mxu0 0.0
    %2424 = vmatprep.subr.mxu0 0.0
    %2425 = vmatpush1.msra.mxu0 0.0
    %2426 = vmatprep.subr.mxu0 0.0
    %2427 = vmatpush1.msra.mxu0 0.0
    %2428 = vmatprep.subr.mxu0 0.0
    %2429 = vmatpush1.msra.mxu0 0.0
    %2430 = vmatprep.subr.mxu0 0.0
    %2431 = vmatpush1.msra.mxu0 0.0
    %2432 = vmatprep.subr.mxu0 0.0
    %2433 = vmatpush1.msra.mxu0 0.0
    %2434 = vmatprep.subr.mxu0 0.0
    %2435 = vmatpush1.msra.mxu0 0.0
    %2436 = vmatprep.subr.mxu0 0.0
    %2437 = vmatpush1.msra.mxu0 0.0
    %2438 = vmatprep.subr.mxu0 0.0
    %2439 = vmatpush1.msra.mxu0 0.0
    %2440 = vmatprep.subr.mxu0 0.0
    %2441 = vmatpush1.msra.mxu0 0.0
    %2442 = vmatprep.subr.mxu0 0.0
    %2443 = vmatpush1.msra.mxu0 0.0
    %2444 = vmatprep.subr.mxu0 0.0
    %2445 = vmatpush1.msra.mxu0 0.0
    %2446 = vmatprep.subr.mxu0 0.0
    %2447 = vmatpush1.msra.mxu0 0.0
    %2448 = vmatprep.mubr.f32.mxu0 0.0
    %2449 = vmatmul.mubr.f32.gmra.mrb[0].mxu0 %v2382
    %v2450 = vpop.f32.mrb[0].mxu0
    %v2451 = vadd.f32 %v2379, %v2450
    %v2452 = vpop.f32.mrb[0].mxu0
    %2453 = vdwg.mxu0
    %v2454 = vxor.u32 %v2376, 2147483648
    %v2455 = vmul.f32 %v2454, 1.442695
    %v2456 = vpow.pop %v2455
    %v2457 = vadd.f32 %v2456, 1.0
    %v2458 = vrcp.pop %v2457
    %v2459 = vmul.f32 1.0, %v2458
    %v2460 = vtanh.pop %v2376
    %v2461 = vxor.u32 %v2451, 2147483648
    %v2462 = vmul.f32 %v2461, 1.442695
    %v2463 = vpow.pop %v2462
    %v2464 = vadd.f32 %v2463, 1.0
    %v2465 = vrcp.pop %v2464
    %v2466 = vmul.f32 1.0, %v2465
    %v2467 = vtanh.pop %v2451
    %v2468 = vmul.f32 %v2459, %v2272
    %2470 = vrot.lane.b32.xlu0 %v2460, 32
    %v2471 = vpop.permute.xlu0 %2470
    %v2473 = vmul.f32 %v2459, %v2471
    %2475 = vrot.lane.b32.xlu0 %v2473, 32
    %v2476 = vpop.permute.xlu0 %2475
    %v2478 = vadd.f32 %v2468, %v2476
    %v2479 = vtanh.pop %v2478
    %2481 = vrot.lane.b32.xlu0 %v2479, 32
    %v2482 = vpop.permute.xlu0 %2481
    %v2484 = vmul.f32 %v2459, %v2482
    %v2485 = vmul.f32 %v2466, %v2289
    %2487 = vrot.lane.b32.xlu0 %v2467, 32
    %v2488 = vpop.permute.xlu0 %2487
    %v2490 = vmul.f32 %v2466, %v2488
    %2492 = vrot.lane.b32.xlu0 %v2490, 32
    %v2493 = vpop.permute.xlu0 %2492
    %v2495 = vadd.f32 %v2485, %v2493
    %v2496 = vtanh.pop %v2495
    %2498 = vrot.lane.b32.xlu0 %v2496, 32
    %v2499 = vpop.permute.xlu0 %2498
    %v2501 = vmul.f32 %v2466, %v2499
    %2503 = vrot.lane.b32.xlu0 %v2484, 64
    %v2504 = vpop.permute.xlu0 %2503
    %2506 = vst.msk [vmem:[#allocation2 + $0x8] sm:$0xff] %vm79, %v2504
    %2508 = vrot.lane.b32.xlu0 %v2501, 96
    %v2509 = vpop.permute.xlu0 %2508
    %2511 = vst.msk [vmem:[#allocation2 + $0x30] sm:$0xff] %vm444, %v2509
    %v2512 = vld [vmem:[#allocation3 + $0x20] sm:$0xff]
    %v2513 = vsel %vm79, %v2504, 0
    %2515 = vmatprep.subr.mxu0 0.0
    %2516 = vmatpush1.msra.mxu0 %v2097
    %2517 = vmatprep.subr.mxu0 0.0
    %2518 = vmatpush1.msra.mxu0 %v2098
    %2519 = vmatprep.subr.mxu0 0.0
    %2520 = vmatpush1.msra.mxu0 %v2099
    %2521 = vmatprep.subr.mxu0 0.0
    %2522 = vmatpush1.msra.mxu0 %v2100
    %2523 = vmatprep.subr.mxu0 0.0
    %2524 = vmatpush1.msra.mxu0 0.0
    %2525 = vmatprep.subr.mxu0 0.0
    %2526 = vmatpush1.msra.mxu0 0.0
    %2527 = vmatprep.subr.mxu0 0.0
    %2528 = vmatpush1.msra.mxu0 0.0
    %2529 = vmatprep.subr.mxu0 0.0
    %2530 = vmatpush1.msra.mxu0 0.0
    %2531 = vmatprep.subr.mxu0 0.0
    %2532 = vmatpush1.msra.mxu0 0.0
    %2533 = vmatprep.subr.mxu0 0.0
    %2534 = vmatpush1.msra.mxu0 0.0
    %2535 = vmatprep.subr.mxu0 0.0
    %2536 = vmatpush1.msra.mxu0 0.0
    %2537 = vmatprep.subr.mxu0 0.0
    %2538 = vmatpush1.msra.mxu0 0.0
    %2539 = vmatprep.subr.mxu0 0.0
    %2540 = vmatpush1.msra.mxu0 0.0
    %2541 = vmatprep.subr.mxu0 0.0
    %2542 = vmatpush1.msra.mxu0 0.0
    %2543 = vmatprep.subr.mxu0 0.0
    %2544 = vmatpush1.msra.mxu0 0.0
    %2545 = vmatprep.subr.mxu0 0.0
    %2546 = vmatpush1.msra.mxu0 0.0
    %2547 = vmatprep.subr.mxu0 0.0
    %2548 = vmatpush1.msra.mxu0 0.0
    %2549 = vmatprep.subr.mxu0 0.0
    %2550 = vmatpush1.msra.mxu0 0.0
    %2551 = vmatprep.subr.mxu0 0.0
    %2552 = vmatpush1.msra.mxu0 0.0
    %2553 = vmatprep.subr.mxu0 0.0
    %2554 = vmatpush1.msra.mxu0 0.0
    %2555 = vmatprep.subr.mxu0 0.0
    %2556 = vmatpush1.msra.mxu0 0.0
    %2557 = vmatprep.subr.mxu0 0.0
    %2558 = vmatpush1.msra.mxu0 0.0
    %2559 = vmatprep.subr.mxu0 0.0
    %2560 = vmatpush1.msra.mxu0 0.0
    %2561 = vmatprep.subr.mxu0 0.0
    %2562 = vmatpush1.msra.mxu0 0.0
    %2563 = vmatprep.subr.mxu0 0.0
    %2564 = vmatpush1.msra.mxu0 0.0
    %2565 = vmatprep.subr.mxu0 0.0
    %2566 = vmatpush1.msra.mxu0 0.0
    %2567 = vmatprep.subr.mxu0 0.0
    %2568 = vmatpush1.msra.mxu0 0.0
    %2569 = vmatprep.subr.mxu0 0.0
    %2570 = vmatpush1.msra.mxu0 0.0
    %2571 = vmatprep.subr.mxu0 0.0
    %2572 = vmatpush1.msra.mxu0 0.0
    %2573 = vmatprep.subr.mxu0 0.0
    %2574 = vmatpush1.msra.mxu0 0.0
    %2575 = vmatprep.subr.mxu0 0.0
    %2576 = vmatpush1.msra.mxu0 0.0
    %2577 = vmatprep.subr.mxu0 0.0
    %2578 = vmatpush1.msra.mxu0 0.0
    %2579 = vmatprep.mubr.f32.mxu0 0.0
    %2580 = vmatmul.mubr.f32.gmra.mrb[0].mxu0 %v2513
    %v2581 = vpop.f32.mrb[0].mxu0
    %v2582 = vadd.f32 %v2512, %v2581
    %v2583 = vpop.f32.mrb[0].mxu0
    %2584 = vdwg.mxu0
    %v2585 = vld [vmem:[#allocation3 + $0x58] sm:$0xff]
    %2586 = vrot.lane.b32.xlu0 %v2501, 64
    %v2587 = vpop.permute.xlu0 %2586
    %v2588 = vsel %vm79, %v2587, 0
    %2590 = vmatprep.subr.mxu0 0.0
    %2591 = vmatpush1.msra.mxu0 %v2102
    %2592 = vmatprep.subr.mxu0 0.0
    %2593 = vmatpush1.msra.mxu0 %v2103
    %2594 = vmatprep.subr.mxu0 0.0
    %2595 = vmatpush1.msra.mxu0 %v2104
    %2596 = vmatprep.subr.mxu0 0.0
    %2597 = vmatpush1.msra.mxu0 %v2105
    %2598 = vmatprep.subr.mxu0 0.0
    %2599 = vmatpush1.msra.mxu0 0.0
    %2600 = vmatprep.subr.mxu0 0.0
    %2601 = vmatpush1.msra.mxu0 0.0
    %2602 = vmatprep.subr.mxu0 0.0
    %2603 = vmatpush1.msra.mxu0 0.0
    %2604 = vmatprep.subr.mxu0 0.0
    %2605 = vmatpush1.msra.mxu0 0.0
    %2606 = vmatprep.subr.mxu0 0.0
    %2607 = vmatpush1.msra.mxu0 0.0
    %2608 = vmatprep.subr.mxu0 0.0
    %2609 = vmatpush1.msra.mxu0 0.0
    %2610 = vmatprep.subr.mxu0 0.0
    %2611 = vmatpush1.msra.mxu0 0.0
    %2612 = vmatprep.subr.mxu0 0.0
    %2613 = vmatpush1.msra.mxu0 0.0
    %2614 = vmatprep.subr.mxu0 0.0
    %2615 = vmatpush1.msra.mxu0 0.0
    %2616 = vmatprep.subr.mxu0 0.0
    %2617 = vmatpush1.msra.mxu0 0.0
    %2618 = vmatprep.subr.mxu0 0.0
    %2619 = vmatpush1.msra.mxu0 0.0
    %2620 = vmatprep.subr.mxu0 0.0
    %2621 = vmatpush1.msra.mxu0 0.0
    %2622 = vmatprep.subr.mxu0 0.0
    %2623 = vmatpush1.msra.mxu0 0.0
    %2624 = vmatprep.subr.mxu0 0.0
    %2625 = vmatpush1.msra.mxu0 0.0
    %2626 = vmatprep.subr.mxu0 0.0
    %2627 = vmatpush1.msra.mxu0 0.0
    %2628 = vmatprep.subr.mxu0 0.0
    %2629 = vmatpush1.msra.mxu0 0.0
    %2630 = vmatprep.subr.mxu0 0.0
    %2631 = vmatpush1.msra.mxu0 0.0
    %2632 = vmatprep.subr.mxu0 0.0
    %2633 = vmatpush1.msra.mxu0 0.0
    %2634 = vmatprep.subr.mxu0 0.0
    %2635 = vmatpush1.msra.mxu0 0.0
    %2636 = vmatprep.subr.mxu0 0.0
    %2637 = vmatpush1.msra.mxu0 0.0
    %2638 = vmatprep.subr.mxu0 0.0
    %2639 = vmatpush1.msra.mxu0 0.0
    %2640 = vmatprep.subr.mxu0 0.0
    %2641 = vmatpush1.msra.mxu0 0.0
    %2642 = vmatprep.subr.mxu0 0.0
    %2643 = vmatpush1.msra.mxu0 0.0
    %2644 = vmatprep.subr.mxu0 0.0
    %2645 = vmatpush1.msra.mxu0 0.0
    %2646 = vmatprep.subr.mxu0 0.0
    %2647 = vmatpush1.msra.mxu0 0.0
    %2648 = vmatprep.subr.mxu0 0.0
    %2649 = vmatpush1.msra.mxu0 0.0
    %2650 = vmatprep.subr.mxu0 0.0
    %2651 = vmatpush1.msra.mxu0 0.0
    %2652 = vmatprep.subr.mxu0 0.0
    %2653 = vmatpush1.msra.mxu0 0.0
    %2654 = vmatprep.mubr.f32.mxu0 0.0
    %2655 = vmatmul.mubr.f32.gmra.mrb[0].mxu0 %v2588
    %v2656 = vpop.f32.mrb[0].mxu0
    %v2657 = vadd.f32 %v2585, %v2656
    %v2658 = vpop.f32.mrb[0].mxu0
    %2659 = vdwg.mxu0
    %v2660 = vxor.u32 %v2582, 2147483648
    %v2661 = vmul.f32 %v2660, 1.442695
    %v2662 = vpow.pop %v2661
    %v2663 = vadd.f32 %v2662, 1.0
    %v2664 = vrcp.pop %v2663
    %v2665 = vmul.f32 1.0, %v2664
    %v2666 = vtanh.pop %v2582
    %v2667 = vxor.u32 %v2657, 2147483648
    %v2668 = vmul.f32 %v2667, 1.442695
    %v2669 = vpow.pop %v2668
    %v2670 = vadd.f32 %v2669, 1.0
    %v2671 = vrcp.pop %v2670
    %v2672 = vmul.f32 1.0, %v2671
    %v2673 = vtanh.pop %v2657
    %v2674 = vmul.f32 %v2665, %v2478
    %2676 = vrot.lane.b32.xlu0 %v2666, 32
    %v2677 = vpop.permute.xlu0 %2676
    %v2679 = vmul.f32 %v2665, %v2677
    %2681 = vrot.lane.b32.xlu0 %v2679, 32
    %v2682 = vpop.permute.xlu0 %2681
    %v2684 = vadd.f32 %v2674, %v2682
    %v2685 = vtanh.pop %v2684
    %2687 = vrot.lane.b32.xlu0 %v2685, 32
    %v2688 = vpop.permute.xlu0 %2687
    %v2690 = vmul.f32 %v2665, %v2688
    %v2691 = vmul.f32 %v2672, %v2495
    %2693 = vrot.lane.b32.xlu0 %v2673, 32
    %v2694 = vpop.permute.xlu0 %2693
    %v2696 = vmul.f32 %v2672, %v2694
    %2698 = vrot.lane.b32.xlu0 %v2696, 32
    %v2699 = vpop.permute.xlu0 %2698
    %v2701 = vadd.f32 %v2691, %v2699
    %v2702 = vtanh.pop %v2701
    %2704 = vrot.lane.b32.xlu0 %v2702, 32
    %v2705 = vpop.permute.xlu0 %2704
    %v2707 = vmul.f32 %v2672, %v2705
    %2709 = vrot.lane.b32.xlu0 %v2690, 64
    %v2710 = vpop.permute.xlu0 %2709
    %2712 = vst.msk [vmem:[#allocation2 + $0x10] sm:$0xff] %vm79, %v2710
    %2714 = vrot.lane.b32.xlu0 %v2707, 96
    %v2715 = vpop.permute.xlu0 %2714
    %2717 = vst.msk [vmem:[#allocation2 + $0x28] sm:$0xff] %vm444, %v2715
    %v2718 = vld [vmem:[#allocation3 + $0x30] sm:$0xff]
    %v2719 = vsel %vm79, %v2710, 0
    %2721 = vmatprep.subr.mxu0 0.0
    %2722 = vmatpush1.msra.mxu0 %v2097
    %2723 = vmatprep.subr.mxu0 0.0
    %2724 = vmatpush1.msra.mxu0 %v2098
    %2725 = vmatprep.subr.mxu0 0.0
    %2726 = vmatpush1.msra.mxu0 %v2099
    %2727 = vmatprep.subr.mxu0 0.0
    %2728 = vmatpush1.msra.mxu0 %v2100
    %2729 = vmatprep.subr.mxu0 0.0
    %2730 = vmatpush1.msra.mxu0 0.0
    %2731 = vmatprep.subr.mxu0 0.0
    %2732 = vmatpush1.msra.mxu0 0.0
    %2733 = vmatprep.subr.mxu0 0.0
    %2734 = vmatpush1.msra.mxu0 0.0
    %2735 = vmatprep.subr.mxu0 0.0
    %2736 = vmatpush1.msra.mxu0 0.0
    %2737 = vmatprep.subr.mxu0 0.0
    %2738 = vmatpush1.msra.mxu0 0.0
    %2739 = vmatprep.subr.mxu0 0.0
    %2740 = vmatpush1.msra.mxu0 0.0
    %2741 = vmatprep.subr.mxu0 0.0
    %2742 = vmatpush1.msra.mxu0 0.0
    %2743 = vmatprep.subr.mxu0 0.0
    %2744 = vmatpush1.msra.mxu0 0.0
    %2745 = vmatprep.subr.mxu0 0.0
    %2746 = vmatpush1.msra.mxu0 0.0
    %2747 = vmatprep.subr.mxu0 0.0
    %2748 = vmatpush1.msra.mxu0 0.0
    %2749 = vmatprep.subr.mxu0 0.0
    %2750 = vmatpush1.msra.mxu0 0.0
    %2751 = vmatprep.subr.mxu0 0.0
    %2752 = vmatpush1.msra.mxu0 0.0
    %2753 = vmatprep.subr.mxu0 0.0
    %2754 = vmatpush1.msra.mxu0 0.0
    %2755 = vmatprep.subr.mxu0 0.0
    %2756 = vmatpush1.msra.mxu0 0.0
    %2757 = vmatprep.subr.mxu0 0.0
    %2758 = vmatpush1.msra.mxu0 0.0
    %2759 = vmatprep.subr.mxu0 0.0
    %2760 = vmatpush1.msra.mxu0 0.0
    %2761 = vmatprep.subr.mxu0 0.0
    %2762 = vmatpush1.msra.mxu0 0.0
    %2763 = vmatprep.subr.mxu0 0.0
    %2764 = vmatpush1.msra.mxu0 0.0
    %2765 = vmatprep.subr.mxu0 0.0
    %2766 = vmatpush1.msra.mxu0 0.0
    %2767 = vmatprep.subr.mxu0 0.0
    %2768 = vmatpush1.msra.mxu0 0.0
    %2769 = vmatprep.subr.mxu0 0.0
    %2770 = vmatpush1.msra.mxu0 0.0
    %2771 = vmatprep.subr.mxu0 0.0
    %2772 = vmatpush1.msra.mxu0 0.0
    %2773 = vmatprep.subr.mxu0 0.0
    %2774 = vmatpush1.msra.mxu0 0.0
    %2775 = vmatprep.subr.mxu0 0.0
    %2776 = vmatpush1.msra.mxu0 0.0
    %2777 = vmatprep.subr.mxu0 0.0
    %2778 = vmatpush1.msra.mxu0 0.0
    %2779 = vmatprep.subr.mxu0 0.0
    %2780 = vmatpush1.msra.mxu0 0.0
    %2781 = vmatprep.subr.mxu0 0.0
    %2782 = vmatpush1.msra.mxu0 0.0
    %2783 = vmatprep.subr.mxu0 0.0
    %2784 = vmatpush1.msra.mxu0 0.0
    %2785 = vmatprep.mubr.f32.mxu0 0.0
    %2786 = vmatmul.mubr.f32.gmra.mrb[0].mxu0 %v2719
    %v2787 = vpop.f32.mrb[0].mxu0
    %v2788 = vadd.f32 %v2718, %v2787
    %v2789 = vpop.f32.mrb[0].mxu0
    %2790 = vdwg.mxu0
    %v2791 = vld [vmem:[#allocation3 + $0x48] sm:$0xff]
    %2792 = vrot.lane.b32.xlu0 %v2707, 64
    %v2793 = vpop.permute.xlu0 %2792
    %v2794 = vsel %vm79, %v2793, 0
    %2796 = vmatprep.subr.mxu0 0.0
    %2797 = vmatpush1.msra.mxu0 %v2102
    %2798 = vmatprep.subr.mxu0 0.0
    %2799 = vmatpush1.msra.mxu0 %v2103
    %2800 = vmatprep.subr.mxu0 0.0
    %2801 = vmatpush1.msra.mxu0 %v2104
    %2802 = vmatprep.subr.mxu0 0.0
    %2803 = vmatpush1.msra.mxu0 %v2105
    %2804 = vmatprep.subr.mxu0 0.0
    %2805 = vmatpush1.msra.mxu0 0.0
    %2806 = vmatprep.subr.mxu0 0.0
    %2807 = vmatpush1.msra.mxu0 0.0
    %2808 = vmatprep.subr.mxu0 0.0
    %2809 = vmatpush1.msra.mxu0 0.0
    %2810 = vmatprep.subr.mxu0 0.0
    %2811 = vmatpush1.msra.mxu0 0.0
    %2812 = vmatprep.subr.mxu0 0.0
    %2813 = vmatpush1.msra.mxu0 0.0
    %2814 = vmatprep.subr.mxu0 0.0
    %2815 = vmatpush1.msra.mxu0 0.0
    %2816 = vmatprep.subr.mxu0 0.0
    %2817 = vmatpush1.msra.mxu0 0.0
    %2818 = vmatprep.subr.mxu0 0.0
    %2819 = vmatpush1.msra.mxu0 0.0
    %2820 = vmatprep.subr.mxu0 0.0
    %2821 = vmatpush1.msra.mxu0 0.0
    %2822 = vmatprep.subr.mxu0 0.0
    %2823 = vmatpush1.msra.mxu0 0.0
    %2824 = vmatprep.subr.mxu0 0.0
    %2825 = vmatpush1.msra.mxu0 0.0
    %2826 = vmatprep.subr.mxu0 0.0
    %2827 = vmatpush1.msra.mxu0 0.0
    %2828 = vmatprep.subr.mxu0 0.0
    %2829 = vmatpush1.msra.mxu0 0.0
    %2830 = vmatprep.subr.mxu0 0.0
    %2831 = vmatpush1.msra.mxu0 0.0
    %2832 = vmatprep.subr.mxu0 0.0
    %2833 = vmatpush1.msra.mxu0 0.0
    %2834 = vmatprep.subr.mxu0 0.0
    %2835 = vmatpush1.msra.mxu0 0.0
    %2836 = vmatprep.subr.mxu0 0.0
    %2837 = vmatpush1.msra.mxu0 0.0
    %2838 = vmatprep.subr.mxu0 0.0
    %2839 = vmatpush1.msra.mxu0 0.0
    %2840 = vmatprep.subr.mxu0 0.0
    %2841 = vmatpush1.msra.mxu0 0.0
    %2842 = vmatprep.subr.mxu0 0.0
    %2843 = vmatpush1.msra.mxu0 0.0
    %2844 = vmatprep.subr.mxu0 0.0
    %2845 = vmatpush1.msra.mxu0 0.0
    %2846 = vmatprep.subr.mxu0 0.0
    %2847 = vmatpush1.msra.mxu0 0.0
    %2848 = vmatprep.subr.mxu0 0.0
    %2849 = vmatpush1.msra.mxu0 0.0
    %2850 = vmatprep.subr.mxu0 0.0
    %2851 = vmatpush1.msra.mxu0 0.0
    %2852 = vmatprep.subr.mxu0 0.0
    %2853 = vmatpush1.msra.mxu0 0.0
    %2854 = vmatprep.subr.mxu0 0.0
    %2855 = vmatpush1.msra.mxu0 0.0
    %2856 = vmatprep.subr.mxu0 0.0
    %2857 = vmatpush1.msra.mxu0 0.0
    %2858 = vmatprep.subr.mxu0 0.0
    %2859 = vmatpush1.msra.mxu0 0.0
    %2860 = vmatprep.mubr.f32.mxu0 0.0
    %2861 = vmatmul.mubr.f32.gmra.mrb[0].mxu0 %v2794
    %v2862 = vpop.f32.mrb[0].mxu0
    %v2863 = vadd.f32 %v2791, %v2862
    %v2864 = vpop.f32.mrb[0].mxu0
    %2865 = vdwg.mxu0
    %v2866 = vxor.u32 %v2788, 2147483648
    %v2867 = vmul.f32 %v2866, 1.442695
    %v2868 = vpow.pop %v2867
    %v2869 = vadd.f32 %v2868, 1.0
    %v2870 = vrcp.pop %v2869
    %v2871 = vmul.f32 1.0, %v2870
    %v2872 = vtanh.pop %v2788
    %v2873 = vxor.u32 %v2863, 2147483648
    %v2874 = vmul.f32 %v2873, 1.442695
    %v2875 = vpow.pop %v2874
    %v2876 = vadd.f32 %v2875, 1.0
    %v2877 = vrcp.pop %v2876
    %v2878 = vmul.f32 1.0, %v2877
    %v2879 = vtanh.pop %v2863
    %v2880 = vmul.f32 %v2871, %v2684
    %2882 = vrot.lane.b32.xlu0 %v2872, 32
    %v2883 = vpop.permute.xlu0 %2882
    %v2885 = vmul.f32 %v2871, %v2883
    %2887 = vrot.lane.b32.xlu0 %v2885, 32
    %v2888 = vpop.permute.xlu0 %2887
    %v2890 = vadd.f32 %v2880, %v2888
    %v2891 = vtanh.pop %v2890
    %2893 = vrot.lane.b32.xlu0 %v2891, 32
    %v2894 = vpop.permute.xlu0 %2893
    %v2896 = vmul.f32 %v2871, %v2894
    %v2897 = vmul.f32 %v2878, %v2701
    %2899 = vrot.lane.b32.xlu0 %v2879, 32
    %v2900 = vpop.permute.xlu0 %2899
    %v2902 = vmul.f32 %v2878, %v2900
    %2904 = vrot.lane.b32.xlu0 %v2902, 32
    %v2905 = vpop.permute.xlu0 %2904
    %v2907 = vadd.f32 %v2897, %v2905
    %v2908 = vtanh.pop %v2907
    %2910 = vrot.lane.b32.xlu0 %v2908, 32
    %v2911 = vpop.permute.xlu0 %2910
    %v2913 = vmul.f32 %v2878, %v2911
    %2915 = vrot.lane.b32.xlu0 %v2896, 64
    %v2916 = vpop.permute.xlu0 %2915
    %2918 = vst.msk [vmem:[#allocation2 + $0x18] sm:$0xff] %vm79, %v2916
    %2920 = vrot.lane.b32.xlu0 %v2913, 96
    %v2921 = vpop.permute.xlu0 %2920
    %2923 = vst.msk [vmem:[#allocation2 + $0x20] sm:$0xff] %vm444, %v2921
    %v2924 = vld [vmem:[#allocation3 + $0x40] sm:$0xff]
    %v2925 = vsel %vm79, %v2916, 0
    %2927 = vmatprep.subr.mxu0 0.0
    %2928 = vmatpush1.msra.mxu0 %v2097
    %2929 = vmatprep.subr.mxu0 0.0
    %2930 = vmatpush1.msra.mxu0 %v2098
    %2931 = vmatprep.subr.mxu0 0.0
    %2932 = vmatpush1.msra.mxu0 %v2099
    %2933 = vmatprep.subr.mxu0 0.0
    %2934 = vmatpush1.msra.mxu0 %v2100
    %2935 = vmatprep.subr.mxu0 0.0
    %2936 = vmatpush1.msra.mxu0 0.0
    %2937 = vmatprep.subr.mxu0 0.0
    %2938 = vmatpush1.msra.mxu0 0.0
    %2939 = vmatprep.subr.mxu0 0.0
    %2940 = vmatpush1.msra.mxu0 0.0
    %2941 = vmatprep.subr.mxu0 0.0
    %2942 = vmatpush1.msra.mxu0 0.0
    %2943 = vmatprep.subr.mxu0 0.0
    %2944 = vmatpush1.msra.mxu0 0.0
    %2945 = vmatprep.subr.mxu0 0.0
    %2946 = vmatpush1.msra.mxu0 0.0
    %2947 = vmatprep.subr.mxu0 0.0
    %2948 = vmatpush1.msra.mxu0 0.0
    %2949 = vmatprep.subr.mxu0 0.0
    %2950 = vmatpush1.msra.mxu0 0.0
    %2951 = vmatprep.subr.mxu0 0.0
    %2952 = vmatpush1.msra.mxu0 0.0
    %2953 = vmatprep.subr.mxu0 0.0
    %2954 = vmatpush1.msra.mxu0 0.0
    %2955 = vmatprep.subr.mxu0 0.0
    %2956 = vmatpush1.msra.mxu0 0.0
    %2957 = vmatprep.subr.mxu0 0.0
    %2958 = vmatpush1.msra.mxu0 0.0
    %2959 = vmatprep.subr.mxu0 0.0
    %2960 = vmatpush1.msra.mxu0 0.0
    %2961 = vmatprep.subr.mxu0 0.0
    %2962 = vmatpush1.msra.mxu0 0.0
    %2963 = vmatprep.subr.mxu0 0.0
    %2964 = vmatpush1.msra.mxu0 0.0
    %2965 = vmatprep.subr.mxu0 0.0
    %2966 = vmatpush1.msra.mxu0 0.0
    %2967 = vmatprep.subr.mxu0 0.0
    %2968 = vmatpush1.msra.mxu0 0.0
    %2969 = vmatprep.subr.mxu0 0.0
    %2970 = vmatpush1.msra.mxu0 0.0
    %2971 = vmatprep.subr.mxu0 0.0
    %2972 = vmatpush1.msra.mxu0 0.0
    %2973 = vmatprep.subr.mxu0 0.0
    %2974 = vmatpush1.msra.mxu0 0.0
    %2975 = vmatprep.subr.mxu0 0.0
    %2976 = vmatpush1.msra.mxu0 0.0
    %2977 = vmatprep.subr.mxu0 0.0
    %2978 = vmatpush1.msra.mxu0 0.0
    %2979 = vmatprep.subr.mxu0 0.0
    %2980 = vmatpush1.msra.mxu0 0.0
    %2981 = vmatprep.subr.mxu0 0.0
    %2982 = vmatpush1.msra.mxu0 0.0
    %2983 = vmatprep.subr.mxu0 0.0
    %2984 = vmatpush1.msra.mxu0 0.0
    %2985 = vmatprep.subr.mxu0 0.0
    %2986 = vmatpush1.msra.mxu0 0.0
    %2987 = vmatprep.subr.mxu0 0.0
    %2988 = vmatpush1.msra.mxu0 0.0
    %2989 = vmatprep.subr.mxu0 0.0
    %2990 = vmatpush1.msra.mxu0 0.0
    %2991 = vmatprep.mubr.f32.mxu0 0.0
    %2992 = vmatmul.mubr.f32.gmra.mrb[0].mxu0 %v2925
    %v2993 = vpop.f32.mrb[0].mxu0
    %v2994 = vadd.f32 %v2924, %v2993
    %v2995 = vpop.f32.mrb[0].mxu0
    %2996 = vdwg.mxu0
    %v2997 = vld [vmem:[#allocation3 + $0x38] sm:$0xff]
    %2998 = vrot.lane.b32.xlu0 %v2913, 64
    %v2999 = vpop.permute.xlu0 %2998
    %v3000 = vsel %vm79, %v2999, 0
    %3002 = vmatprep.subr.mxu0 0.0
    %3003 = vmatpush1.msra.mxu0 %v2102
    %3004 = vmatprep.subr.mxu0 0.0
    %3005 = vmatpush1.msra.mxu0 %v2103
    %3006 = vmatprep.subr.mxu0 0.0
    %3007 = vmatpush1.msra.mxu0 %v2104
    %3008 = vmatprep.subr.mxu0 0.0
    %3009 = vmatpush1.msra.mxu0 %v2105
    %3010 = vmatprep.subr.mxu0 0.0
    %3011 = vmatpush1.msra.mxu0 0.0
    %3012 = vmatprep.subr.mxu0 0.0
    %3013 = vmatpush1.msra.mxu0 0.0
    %3014 = vmatprep.subr.mxu0 0.0
    %3015 = vmatpush1.msra.mxu0 0.0
    %3016 = vmatprep.subr.mxu0 0.0
    %3017 = vmatpush1.msra.mxu0 0.0
    %3018 = vmatprep.subr.mxu0 0.0
    %3019 = vmatpush1.msra.mxu0 0.0
    %3020 = vmatprep.subr.mxu0 0.0
    %3021 = vmatpush1.msra.mxu0 0.0
    %3022 = vmatprep.subr.mxu0 0.0
    %3023 = vmatpush1.msra.mxu0 0.0
    %3024 = vmatprep.subr.mxu0 0.0
    %3025 = vmatpush1.msra.mxu0 0.0
    %3026 = vmatprep.subr.mxu0 0.0
    %3027 = vmatpush1.msra.mxu0 0.0
    %3028 = vmatprep.subr.mxu0 0.0
    %3029 = vmatpush1.msra.mxu0 0.0
    %3030 = vmatprep.subr.mxu0 0.0
    %3031 = vmatpush1.msra.mxu0 0.0
    %3032 = vmatprep.subr.mxu0 0.0
    %3033 = vmatpush1.msra.mxu0 0.0
    %3034 = vmatprep.subr.mxu0 0.0
    %3035 = vmatpush1.msra.mxu0 0.0
    %3036 = vmatprep.subr.mxu0 0.0
    %3037 = vmatpush1.msra.mxu0 0.0
    %3038 = vmatprep.subr.mxu0 0.0
    %3039 = vmatpush1.msra.mxu0 0.0
    %3040 = vmatprep.subr.mxu0 0.0
    %3041 = vmatpush1.msra.mxu0 0.0
    %3042 = vmatprep.subr.mxu0 0.0
    %3043 = vmatpush1.msra.mxu0 0.0
    %3044 = vmatprep.subr.mxu0 0.0
    %3045 = vmatpush1.msra.mxu0 0.0
    %3046 = vmatprep.subr.mxu0 0.0
    %3047 = vmatpush1.msra.mxu0 0.0
    %3048 = vmatprep.subr.mxu0 0.0
    %3049 = vmatpush1.msra.mxu0 0.0
    %3050 = vmatprep.subr.mxu0 0.0
    %3051 = vmatpush1.msra.mxu0 0.0
    %3052 = vmatprep.subr.mxu0 0.0
    %3053 = vmatpush1.msra.mxu0 0.0
    %3054 = vmatprep.subr.mxu0 0.0
    %3055 = vmatpush1.msra.mxu0 0.0
    %3056 = vmatprep.subr.mxu0 0.0
    %3057 = vmatpush1.msra.mxu0 0.0
    %3058 = vmatprep.subr.mxu0 0.0
    %3059 = vmatpush1.msra.mxu0 0.0
    %3060 = vmatprep.subr.mxu0 0.0
    %3061 = vmatpush1.msra.mxu0 0.0
    %3062 = vmatprep.subr.mxu0 0.0
    %3063 = vmatpush1.msra.mxu0 0.0
    %3064 = vmatprep.subr.mxu0 0.0
    %3065 = vmatpush1.msra.mxu0 0.0
    %3066 = vmatprep.mubr.f32.mxu0 0.0
    %3067 = vmatmul.mubr.f32.gmra.mrb[0].mxu0 %v3000
    %v3068 = vpop.f32.mrb[0].mxu0
    %v3069 = vadd.f32 %v2997, %v3068
    %v3070 = vpop.f32.mrb[0].mxu0
    %3071 = vdwg.mxu0
    %v3072 = vxor.u32 %v2994, 2147483648
    %v3073 = vmul.f32 %v3072, 1.442695
    %v3074 = vpow.pop %v3073
    %v3075 = vadd.f32 %v3074, 1.0
    %v3076 = vrcp.pop %v3075
    %v3077 = vmul.f32 1.0, %v3076
    %v3078 = vtanh.pop %v2994
    %v3079 = vxor.u32 %v3069, 2147483648
    %v3080 = vmul.f32 %v3079, 1.442695
    %v3081 = vpow.pop %v3080
    %v3082 = vadd.f32 %v3081, 1.0
    %v3083 = vrcp.pop %v3082
    %v3084 = vmul.f32 1.0, %v3083
    %v3085 = vtanh.pop %v3069
    %v3086 = vmul.f32 %v3077, %v2890
    %3088 = vrot.lane.b32.xlu0 %v3078, 32
    %v3089 = vpop.permute.xlu0 %3088
    %v3091 = vmul.f32 %v3077, %v3089
    %3093 = vrot.lane.b32.xlu0 %v3091, 32
    %v3094 = vpop.permute.xlu0 %3093
    %v3096 = vadd.f32 %v3086, %v3094
    %v3097 = vtanh.pop %v3096
    %3099 = vrot.lane.b32.xlu0 %v3097, 32
    %v3100 = vpop.permute.xlu0 %3099
    %v3102 = vmul.f32 %v3077, %v3100
    %v3103 = vmul.f32 %v3084, %v2907
    %3105 = vrot.lane.b32.xlu0 %v3085, 32
    %v3106 = vpop.permute.xlu0 %3105
    %v3108 = vmul.f32 %v3084, %v3106
    %3110 = vrot.lane.b32.xlu0 %v3108, 32
    %v3111 = vpop.permute.xlu0 %3110
    %v3113 = vadd.f32 %v3103, %v3111
    %v3114 = vtanh.pop %v3113
    %3116 = vrot.lane.b32.xlu0 %v3114, 32
    %v3117 = vpop.permute.xlu0 %3116
    %v3119 = vmul.f32 %v3084, %v3117
    %3121 = vrot.lane.b32.xlu0 %v3102, 64
    %v3122 = vpop.permute.xlu0 %3121
    %3124 = vst.msk [vmem:[#allocation2 + $0x20] sm:$0xff] %vm79, %v3122
    %3126 = vrot.lane.b32.xlu0 %v3119, 96
    %v3127 = vpop.permute.xlu0 %3126
    %3129 = vst.msk [vmem:[#allocation2 + $0x18] sm:$0xff] %vm444, %v3127
    %v3130 = vld [vmem:[#allocation3 + $0x50] sm:$0xff]
    %v3131 = vsel %vm79, %v3122, 0
    %3133 = vmatprep.subr.mxu0 0.0
    %3134 = vmatpush1.msra.mxu0 %v2097
    %3135 = vmatprep.subr.mxu0 0.0
    %3136 = vmatpush1.msra.mxu0 %v2098
    %3137 = vmatprep.subr.mxu0 0.0
    %3138 = vmatpush1.msra.mxu0 %v2099
    %3139 = vmatprep.subr.mxu0 0.0
    %3140 = vmatpush1.msra.mxu0 %v2100
    %3141 = vmatprep.subr.mxu0 0.0
    %3142 = vmatpush1.msra.mxu0 0.0
    %3143 = vmatprep.subr.mxu0 0.0
    %3144 = vmatpush1.msra.mxu0 0.0
    %3145 = vmatprep.subr.mxu0 0.0
    %3146 = vmatpush1.msra.mxu0 0.0
    %3147 = vmatprep.subr.mxu0 0.0
    %3148 = vmatpush1.msra.mxu0 0.0
    %3149 = vmatprep.subr.mxu0 0.0
    %3150 = vmatpush1.msra.mxu0 0.0
    %3151 = vmatprep.subr.mxu0 0.0
    %3152 = vmatpush1.msra.mxu0 0.0
    %3153 = vmatprep.subr.mxu0 0.0
    %3154 = vmatpush1.msra.mxu0 0.0
    %3155 = vmatprep.subr.mxu0 0.0
    %3156 = vmatpush1.msra.mxu0 0.0
    %3157 = vmatprep.subr.mxu0 0.0
    %3158 = vmatpush1.msra.mxu0 0.0
    %3159 = vmatprep.subr.mxu0 0.0
    %3160 = vmatpush1.msra.mxu0 0.0
    %3161 = vmatprep.subr.mxu0 0.0
    %3162 = vmatpush1.msra.mxu0 0.0
    %3163 = vmatprep.subr.mxu0 0.0
    %3164 = vmatpush1.msra.mxu0 0.0
    %3165 = vmatprep.subr.mxu0 0.0
    %3166 = vmatpush1.msra.mxu0 0.0
    %3167 = vmatprep.subr.mxu0 0.0
    %3168 = vmatpush1.msra.mxu0 0.0
    %3169 = vmatprep.subr.mxu0 0.0
    %3170 = vmatpush1.msra.mxu0 0.0
    %3171 = vmatprep.subr.mxu0 0.0
    %3172 = vmatpush1.msra.mxu0 0.0
    %3173 = vmatprep.subr.mxu0 0.0
    %3174 = vmatpush1.msra.mxu0 0.0
    %3175 = vmatprep.subr.mxu0 0.0
    %3176 = vmatpush1.msra.mxu0 0.0
    %3177 = vmatprep.subr.mxu0 0.0
    %3178 = vmatpush1.msra.mxu0 0.0
    %3179 = vmatprep.subr.mxu0 0.0
    %3180 = vmatpush1.msra.mxu0 0.0
    %3181 = vmatprep.subr.mxu0 0.0
    %3182 = vmatpush1.msra.mxu0 0.0
    %3183 = vmatprep.subr.mxu0 0.0
    %3184 = vmatpush1.msra.mxu0 0.0
    %3185 = vmatprep.subr.mxu0 0.0
    %3186 = vmatpush1.msra.mxu0 0.0
    %3187 = vmatprep.subr.mxu0 0.0
    %3188 = vmatpush1.msra.mxu0 0.0
    %3189 = vmatprep.subr.mxu0 0.0
    %3190 = vmatpush1.msra.mxu0 0.0
    %3191 = vmatprep.subr.mxu0 0.0
    %3192 = vmatpush1.msra.mxu0 0.0
    %3193 = vmatprep.subr.mxu0 0.0
    %3194 = vmatpush1.msra.mxu0 0.0
    %3195 = vmatprep.subr.mxu0 0.0
    %3196 = vmatpush1.msra.mxu0 0.0
    %3197 = vmatprep.mubr.f32.mxu0 0.0
    %3198 = vmatmul.mubr.f32.gmra.mrb[0].mxu0 %v3131
    %v3199 = vpop.f32.mrb[0].mxu0
    %v3200 = vadd.f32 %v3130, %v3199
    %v3201 = vpop.f32.mrb[0].mxu0
    %3202 = vdwg.mxu0
    %v3203 = vld [vmem:[#allocation3 + $0x28] sm:$0xff]
    %3204 = vrot.lane.b32.xlu0 %v3119, 64
    %v3205 = vpop.permute.xlu0 %3204
    %v3206 = vsel %vm79, %v3205, 0
    %3208 = vmatprep.subr.mxu0 0.0
    %3209 = vmatpush1.msra.mxu0 %v2102
    %3210 = vmatprep.subr.mxu0 0.0
    %3211 = vmatpush1.msra.mxu0 %v2103
    %3212 = vmatprep.subr.mxu0 0.0
    %3213 = vmatpush1.msra.mxu0 %v2104
    %3214 = vmatprep.subr.mxu0 0.0
    %3215 = vmatpush1.msra.mxu0 %v2105
    %3216 = vmatprep.subr.mxu0 0.0
    %3217 = vmatpush1.msra.mxu0 0.0
    %3218 = vmatprep.subr.mxu0 0.0
    %3219 = vmatpush1.msra.mxu0 0.0
    %3220 = vmatprep.subr.mxu0 0.0
    %3221 = vmatpush1.msra.mxu0 0.0
    %3222 = vmatprep.subr.mxu0 0.0
    %3223 = vmatpush1.msra.mxu0 0.0
    %3224 = vmatprep.subr.mxu0 0.0
    %3225 = vmatpush1.msra.mxu0 0.0
    %3226 = vmatprep.subr.mxu0 0.0
    %3227 = vmatpush1.msra.mxu0 0.0
    %3228 = vmatprep.subr.mxu0 0.0
    %3229 = vmatpush1.msra.mxu0 0.0
    %3230 = vmatprep.subr.mxu0 0.0
    %3231 = vmatpush1.msra.mxu0 0.0
    %3232 = vmatprep.subr.mxu0 0.0
    %3233 = vmatpush1.msra.mxu0 0.0
    %3234 = vmatprep.subr.mxu0 0.0
    %3235 = vmatpush1.msra.mxu0 0.0
    %3236 = vmatprep.subr.mxu0 0.0
    %3237 = vmatpush1.msra.mxu0 0.0
    %3238 = vmatprep.subr.mxu0 0.0
    %3239 = vmatpush1.msra.mxu0 0.0
    %3240 = vmatprep.subr.mxu0 0.0
    %3241 = vmatpush1.msra.mxu0 0.0
    %3242 = vmatprep.subr.mxu0 0.0
    %3243 = vmatpush1.msra.mxu0 0.0
    %3244 = vmatprep.subr.mxu0 0.0
    %3245 = vmatpush1.msra.mxu0 0.0
    %3246 = vmatprep.subr.mxu0 0.0
    %3247 = vmatpush1.msra.mxu0 0.0
    %3248 = vmatprep.subr.mxu0 0.0
    %3249 = vmatpush1.msra.mxu0 0.0
    %3250 = vmatprep.subr.mxu0 0.0
    %3251 = vmatpush1.msra.mxu0 0.0
    %3252 = vmatprep.subr.mxu0 0.0
    %3253 = vmatpush1.msra.mxu0 0.0
    %3254 = vmatprep.subr.mxu0 0.0
    %3255 = vmatpush1.msra.mxu0 0.0
    %3256 = vmatprep.subr.mxu0 0.0
    %3257 = vmatpush1.msra.mxu0 0.0
    %3258 = vmatprep.subr.mxu0 0.0
    %3259 = vmatpush1.msra.mxu0 0.0
    %3260 = vmatprep.subr.mxu0 0.0
    %3261 = vmatpush1.msra.mxu0 0.0
    %3262 = vmatprep.subr.mxu0 0.0
    %3263 = vmatpush1.msra.mxu0 0.0
    %3264 = vmatprep.subr.mxu0 0.0
    %3265 = vmatpush1.msra.mxu0 0.0
    %3266 = vmatprep.subr.mxu0 0.0
    %3267 = vmatpush1.msra.mxu0 0.0
    %3268 = vmatprep.subr.mxu0 0.0
    %3269 = vmatpush1.msra.mxu0 0.0
    %3270 = vmatprep.subr.mxu0 0.0
    %3271 = vmatpush1.msra.mxu0 0.0
    %3272 = vmatprep.mubr.f32.mxu0 0.0
    %3273 = vmatmul.mubr.f32.gmra.mrb[0].mxu0 %v3206
    %v3274 = vpop.f32.mrb[0].mxu0
    %v3275 = vadd.f32 %v3203, %v3274
    %v3276 = vpop.f32.mrb[0].mxu0
    %3277 = vdwg.mxu0
    %v3278 = vxor.u32 %v3200, 2147483648
    %v3279 = vmul.f32 %v3278, 1.442695
    %v3280 = vpow.pop %v3279
    %v3281 = vadd.f32 %v3280, 1.0
    %v3282 = vrcp.pop %v3281
    %v3283 = vmul.f32 1.0, %v3282
    %v3284 = vtanh.pop %v3200
    %v3285 = vxor.u32 %v3275, 2147483648
    %v3286 = vmul.f32 %v3285, 1.442695
    %v3287 = vpow.pop %v3286
    %v3288 = vadd.f32 %v3287, 1.0
    %v3289 = vrcp.pop %v3288
    %v3290 = vmul.f32 1.0, %v3289
    %v3291 = vtanh.pop %v3275
    %v3292 = vmul.f32 %v3283, %v3096
    %3294 = vrot.lane.b32.xlu0 %v3284, 32
    %v3295 = vpop.permute.xlu0 %3294
    %v3297 = vmul.f32 %v3283, %v3295
    %3299 = vrot.lane.b32.xlu0 %v3297, 32
    %v3300 = vpop.permute.xlu0 %3299
    %v3302 = vadd.f32 %v3292, %v3300
    %v3303 = vtanh.pop %v3302
    %3305 = vrot.lane.b32.xlu0 %v3303, 32
    %v3306 = vpop.permute.xlu0 %3305
    %v3308 = vmul.f32 %v3283, %v3306
    %v3309 = vmul.f32 %v3290, %v3113
    %3311 = vrot.lane.b32.xlu0 %v3291, 32
    %v3312 = vpop.permute.xlu0 %3311
    %v3314 = vmul.f32 %v3290, %v3312
    %3316 = vrot.lane.b32.xlu0 %v3314, 32
    %v3317 = vpop.permute.xlu0 %3316
    %v3319 = vadd.f32 %v3309, %v3317
    %v3320 = vtanh.pop %v3319
    %3322 = vrot.lane.b32.xlu0 %v3320, 32
    %v3323 = vpop.permute.xlu0 %3322
    %v3325 = vmul.f32 %v3290, %v3323
    %3327 = vrot.lane.b32.xlu0 %v3308, 64
    %v3328 = vpop.permute.xlu0 %3327
    %3330 = vst.msk [vmem:[#allocation2 + $0x28] sm:$0xff] %vm79, %v3328
    %3332 = vrot.lane.b32.xlu0 %v3325, 96
    %v3333 = vpop.permute.xlu0 %3332
    %3335 = vst.msk [vmem:[#allocation2 + $0x10] sm:$0xff] %vm444, %v3333
    %v3336 = vld [vmem:[#allocation3 + $0x60] sm:$0xff]
    %v3337 = vsel %vm79, %v3328, 0
    %3339 = vmatprep.subr.mxu0 0.0
    %3340 = vmatpush1.msra.mxu0 %v2097
    %3341 = vmatprep.subr.mxu0 0.0
    %3342 = vmatpush1.msra.mxu0 %v2098
    %3343 = vmatprep.subr.mxu0 0.0
    %3344 = vmatpush1.msra.mxu0 %v2099
    %3345 = vmatprep.subr.mxu0 0.0
    %3346 = vmatpush1.msra.mxu0 %v2100
    %3347 = vmatprep.subr.mxu0 0.0
    %3348 = vmatpush1.msra.mxu0 0.0
    %3349 = vmatprep.subr.mxu0 0.0
    %3350 = vmatpush1.msra.mxu0 0.0
    %3351 = vmatprep.subr.mxu0 0.0
    %3352 = vmatpush1.msra.mxu0 0.0
    %3353 = vmatprep.subr.mxu0 0.0
    %3354 = vmatpush1.msra.mxu0 0.0
    %3355 = vmatprep.subr.mxu0 0.0
    %3356 = vmatpush1.msra.mxu0 0.0
    %3357 = vmatprep.subr.mxu0 0.0
    %3358 = vmatpush1.msra.mxu0 0.0
    %3359 = vmatprep.subr.mxu0 0.0
    %3360 = vmatpush1.msra.mxu0 0.0
    %3361 = vmatprep.subr.mxu0 0.0
    %3362 = vmatpush1.msra.mxu0 0.0
    %3363 = vmatprep.subr.mxu0 0.0
    %3364 = vmatpush1.msra.mxu0 0.0
    %3365 = vmatprep.subr.mxu0 0.0
    %3366 = vmatpush1.msra.mxu0 0.0
    %3367 = vmatprep.subr.mxu0 0.0
    %3368 = vmatpush1.msra.mxu0 0.0
    %3369 = vmatprep.subr.mxu0 0.0
    %3370 = vmatpush1.msra.mxu0 0.0
    %3371 = vmatprep.subr.mxu0 0.0
    %3372 = vmatpush1.msra.mxu0 0.0
    %3373 = vmatprep.subr.mxu0 0.0
    %3374 = vmatpush1.msra.mxu0 0.0
    %3375 = vmatprep.subr.mxu0 0.0
    %3376 = vmatpush1.msra.mxu0 0.0
    %3377 = vmatprep.subr.mxu0 0.0
    %3378 = vmatpush1.msra.mxu0 0.0
    %3379 = vmatprep.subr.mxu0 0.0
    %3380 = vmatpush1.msra.mxu0 0.0
    %3381 = vmatprep.subr.mxu0 0.0
    %3382 = vmatpush1.msra.mxu0 0.0
    %3383 = vmatprep.subr.mxu0 0.0
    %3384 = vmatpush1.msra.mxu0 0.0
    %3385 = vmatprep.subr.mxu0 0.0
    %3386 = vmatpush1.msra.mxu0 0.0
    %3387 = vmatprep.subr.mxu0 0.0
    %3388 = vmatpush1.msra.mxu0 0.0
    %3389 = vmatprep.subr.mxu0 0.0
    %3390 = vmatpush1.msra.mxu0 0.0
    %3391 = vmatprep.subr.mxu0 0.0
    %3392 = vmatpush1.msra.mxu0 0.0
    %3393 = vmatprep.subr.mxu0 0.0
    %3394 = vmatpush1.msra.mxu0 0.0
    %3395 = vmatprep.subr.mxu0 0.0
    %3396 = vmatpush1.msra.mxu0 0.0
    %3397 = vmatprep.subr.mxu0 0.0
    %3398 = vmatpush1.msra.mxu0 0.0
    %3399 = vmatprep.subr.mxu0 0.0
    %3400 = vmatpush1.msra.mxu0 0.0
    %3401 = vmatprep.subr.mxu0 0.0
    %3402 = vmatpush1.msra.mxu0 0.0
    %3403 = vmatprep.mubr.f32.mxu0 0.0
    %3404 = vmatmul.mubr.f32.gmra.mrb[0].mxu0 %v3337
    %v3405 = vpop.f32.mrb[0].mxu0
    %v3406 = vadd.f32 %v3336, %v3405
    %v3407 = vpop.f32.mrb[0].mxu0
    %3408 = vdwg.mxu0
    %v3409 = vld [vmem:[#allocation3 + $0x18] sm:$0xff]
    %3410 = vrot.lane.b32.xlu0 %v3325, 64
    %v3411 = vpop.permute.xlu0 %3410
    %v3412 = vsel %vm79, %v3411, 0
    %3414 = vmatprep.subr.mxu0 0.0
    %3415 = vmatpush1.msra.mxu0 %v2102
    %3416 = vmatprep.subr.mxu0 0.0
    %3417 = vmatpush1.msra.mxu0 %v2103
    %3418 = vmatprep.subr.mxu0 0.0
    %3419 = vmatpush1.msra.mxu0 %v2104
    %3420 = vmatprep.subr.mxu0 0.0
    %3421 = vmatpush1.msra.mxu0 %v2105
    %3422 = vmatprep.subr.mxu0 0.0
    %3423 = vmatpush1.msra.mxu0 0.0
    %3424 = vmatprep.subr.mxu0 0.0
    %3425 = vmatpush1.msra.mxu0 0.0
    %3426 = vmatprep.subr.mxu0 0.0
    %3427 = vmatpush1.msra.mxu0 0.0
    %3428 = vmatprep.subr.mxu0 0.0
    %3429 = vmatpush1.msra.mxu0 0.0
    %3430 = vmatprep.subr.mxu0 0.0
    %3431 = vmatpush1.msra.mxu0 0.0
    %3432 = vmatprep.subr.mxu0 0.0
    %3433 = vmatpush1.msra.mxu0 0.0
    %3434 = vmatprep.subr.mxu0 0.0
    %3435 = vmatpush1.msra.mxu0 0.0
    %3436 = vmatprep.subr.mxu0 0.0
    %3437 = vmatpush1.msra.mxu0 0.0
    %3438 = vmatprep.subr.mxu0 0.0
    %3439 = vmatpush1.msra.mxu0 0.0
    %3440 = vmatprep.subr.mxu0 0.0
    %3441 = vmatpush1.msra.mxu0 0.0
    %3442 = vmatprep.subr.mxu0 0.0
    %3443 = vmatpush1.msra.mxu0 0.0
    %3444 = vmatprep.subr.mxu0 0.0
    %3445 = vmatpush1.msra.mxu0 0.0
    %3446 = vmatprep.subr.mxu0 0.0
    %3447 = vmatpush1.msra.mxu0 0.0
    %3448 = vmatprep.subr.mxu0 0.0
    %3449 = vmatpush1.msra.mxu0 0.0
    %3450 = vmatprep.subr.mxu0 0.0
    %3451 = vmatpush1.msra.mxu0 0.0
    %3452 = vmatprep.subr.mxu0 0.0
    %3453 = vmatpush1.msra.mxu0 0.0
    %3454 = vmatprep.subr.mxu0 0.0
    %3455 = vmatpush1.msra.mxu0 0.0
    %3456 = vmatprep.subr.mxu0 0.0
    %3457 = vmatpush1.msra.mxu0 0.0
    %3458 = vmatprep.subr.mxu0 0.0
    %3459 = vmatpush1.msra.mxu0 0.0
    %3460 = vmatprep.subr.mxu0 0.0
    %3461 = vmatpush1.msra.mxu0 0.0
    %3462 = vmatprep.subr.mxu0 0.0
    %3463 = vmatpush1.msra.mxu0 0.0
    %3464 = vmatprep.subr.mxu0 0.0
    %3465 = vmatpush1.msra.mxu0 0.0
    %3466 = vmatprep.subr.mxu0 0.0
    %3467 = vmatpush1.msra.mxu0 0.0
    %3468 = vmatprep.subr.mxu0 0.0
    %3469 = vmatpush1.msra.mxu0 0.0
    %3470 = vmatprep.subr.mxu0 0.0
    %3471 = vmatpush1.msra.mxu0 0.0
    %3472 = vmatprep.subr.mxu0 0.0
    %3473 = vmatpush1.msra.mxu0 0.0
    %3474 = vmatprep.subr.mxu0 0.0
    %3475 = vmatpush1.msra.mxu0 0.0
    %3476 = vmatprep.subr.mxu0 0.0
    %3477 = vmatpush1.msra.mxu0 0.0
    %3478 = vmatprep.mubr.f32.mxu0 0.0
    %3479 = vmatmul.mubr.f32.gmra.mrb[0].mxu0 %v3412
    %v3480 = vpop.f32.mrb[0].mxu0
    %v3481 = vadd.f32 %v3409, %v3480
    %v3482 = vpop.f32.mrb[0].mxu0
    %3483 = vdwg.mxu0
    %v3484 = vxor.u32 %v3406, 2147483648
    %v3485 = vmul.f32 %v3484, 1.442695
    %v3486 = vpow.pop %v3485
    %v3487 = vadd.f32 %v3486, 1.0
    %v3488 = vrcp.pop %v3487
    %v3489 = vmul.f32 1.0, %v3488
    %v3490 = vtanh.pop %v3406
    %v3491 = vxor.u32 %v3481, 2147483648
    %v3492 = vmul.f32 %v3491, 1.442695
    %v3493 = vpow.pop %v3492
    %v3494 = vadd.f32 %v3493, 1.0
    %v3495 = vrcp.pop %v3494
    %v3496 = vmul.f32 1.0, %v3495
    %v3497 = vtanh.pop %v3481
    %v3498 = vmul.f32 %v3489, %v3302
    %3500 = vrot.lane.b32.xlu0 %v3490, 32
    %v3501 = vpop.permute.xlu0 %3500
    %v3503 = vmul.f32 %v3489, %v3501
    %3505 = vrot.lane.b32.xlu0 %v3503, 32
    %v3506 = vpop.permute.xlu0 %3505
    %v3508 = vadd.f32 %v3498, %v3506
    %v3509 = vtanh.pop %v3508
    %3511 = vrot.lane.b32.xlu0 %v3509, 32
    %v3512 = vpop.permute.xlu0 %3511
    %v3514 = vmul.f32 %v3489, %v3512
    %v3515 = vmul.f32 %v3496, %v3319
    %3517 = vrot.lane.b32.xlu0 %v3497, 32
    %v3518 = vpop.permute.xlu0 %3517
    %v3520 = vmul.f32 %v3496, %v3518
    %3522 = vrot.lane.b32.xlu0 %v3520, 32
    %v3523 = vpop.permute.xlu0 %3522
    %v3525 = vadd.f32 %v3515, %v3523
    %v3526 = vtanh.pop %v3525
    %3528 = vrot.lane.b32.xlu0 %v3526, 32
    %v3529 = vpop.permute.xlu0 %3528
    %v3531 = vmul.f32 %v3496, %v3529
    %3533 = vrot.lane.b32.xlu0 %v3514, 64
    %v3534 = vpop.permute.xlu0 %3533
    %3536 = vst.msk [vmem:[#allocation2 + $0x30] sm:$0xff] %vm79, %v3534
    %3538 = vrot.lane.b32.xlu0 %v3531, 96
    %v3539 = vpop.permute.xlu0 %3538
    %3541 = vst.msk [vmem:[#allocation2 + $0x8] sm:$0xff] %vm444, %v3539
    %v3542 = vld [vmem:[#allocation3 + $0x70] sm:$0xff]
    %v3543 = vsel %vm79, %v3534, 0
    %3545 = vmatprep.subr.mxu0 0.0
    %3546 = vmatpush1.msra.mxu0 %v2097
    %3547 = vmatprep.subr.mxu0 0.0
    %3548 = vmatpush1.msra.mxu0 %v2098
    %3549 = vmatprep.subr.mxu0 0.0
    %3550 = vmatpush1.msra.mxu0 %v2099
    %3551 = vmatprep.subr.mxu0 0.0
    %3552 = vmatpush1.msra.mxu0 %v2100
    %3553 = vmatprep.subr.mxu0 0.0
    %3554 = vmatpush1.msra.mxu0 0.0
    %3555 = vmatprep.subr.mxu0 0.0
    %3556 = vmatpush1.msra.mxu0 0.0
    %3557 = vmatprep.subr.mxu0 0.0
    %3558 = vmatpush1.msra.mxu0 0.0
    %3559 = vmatprep.subr.mxu0 0.0
    %3560 = vmatpush1.msra.mxu0 0.0
    %3561 = vmatprep.subr.mxu0 0.0
    %3562 = vmatpush1.msra.mxu0 0.0
    %3563 = vmatprep.subr.mxu0 0.0
    %3564 = vmatpush1.msra.mxu0 0.0
    %3565 = vmatprep.subr.mxu0 0.0
    %3566 = vmatpush1.msra.mxu0 0.0
    %3567 = vmatprep.subr.mxu0 0.0
    %3568 = vmatpush1.msra.mxu0 0.0
    %3569 = vmatprep.subr.mxu0 0.0
    %3570 = vmatpush1.msra.mxu0 0.0
    %3571 = vmatprep.subr.mxu0 0.0
    %3572 = vmatpush1.msra.mxu0 0.0
    %3573 = vmatprep.subr.mxu0 0.0
    %3574 = vmatpush1.msra.mxu0 0.0
    %3575 = vmatprep.subr.mxu0 0.0
    %3576 = vmatpush1.msra.mxu0 0.0
    %3577 = vmatprep.subr.mxu0 0.0
    %3578 = vmatpush1.msra.mxu0 0.0
    %3579 = vmatprep.subr.mxu0 0.0
    %3580 = vmatpush1.msra.mxu0 0.0
    %3581 = vmatprep.subr.mxu0 0.0
    %3582 = vmatpush1.msra.mxu0 0.0
    %3583 = vmatprep.subr.mxu0 0.0
    %3584 = vmatpush1.msra.mxu0 0.0
    %3585 = vmatprep.subr.mxu0 0.0
    %3586 = vmatpush1.msra.mxu0 0.0
    %3587 = vmatprep.subr.mxu0 0.0
    %3588 = vmatpush1.msra.mxu0 0.0
    %3589 = vmatprep.subr.mxu0 0.0
    %3590 = vmatpush1.msra.mxu0 0.0
    %3591 = vmatprep.subr.mxu0 0.0
    %3592 = vmatpush1.msra.mxu0 0.0
    %3593 = vmatprep.subr.mxu0 0.0
    %3594 = vmatpush1.msra.mxu0 0.0
    %3595 = vmatprep.subr.mxu0 0.0
    %3596 = vmatpush1.msra.mxu0 0.0
    %3597 = vmatprep.subr.mxu0 0.0
    %3598 = vmatpush1.msra.mxu0 0.0
    %3599 = vmatprep.subr.mxu0 0.0
    %3600 = vmatpush1.msra.mxu0 0.0
    %3601 = vmatprep.subr.mxu0 0.0
    %3602 = vmatpush1.msra.mxu0 0.0
    %3603 = vmatprep.subr.mxu0 0.0
    %3604 = vmatpush1.msra.mxu0 0.0
    %3605 = vmatprep.subr.mxu0 0.0
    %3606 = vmatpush1.msra.mxu0 0.0
    %3607 = vmatprep.subr.mxu0 0.0
    %3608 = vmatpush1.msra.mxu0 0.0
    %3609 = vmatprep.mubr.f32.mxu0 0.0
    %3610 = vmatmul.mubr.f32.gmra.mrb[0].mxu0 %v3543
    %v3611 = vpop.f32.mrb[0].mxu0
    %v3612 = vadd.f32 %v3542, %v3611
    %v3613 = vpop.f32.mrb[0].mxu0
    %3614 = vdwg.mxu0
    %v3615 = vld [vmem:[#allocation3 + $0x8] sm:$0xff]
    %3616 = vrot.lane.b32.xlu0 %v3531, 64
    %v3617 = vpop.permute.xlu0 %3616
    %v3618 = vsel %vm79, %v3617, 0
    %3620 = vmatprep.subr.mxu0 0.0
    %3621 = vmatpush1.msra.mxu0 %v2102
    %3622 = vmatprep.subr.mxu0 0.0
    %3623 = vmatpush1.msra.mxu0 %v2103
    %3624 = vmatprep.subr.mxu0 0.0
    %3625 = vmatpush1.msra.mxu0 %v2104
    %3626 = vmatprep.subr.mxu0 0.0
    %3627 = vmatpush1.msra.mxu0 %v2105
    %3628 = vmatprep.subr.mxu0 0.0
    %3629 = vmatpush1.msra.mxu0 0.0
    %3630 = vmatprep.subr.mxu0 0.0
    %3631 = vmatpush1.msra.mxu0 0.0
    %3632 = vmatprep.subr.mxu0 0.0
    %3633 = vmatpush1.msra.mxu0 0.0
    %3634 = vmatprep.subr.mxu0 0.0
    %3635 = vmatpush1.msra.mxu0 0.0
    %3636 = vmatprep.subr.mxu0 0.0
    %3637 = vmatpush1.msra.mxu0 0.0
    %3638 = vmatprep.subr.mxu0 0.0
    %3639 = vmatpush1.msra.mxu0 0.0
    %3640 = vmatprep.subr.mxu0 0.0
    %3641 = vmatpush1.msra.mxu0 0.0
    %3642 = vmatprep.subr.mxu0 0.0
    %3643 = vmatpush1.msra.mxu0 0.0
    %3644 = vmatprep.subr.mxu0 0.0
    %3645 = vmatpush1.msra.mxu0 0.0
    %3646 = vmatprep.subr.mxu0 0.0
    %3647 = vmatpush1.msra.mxu0 0.0
    %3648 = vmatprep.subr.mxu0 0.0
    %3649 = vmatpush1.msra.mxu0 0.0
    %3650 = vmatprep.subr.mxu0 0.0
    %3651 = vmatpush1.msra.mxu0 0.0
    %3652 = vmatprep.subr.mxu0 0.0
    %3653 = vmatpush1.msra.mxu0 0.0
    %3654 = vmatprep.subr.mxu0 0.0
    %3655 = vmatpush1.msra.mxu0 0.0
    %3656 = vmatprep.subr.mxu0 0.0
    %3657 = vmatpush1.msra.mxu0 0.0
    %3658 = vmatprep.subr.mxu0 0.0
    %3659 = vmatpush1.msra.mxu0 0.0
    %3660 = vmatprep.subr.mxu0 0.0
    %3661 = vmatpush1.msra.mxu0 0.0
    %3662 = vmatprep.subr.mxu0 0.0
    %3663 = vmatpush1.msra.mxu0 0.0
    %3664 = vmatprep.subr.mxu0 0.0
    %3665 = vmatpush1.msra.mxu0 0.0
    %3666 = vmatprep.subr.mxu0 0.0
    %3667 = vmatpush1.msra.mxu0 0.0
    %3668 = vmatprep.subr.mxu0 0.0
    %3669 = vmatpush1.msra.mxu0 0.0
    %3670 = vmatprep.subr.mxu0 0.0
    %3671 = vmatpush1.msra.mxu0 0.0
    %3672 = vmatprep.subr.mxu0 0.0
    %3673 = vmatpush1.msra.mxu0 0.0
    %3674 = vmatprep.subr.mxu0 0.0
    %3675 = vmatpush1.msra.mxu0 0.0
    %3676 = vmatprep.subr.mxu0 0.0
    %3677 = vmatpush1.msra.mxu0 0.0
    %3678 = vmatprep.subr.mxu0 0.0
    %3679 = vmatpush1.msra.mxu0 0.0
    %3680 = vmatprep.subr.mxu0 0.0
    %3681 = vmatpush1.msra.mxu0 0.0
    %3682 = vmatprep.subr.mxu0 0.0
    %3683 = vmatpush1.msra.mxu0 0.0
    %3684 = vmatprep.mubr.f32.mxu0 0.0
    %3685 = vmatmul.mubr.f32.gmra.mrb[0].mxu0 %v3618
    %v3686 = vpop.f32.mrb[0].mxu0
    %v3687 = vadd.f32 %v3615, %v3686
    %v3688 = vpop.f32.mrb[0].mxu0
    %3689 = vdwg.mxu0
    %v3690 = vxor.u32 %v3612, 2147483648
    %v3691 = vmul.f32 %v3690, 1.442695
    %v3692 = vpow.pop %v3691
    %v3693 = vadd.f32 %v3692, 1.0
    %v3694 = vrcp.pop %v3693
    %v3695 = vmul.f32 1.0, %v3694
    %v3696 = vtanh.pop %v3612
    %v3697 = vxor.u32 %v3687, 2147483648
    %v3698 = vmul.f32 %v3697, 1.442695
    %v3699 = vpow.pop %v3698
    %v3700 = vadd.f32 %v3699, 1.0
    %v3701 = vrcp.pop %v3700
    %v3702 = vmul.f32 1.0, %v3701
    %v3703 = vtanh.pop %v3687
    %v3704 = vmul.f32 %v3695, %v3508
    %3706 = vrot.lane.b32.xlu0 %v3696, 32
    %v3707 = vpop.permute.xlu0 %3706
    %v3709 = vmul.f32 %v3695, %v3707
    %3711 = vrot.lane.b32.xlu0 %v3709, 32
    %v3712 = vpop.permute.xlu0 %3711
    %v3714 = vadd.f32 %v3704, %v3712
    %v3715 = vtanh.pop %v3714
    %3717 = vrot.lane.b32.xlu0 %v3715, 32
    %v3718 = vpop.permute.xlu0 %3717
    %v3720 = vmul.f32 %v3695, %v3718
    %v3721 = vmul.f32 %v3702, %v3525
    %3723 = vrot.lane.b32.xlu0 %v3703, 32
    %v3724 = vpop.permute.xlu0 %3723
    %v3726 = vmul.f32 %v3702, %v3724
    %3728 = vrot.lane.b32.xlu0 %v3726, 32
    %v3729 = vpop.permute.xlu0 %3728
    %v3731 = vadd.f32 %v3721, %v3729
    %v3732 = vtanh.pop %v3731
    %3734 = vrot.lane.b32.xlu0 %v3732, 32
    %v3735 = vpop.permute.xlu0 %3734
    %v3737 = vmul.f32 %v3702, %v3735
    %3739 = vrot.lane.b32.xlu0 %v3720, 64
    %v3740 = vpop.permute.xlu0 %3739
    %3742 = vst.msk [vmem:[#allocation2 + $0x38] sm:$0xff] %vm79, %v3740
    %3744 = vrot.lane.b32.xlu0 %v3737, 96
    %v3745 = vpop.permute.xlu0 %3744
    %3747 = vst.msk [vmem:[#allocation2] sm:$0xff] %vm444, %v3745
    %s3748 = scalar_lea.vmem %s6, 16
    %3749 = vst.msk [vmem:[%s3748] sm:$0xff] %vm79, %v3740
    %3750 = vrot.lane.b32.xlu0 %v3737, 64
    %v3751 = vpop.permute.xlu0 %3750
    %s3753 = scalar_lea.vmem %s6, 24
    %3754 = vst.msk [vmem:[%s3753] sm:$0xff] %vm79, %v3751
    %3756 = vrot.lane.b32.xlu0 %v3714, 96
    %v3757 = vpop.permute.xlu0 %3756
    %s3759 = scalar_lea.vmem %s7, 16
    %3760 = vst.msk [vmem:[%s3759] sm:$0xff] %vm79, %v3757
    %3762 = vrot.lane.b32.xlu0 %v3731, 96
    %v3763 = vpop.permute.xlu0 %3762
    %s3765 = scalar_lea.vmem %s7, 24
    %3766 = vst.msk [vmem:[%s3765] sm:$0xff] %vm79, %v3763
    %v3767 = vld [vmem:[#allocation2] sm:$0xff]
    %v3768 = vld [vmem:[#allocation2 + $0x8] sm:$0xff]
    %v3769 = vld [vmem:[#allocation2 + $0x10] sm:$0xff]
    %v3770 = vld [vmem:[#allocation2 + $0x18] sm:$0xff]
    %v3771 = vld [vmem:[#allocation2 + $0x20] sm:$0xff]
    %v3772 = vld [vmem:[#allocation2 + $0x28] sm:$0xff]
    %v3773 = vld [vmem:[#allocation2 + $0x30] sm:$0xff]
    %v3774 = vld [vmem:[#allocation2 + $0x38] sm:$0xff]
    %3783 = vrot.lane.b32.xlu0 %v3767, 96
    %v3784 = vpop.permute.xlu0 %3783
    %3785 = vrot.lane.b32.xlu0 %v3768, 96
    %v3786 = vpop.permute.xlu0 %3785
    %3787 = vrot.lane.b32.xlu0 %v3769, 96
    %v3788 = vpop.permute.xlu0 %3787
    %3789 = vrot.lane.b32.xlu0 %v3770, 96
    %v3790 = vpop.permute.xlu0 %3789
    %3791 = vrot.lane.b32.xlu0 %v3771, 96
    %v3792 = vpop.permute.xlu0 %3791
    %3793 = vrot.lane.b32.xlu0 %v3772, 96
    %v3794 = vpop.permute.xlu0 %3793
    %3795 = vrot.lane.b32.xlu0 %v3773, 96
    %v3796 = vpop.permute.xlu0 %3795
    %3797 = vrot.lane.b32.xlu0 %v3774, 96
    %v3798 = vpop.permute.xlu0 %3797
    %v3807 = vadd.f32 %v3767, %v3784
    %v3808 = vadd.f32 %v3768, %v3786
    %v3809 = vadd.f32 %v3769, %v3788
    %v3810 = vadd.f32 %v3770, %v3790
    %v3811 = vadd.f32 %v3771, %v3792
    %v3812 = vadd.f32 %v3772, %v3794
    %v3813 = vadd.f32 %v3773, %v3796
    %v3814 = vadd.f32 %v3774, %v3798
    %v3815 = vld [vmem:[%s0] sm:$0xff]
    %v3816 = vld [vmem:[%s0 + $0x8] sm:$0xff]
    %v3817 = vld [vmem:[%s0 + $0x10] sm:$0xff]
    %v3818 = vld [vmem:[%s0 + $0x18] sm:$0xff]
    %v3819 = vld [vmem:[%s0 + $0x20] sm:$0xff]
    %v3820 = vld [vmem:[%s0 + $0x28] sm:$0xff]
    %v3821 = vld [vmem:[%s0 + $0x30] sm:$0xff]
    %v3822 = vld [vmem:[%s0 + $0x38] sm:$0xff]
    %v3823 = vadd.f32 %v3807, %v3815
    %v3824 = vadd.f32 %v3808, %v3816
    %v3825 = vadd.f32 %v3809, %v3817
    %v3826 = vadd.f32 %v3810, %v3818
    %v3827 = vadd.f32 %v3811, %v3819
    %v3828 = vadd.f32 %v3812, %v3820
    %v3829 = vadd.f32 %v3813, %v3821
    %v3830 = vadd.f32 %v3814, %v3822
    %3831 = vst.msk [vmem:[%s5] sm:$0xff] %vm79, %v3823
    %3832 = vst.msk [vmem:[%s5 + $0x8] sm:$0xff] %vm79, %v3824
    %3833 = vst.msk [vmem:[%s5 + $0x10] sm:$0xff] %vm79, %v3825
    %3834 = vst.msk [vmem:[%s5 + $0x18] sm:$0xff] %vm79, %v3826
    %3835 = vst.msk [vmem:[%s5 + $0x20] sm:$0xff] %vm79, %v3827
    %3836 = vst.msk [vmem:[%s5 + $0x28] sm:$0xff] %vm79, %v3828
    %3837 = vst.msk [vmem:[%s5 + $0x30] sm:$0xff] %vm79, %v3829
    %3838 = vst.msk [vmem:[%s5 + $0x38] sm:$0xff] %vm79, %v3830
    // Predicated region
    $region30: #{bidirectional_lstm_forward.1} parent=1 // pred_check
      _
    $region31: #{bidirectional_lstm_forward.1} parent=1 // pred_check_branch
      %3840 = sbr.rel (0) target = $region33
    $region32: #{bidirectional_lstm_forward.1} parent=1 // pred_region
      _
    $region33: #{bidirectional_lstm_forward.1} parent=1 // pred_fallthru
      _
    // Predicated region
    $region34: #{bidirectional_lstm_forward.1} parent=1 // pred_check
      _
    $region35: #{bidirectional_lstm_forward.1} parent=1 // pred_check_branch
      %3842 = sbr.rel (0) target = $region37
    $region36: #{bidirectional_lstm_forward.1} parent=1 // pred_region
      _
    $region37: #{bidirectional_lstm_forward.1} parent=1 // pred_fallthru
      _
    // Predicated region
    $region38: #{bidirectional_lstm_forward.1} parent=1 // pred_check
      _
    $region39: #{bidirectional_lstm_forward.1} parent=1 // pred_check_branch
      %3844 = sbr.rel (0) target = $region41
    $region40: #{bidirectional_lstm_forward.1} parent=1 // pred_region
      _
    $region41: #{bidirectional_lstm_forward.1} parent=1 // pred_fallthru
      _
    // Predicated region
    $region42: #{bidirectional_lstm_forward.1} parent=1 // pred_check
      _
    $region43: #{bidirectional_lstm_forward.1} parent=1 // pred_check_branch
      %3846 = sbr.rel (0) target = $region45
    $region44: #{bidirectional_lstm_forward.1} parent=1 // pred_region
      _
    $region45: #{bidirectional_lstm_forward.1} parent=1 // pred_fallthru
      _
    // Predicated region
    $region46: #{bidirectional_lstm_forward.1} parent=1 // pred_check
      _
    $region47: #{bidirectional_lstm_forward.1} parent=1 // pred_check_branch
      %3848 = sbr.rel (0) target = $region49
    $region48: #{bidirectional_lstm_forward.1} parent=1 // pred_region
      _
    $region49: #{bidirectional_lstm_forward.1} parent=1 // pred_fallthru
      _
    // Predicated region
    $region50: #{bidirectional_lstm_forward.1} parent=1 // pred_check
      _
    $region51: #{bidirectional_lstm_forward.1} parent=1 // pred_check_branch
      %3850 = sbr.rel (0) target = $region53
    $region52: #{bidirectional_lstm_forward.1} parent=1 // pred_region
      _
    $region53: #{bidirectional_lstm_forward.1} parent=1 // pred_fallthru
      _
    %3851 = vsyncpa [#allocation5], 1
    %3852 = vsyncpa [#allocation7], 1

</llo_original>
